<compile_context>
chip_gen: v6e
topology: v6e:2x2x1
jax: 0.10.0
libtpu: 0.0.40
codegen_flags: <defaults>
</compile_context>

<pallas_src>
import functools  # noqa: F401
import math

import jax
import jax.numpy as jnp
from jax.experimental import pallas as pl
from jax.experimental.pallas import tpu as pltpu

# ----------------------------- config (small ViT) ---------------------------
BATCH = 2
CHANNELS = 3
IMG = 16
PATCH = 4
PATCH_DIM = CHANNELS * PATCH * PATCH       # 48
NUM_PATCHES = (IMG // PATCH) ** 2          # 16
SEQ = NUM_PATCHES + 1                      # 17 (CLS + patches)
SEQ_PAD = 24                               # padded to a multiple of 8 sublanes
HIDDEN = 32
NUM_HEADS = 2
HEAD_DIM = HIDDEN // NUM_HEADS             # 16
MLP = 64
LAYERS = 2
NUM_LABELS = 2
LN_EPS = 1e-12                             # HF ViT default layer_norm_eps


# ------------------------------ spec helpers ---------------------------------
def _bcast_spec(shape):
    """Full-array block that is identical for every grid step (weights)."""
    n = len(shape)
    return pl.BlockSpec(shape, lambda b, _n=n: (0,) * _n)


# --------------------------- in-kernel math helpers --------------------------
def _layernorm(x, g, b, eps=LN_EPS):
    mean = jnp.mean(x, axis=-1, keepdims=True)
    var = jnp.mean(jnp.square(x - mean), axis=-1, keepdims=True)
    return (x - mean) * jax.lax.rsqrt(var + eps) * g + b


def _erf_approx(x):
    # Abramowitz & Stegun 7.1.26 rational approximation, |err| <= 1.5e-7.
    # Used instead of lax.erf so the kernel only relies on exp/mul/add/div,
    # which are guaranteed to lower on Mosaic.
    a1, a2, a3, a4, a5 = 0.254829592, -0.284496736, 1.421413741, -1.453152027, 1.061405429
    pc = 0.3275911
    sgn = jnp.where(x >= 0.0, 1.0, -1.0)
    z = jnp.abs(x)
    t = 1.0 / (1.0 + pc * z)
    poly = t * (a1 + t * (a2 + t * (a3 + t * (a4 + t * a5))))
    return sgn * (1.0 - poly * jnp.exp(-z * z))


def _gelu_exact(x):
    # Exact (erf) GELU, matching HF ViT's default activation.
    return 0.5 * x * (1.0 + _erf_approx(x * (1.0 / math.sqrt(2.0))))


# ------------------------------- fused kernel --------------------------------
def _vit_fused_kernel(patches_ref, pw_ref, ebias_ref,
                      ln1g_ref, ln1b_ref, qkvw_ref, qkvb_ref,
                      projw_ref, projb_ref, ln2g_ref, ln2b_ref,
                      fc1w_ref, fc1b_ref, fc2w_ref, fc2b_ref,
                      lnfg_ref, lnfb_ref, hw_ref, hb_ref, o_ref):
    """One grid step == full ViT forward for one image, entirely in VMEM."""
    scale = 1.0 / math.sqrt(HEAD_DIM)

    # --- patch embedding + CLS token + position embedding (fused) ---
    # patches row 0 is zeros (CLS placeholder), rows >= SEQ are padding; the
    # precomputed embed bias injects cls+pos[0], pos+patch_b, and zeros the pad.
    x = jnp.dot(patches_ref[0], pw_ref[...],
                preferred_element_type=jnp.float32) + ebias_ref[...]   # (S_PAD, H)

    # Key-padding mask: columns >= SEQ must not receive probability mass.
    col = jax.lax.broadcasted_iota(jnp.int32, (SEQ_PAD, SEQ_PAD), 1)
    key_mask = col < SEQ

    for l in range(LAYERS):                      # static unroll (LAYERS=2)
        # ---------------- self-attention block (pre-LN) ----------------
        h = _layernorm(x, ln1g_ref[l], ln1b_ref[l])
        qkv = jnp.dot(h, qkvw_ref[l],
                      preferred_element_type=jnp.float32) + qkvb_ref[l]  # (S_PAD, 3H)
        proj_w = projw_ref[l]                                            # (H, H)

        attn = jnp.zeros((SEQ_PAD, HIDDEN), jnp.float32)
        for hd in range(NUM_HEADS):              # static unroll (NUM_HEADS=2)
            lo = hd * HEAD_DIM
            q = qkv[:, lo:lo + HEAD_DIM]
            k = qkv[:, HIDDEN + lo:HIDDEN + lo + HEAD_DIM]
            v = qkv[:, 2 * HIDDEN + lo:2 * HIDDEN + lo + HEAD_DIM]
            # q @ k^T without an explicit transpose (contract last dims).
            s = jax.lax.dot_general(q, k, (((1,), (1,)), ((), ())),
                                    preferred_element_type=jnp.float32) * scale
            s = jnp.where(key_mask, s, -1e30)
            m = jnp.max(s, axis=-1, keepdims=True)
            e = jnp.exp(s - m)
            p = e * pl.reciprocal(jnp.sum(e, axis=-1, keepdims=True), approx=True)
            ctx = jnp.dot(p, v, preferred_element_type=jnp.float32)     # (S_PAD, Dh)
            # Head merge fused into the output projection: slice proj_w rows.
            attn = attn + jnp.dot(ctx, proj_w[lo:lo + HEAD_DIM, :],
                                  preferred_element_type=jnp.float32)
        x = x + attn + projb_ref[l]

        # --------------------- MLP block (pre-LN) -----------------------
        h2 = _layernorm(x, ln2g_ref[l], ln2b_ref[l])
        m1 = _gelu_exact(jnp.dot(h2, fc1w_ref[l],
                                 preferred_element_type=jnp.float32) + fc1b_ref[l])
        m2 = jnp.dot(m1, fc2w_ref[l],
                     preferred_element_type=jnp.float32) + fc2b_ref[l]
        x = x + m2

    # --- final LN -> CLS token -> classifier -> softmax ---
    xf = _layernorm(x, lnfg_ref[...], lnfb_ref[...])
    cls_h = xf[0:1, :]                                                   # (1, H)
    logits = jnp.dot(cls_h, hw_ref[...],
                     preferred_element_type=jnp.float32) + hb_ref[...]   # (1, L)
    lm = jnp.max(logits, axis=-1, keepdims=True)
    e = jnp.exp(logits - lm)
    probs = e / jnp.sum(e, axis=-1, keepdims=True)   # exact divide: sums to 1
    o_ref[0] = probs.astype(o_ref.dtype)


# ------------------------------ model forward --------------------------------
def model_forward(params, pixel_values):
    # Equivalent to Model.forward(pixel_values, labels=None) -> softmax probs.
    B, C, H, W = pixel_values.shape
    p = PATCH
    nh, nw = H // p, W // p
    patch_dim = C * p * p

    # Patch extraction (Conv2d kernel=stride=patch == flatten + matmul). Glue.
    patches = pixel_values.reshape(B, C, nh, p, nw, p)
    patches = patches.transpose(0, 2, 4, 1, 3, 5).reshape(B, nh * nw, patch_dim)
    # Row 0 = zero placeholder for CLS, rows SEQ..SEQ_PAD-1 = sublane padding.
    patches_pad = jnp.pad(patches, ((0, 0), (1, SEQ_PAD - SEQ), (0, 0)))

    # Fold CLS token, position embeddings, patch bias and pad-row zeroing into
    # one additive bias applied right after the padded patch matmul.
    pos = params["pos"][0]                    # (SEQ, HIDDEN)
    cls = params["cls"][0, 0]                 # (HIDDEN,)
    patch_b = params["patch_b"]               # (HIDDEN,)
    embed_bias = jnp.concatenate([
        (cls + pos[0])[None, :],              # row 0: CLS + pos[0]
        pos[1:] + patch_b[None, :],           # rows 1..SEQ-1: pos + conv bias
        jnp.zeros((SEQ_PAD - SEQ, HIDDEN), jnp.float32),  # pad rows -> 0
    ], axis=0)                                # (SEQ_PAD, HIDDEN)

    def stack_w(name):
        return jnp.stack([lyr[name] for lyr in params["layers"]])

    def stack_b(name):
        return jnp.stack([lyr[name] for lyr in params["layers"]])[:, None, :]

    args = (
        patches_pad,                          # (B, SEQ_PAD, PATCH_DIM)
        params["patch_w"],                    # (PATCH_DIM, HIDDEN)
        embed_bias,                           # (SEQ_PAD, HIDDEN)
        stack_b("ln1_g"), stack_b("ln1_b"),   # (L, 1, H)
        stack_w("qkv_w"), stack_b("qkv_b"),   # (L, H, 3H), (L, 1, 3H)
        stack_w("proj_w"), stack_b("proj_b"), # (L, H, H), (L, 1, H)
        stack_b("ln2_g"), stack_b("ln2_b"),   # (L, 1, H)
        stack_w("fc1_w"), stack_b("fc1_b"),   # (L, H, MLP), (L, 1, MLP)
        stack_w("fc2_w"), stack_b("fc2_b"),   # (L, MLP, H), (L, 1, H)
        params["lnf_g"][None, :], params["lnf_b"][None, :],   # (1, H)
        params["cls_w"], params["cls_b"][None, :],            # (H, L), (1, L)
    )

    in_specs = [pl.BlockSpec((1, SEQ_PAD, patch_dim), lambda b: (b, 0, 0))]
    in_specs += [_bcast_spec(a.shape) for a in args[1:]]

    probs = pl.pallas_call(
        _vit_fused_kernel,
        out_shape=jax.ShapeDtypeStruct((B, 1, NUM_LABELS), jnp.float32),
        grid=(B,),
        in_specs=in_specs,
        out_specs=pl.BlockSpec((1, 1, NUM_LABELS), lambda b: (b, 0, 0)),
        compiler_params=pltpu.CompilerParams(dimension_semantics=("parallel",)),
    )(*args)
    return probs.reshape(B, NUM_LABELS)


# ------------------------------- parameters ----------------------------------
def init_params(key):
    def nrm(k, shape):
        return (0.02 * jax.random.normal(k, shape)).astype(jnp.float32)

    keys = iter(jax.random.split(key, 8 + LAYERS * 8))
    params = {
        "patch_w": nrm(next(keys), (PATCH_DIM, HIDDEN)),
        "patch_b": jnp.zeros((HIDDEN,), jnp.float32),
        "cls": nrm(next(keys), (1, 1, HIDDEN)),
        "pos": nrm(next(keys), (1, SEQ, HIDDEN)),
        "lnf_g": jnp.ones((HIDDEN,), jnp.float32),
        "lnf_b": jnp.zeros((HIDDEN,), jnp.float32),
        "cls_w": nrm(next(keys), (HIDDEN, NUM_LABELS)),
        "cls_b": jnp.zeros((NUM_LABELS,), jnp.float32),
        "layers": [],
    }
    for _ in range(LAYERS):
        params["layers"].append({
            "ln1_g": jnp.ones((HIDDEN,), jnp.float32),
            "ln1_b": jnp.zeros((HIDDEN,), jnp.float32),
            "qkv_w": nrm(next(keys), (HIDDEN, 3 * HIDDEN)),
            "qkv_b": jnp.zeros((3 * HIDDEN,), jnp.float32),
            "proj_w": nrm(next(keys), (HIDDEN, HIDDEN)),
            "proj_b": jnp.zeros((HIDDEN,), jnp.float32),
            "ln2_g": jnp.ones((HIDDEN,), jnp.float32),
            "ln2_b": jnp.zeros((HIDDEN,), jnp.float32),
            "fc1_w": nrm(next(keys), (HIDDEN, MLP)),
            "fc1_b": jnp.zeros((MLP,), jnp.float32),
            "fc2_w": nrm(next(keys), (MLP, HIDDEN)),
            "fc2_b": jnp.zeros((HIDDEN,), jnp.float32),
        })
    return params


# --------------------------------- main ---------------------------------------
if __name__ == "__main__":
    key = jax.random.PRNGKey(0)
    pkey, xkey = jax.random.split(key)
    params = init_params(pkey)
    pixel_values = jax.random.normal(xkey, (BATCH, CHANNELS, IMG, IMG), dtype=jnp.float32)

    probs = jax.jit(model_forward)(params, pixel_values)
    probs = jax.block_until_ready(probs)

    assert probs.shape == (BATCH, NUM_LABELS)
    assert bool(jnp.all(jnp.isfinite(probs)))
    assert bool(jnp.allclose(jnp.sum(probs, axis=-1), 1.0, atol=1e-5))
    print("KERNEL_OK")
</pallas_src>

<mosaic_0001>
module attributes {stable_mosaic.version = 11 : i64} {
  func.func @_vit_fused_kernel(%arg0: i32, %arg1: memref<1x24x48xf32, #tpu.memory_space<vmem>>, %arg2: memref<48x32xf32, #tpu.memory_space<vmem>>, %arg3: memref<24x32xf32, #tpu.memory_space<vmem>>, %arg4: memref<2x1x32xf32, #tpu.memory_space<vmem>>, %arg5: memref<2x1x32xf32, #tpu.memory_space<vmem>>, %arg6: memref<2x32x96xf32, #tpu.memory_space<vmem>>, %arg7: memref<2x1x96xf32, #tpu.memory_space<vmem>>, %arg8: memref<2x32x32xf32, #tpu.memory_space<vmem>>, %arg9: memref<2x1x32xf32, #tpu.memory_space<vmem>>, %arg10: memref<2x1x32xf32, #tpu.memory_space<vmem>>, %arg11: memref<2x1x32xf32, #tpu.memory_space<vmem>>, %arg12: memref<2x32x64xf32, #tpu.memory_space<vmem>>, %arg13: memref<2x1x64xf32, #tpu.memory_space<vmem>>, %arg14: memref<2x64x32xf32, #tpu.memory_space<vmem>>, %arg15: memref<2x1x32xf32, #tpu.memory_space<vmem>>, %arg16: memref<1x32xf32, #tpu.memory_space<vmem>>, %arg17: memref<1x32xf32, #tpu.memory_space<vmem>>, %arg18: memref<32x2xf32, #tpu.memory_space<vmem>>, %arg19: memref<1x2xf32, #tpu.memory_space<vmem>>, %arg20: memref<1x1x2xf32, #tpu.memory_space<vmem>>) attributes {dimension_semantics = [#tpu.dimension_semantics<parallel>], iteration_bounds = array<i64: 2>, scalar_prefetch = 0 : i64, scratch_operands = 0 : i64, tpu.core_type = #tpu.core_type<tc>, window_params = [{transform_indices = @transform_0, window_bounds = array<i64: 1, 24, 48>}, {pipeline_mode = #tpu.pipeline_mode<synchronous>, transform_indices = @transform_1, window_bounds = array<i64: 48, 32>}, {pipeline_mode = #tpu.pipeline_mode<synchronous>, transform_indices = @transform_2, window_bounds = array<i64: 24, 32>}, {pipeline_mode = #tpu.pipeline_mode<synchronous>, transform_indices = @transform_3, window_bounds = array<i64: 2, 1, 32>}, {pipeline_mode = #tpu.pipeline_mode<synchronous>, transform_indices = @transform_4, window_bounds = array<i64: 2, 1, 32>}, {pipeline_mode = #tpu.pipeline_mode<synchronous>, transform_indices = @transform_5, window_bounds = array<i64: 2, 32, 96>}, {pipeline_mode = #tpu.pipeline_mode<synchronous>, transform_indices = @transform_6, window_bounds = array<i64: 2, 1, 96>}, {pipeline_mode = #tpu.pipeline_mode<synchronous>, transform_indices = @transform_7, window_bounds = array<i64: 2, 32, 32>}, {pipeline_mode = #tpu.pipeline_mode<synchronous>, transform_indices = @transform_8, window_bounds = array<i64: 2, 1, 32>}, {pipeline_mode = #tpu.pipeline_mode<synchronous>, transform_indices = @transform_9, window_bounds = array<i64: 2, 1, 32>}, {pipeline_mode = #tpu.pipeline_mode<synchronous>, transform_indices = @transform_10, window_bounds = array<i64: 2, 1, 32>}, {pipeline_mode = #tpu.pipeline_mode<synchronous>, transform_indices = @transform_11, window_bounds = array<i64: 2, 32, 64>}, {pipeline_mode = #tpu.pipeline_mode<synchronous>, transform_indices = @transform_12, window_bounds = array<i64: 2, 1, 64>}, {pipeline_mode = #tpu.pipeline_mode<synchronous>, transform_indices = @transform_13, window_bounds = array<i64: 2, 64, 32>}, {pipeline_mode = #tpu.pipeline_mode<synchronous>, transform_indices = @transform_14, window_bounds = array<i64: 2, 1, 32>}, {pipeline_mode = #tpu.pipeline_mode<synchronous>, transform_indices = @transform_15, window_bounds = array<i64: 1, 32>}, {pipeline_mode = #tpu.pipeline_mode<synchronous>, transform_indices = @transform_16, window_bounds = array<i64: 1, 32>}, {pipeline_mode = #tpu.pipeline_mode<synchronous>, transform_indices = @transform_17, window_bounds = array<i64: 32, 2>}, {pipeline_mode = #tpu.pipeline_mode<synchronous>, transform_indices = @transform_18, window_bounds = array<i64: 1, 2>}, {transform_indices = @transform_19, window_bounds = array<i64: 1, 1, 2>}]} {
    %c0 = arith.constant 0 : index
    %c0_0 = arith.constant 0 : index
    %c0_1 = arith.constant 0 : index
    %0 = vector.load %arg1[%c0, %c0_0, %c0_1] : memref<1x24x48xf32, #tpu.memory_space<vmem>>, vector<1x24x48xf32>
    %1 = vector.shape_cast %0 : vector<1x24x48xf32> to vector<24x48xf32>
    %c0_2 = arith.constant 0 : index
    %c0_3 = arith.constant 0 : index
    %2 = vector.load %arg2[%c0_2, %c0_3] : memref<48x32xf32, #tpu.memory_space<vmem>>, vector<48x32xf32>
    %cst = arith.constant dense<0.000000e+00> : vector<24x32xf32>
    %3 = tpu.matmul %1, %2, %cst {dimension_numbers = #tpu.dot_dimension_numbers<[1], [0], [0], [1], [0, 0, 1, 1], [], []>} : vector<24x48xf32>, vector<48x32xf32>, vector<24x32xf32> -> vector<24x32xf32>
    %c0_4 = arith.constant 0 : index
    %c0_5 = arith.constant 0 : index
    %4 = vector.load %arg3[%c0_4, %c0_5] : memref<24x32xf32, #tpu.memory_space<vmem>>, vector<24x32xf32>
    %5 = arith.addf %3, %4 : vector<24x32xf32>
    %6 = tpu.iota {dimensions = array<i32: 1>} : vector<24x24xi32>
    %c17_i32 = arith.constant 17 : i32
    %7 = vector.broadcast %c17_i32 : i32 to vector<24x24xi32>
    %8 = arith.cmpi slt, %6, %7 : vector<24x24xi32>
    %c0_6 = arith.constant 0 : index
    %c0_7 = arith.constant 0 : index
    %c0_8 = arith.constant 0 : index
    %9 = vector.load %arg4[%c0_6, %c0_7, %c0_8] : memref<2x1x32xf32, #tpu.memory_space<vmem>>, vector<1x1x32xf32>
    %10 = vector.shape_cast %9 : vector<1x1x32xf32> to vector<1x32xf32>
    %c0_9 = arith.constant 0 : index
    %c0_10 = arith.constant 0 : index
    %c0_11 = arith.constant 0 : index
    %11 = vector.load %arg5[%c0_9, %c0_10, %c0_11] : memref<2x1x32xf32, #tpu.memory_space<vmem>>, vector<1x1x32xf32>
    %12 = vector.shape_cast %11 : vector<1x1x32xf32> to vector<1x32xf32>
    %cst_12 = arith.constant dense<0.000000e+00> : vector<24xf32>
    %13 = vector.multi_reduction <add>, %5, %cst_12 [1] : vector<24x32xf32> to vector<24xf32>
    %14 = vector.shape_cast %13 : vector<24xf32> to vector<24x1xf32>
    %cst_13 = arith.constant 3.200000e+01 : f32
    %15 = vector.broadcast %cst_13 : f32 to vector<24x1xf32>
    %16 = arith.divf %14, %15 : vector<24x1xf32>
    %17 = vector.broadcast %16 : vector<24x1xf32> to vector<24x32xf32>
    %18 = arith.subf %5, %17 : vector<24x32xf32>
    %19 = arith.mulf %18, %18 : vector<24x32xf32>
    %cst_14 = arith.constant dense<0.000000e+00> : vector<24xf32>
    %20 = vector.multi_reduction <add>, %19, %cst_14 [1] : vector<24x32xf32> to vector<24xf32>
    %21 = vector.shape_cast %20 : vector<24xf32> to vector<24x1xf32>
    %cst_15 = arith.constant 3.200000e+01 : f32
    %22 = vector.broadcast %cst_15 : f32 to vector<24x1xf32>
    %23 = arith.divf %21, %22 : vector<24x1xf32>
    %24 = vector.broadcast %16 : vector<24x1xf32> to vector<24x32xf32>
    %25 = arith.subf %5, %24 : vector<24x32xf32>
    %cst_16 = arith.constant 9.99999996E-13 : f32
    %26 = vector.broadcast %cst_16 : f32 to vector<24x1xf32>
    %27 = arith.addf %23, %26 : vector<24x1xf32>
    %28 = math.rsqrt %27 : vector<24x1xf32>
    %29 = vector.broadcast %28 : vector<24x1xf32> to vector<24x32xf32>
    %30 = arith.mulf %25, %29 : vector<24x32xf32>
    %31 = vector.broadcast %10 : vector<1x32xf32> to vector<24x32xf32>
    %32 = arith.mulf %30, %31 : vector<24x32xf32>
    %33 = vector.broadcast %12 : vector<1x32xf32> to vector<24x32xf32>
    %34 = arith.addf %32, %33 : vector<24x32xf32>
    %c0_17 = arith.constant 0 : index
    %c0_18 = arith.constant 0 : index
    %c0_19 = arith.constant 0 : index
    %35 = vector.load %arg6[%c0_17, %c0_18, %c0_19] : memref<2x32x96xf32, #tpu.memory_space<vmem>>, vector<1x32x96xf32>
    %36 = vector.shape_cast %35 : vector<1x32x96xf32> to vector<32x96xf32>
    %cst_20 = arith.constant dense<0.000000e+00> : vector<24x96xf32>
    %37 = tpu.matmul %34, %36, %cst_20 {dimension_numbers = #tpu.dot_dimension_numbers<[1], [0], [0], [1], [0, 0, 1, 1], [], []>} : vector<24x32xf32>, vector<32x96xf32>, vector<24x96xf32> -> vector<24x96xf32>
    %c0_21 = arith.constant 0 : index
    %c0_22 = arith.constant 0 : index
    %c0_23 = arith.constant 0 : index
    %38 = vector.load %arg7[%c0_21, %c0_22, %c0_23] : memref<2x1x96xf32, #tpu.memory_space<vmem>>, vector<1x1x96xf32>
    %39 = vector.shape_cast %38 : vector<1x1x96xf32> to vector<1x96xf32>
    %40 = vector.broadcast %39 : vector<1x96xf32> to vector<24x96xf32>
    %41 = arith.addf %37, %40 : vector<24x96xf32>
    %c0_24 = arith.constant 0 : index
    %c0_25 = arith.constant 0 : index
    %c0_26 = arith.constant 0 : index
    %42 = vector.load %arg8[%c0_24, %c0_25, %c0_26] : memref<2x32x32xf32, #tpu.memory_space<vmem>>, vector<1x32x32xf32>
    %43 = vector.shape_cast %42 : vector<1x32x32xf32> to vector<32x32xf32>
    %cst_27 = arith.constant 0.000000e+00 : f32
    %44 = vector.broadcast %cst_27 : f32 to vector<24x32xf32>
    %45 = vector.extract_strided_slice %41 {offsets = [0, 0], sizes = [24, 16], strides = [1, 1]} : vector<24x96xf32> to vector<24x16xf32>
    %46 = vector.extract_strided_slice %41 {offsets = [0, 32], sizes = [24, 16], strides = [1, 1]} : vector<24x96xf32> to vector<24x16xf32>
    %47 = vector.extract_strided_slice %41 {offsets = [0, 64], sizes = [24, 16], strides = [1, 1]} : vector<24x96xf32> to vector<24x16xf32>
    %cst_28 = arith.constant dense<0.000000e+00> : vector<24x24xf32>
    %48 = tpu.matmul %45, %46, %cst_28 {dimension_numbers = #tpu.dot_dimension_numbers<[1], [1], [0], [0], [0, 0, 1, 0], [], []>} : vector<24x16xf32>, vector<24x16xf32>, vector<24x24xf32> -> vector<24x24xf32>
    %cst_29 = arith.constant 2.500000e-01 : f32
    %49 = vector.broadcast %cst_29 : f32 to vector<24x24xf32>
    %50 = arith.mulf %48, %49 : vector<24x24xf32>
    %cst_30 = arith.constant -1.000000e+30 : f32
    %51 = vector.broadcast %cst_30 : f32 to vector<24x24xf32>
    %52 = arith.select %8, %50, %51 : vector<24x24xi1>, vector<24x24xf32>
    %cst_31 = arith.constant dense<0xFF800000> : vector<24xf32>
    %53 = vector.multi_reduction <maximumf>, %52, %cst_31 [1] : vector<24x24xf32> to vector<24xf32>
    %54 = vector.shape_cast %53 : vector<24xf32> to vector<24x1xf32>
    %55 = vector.broadcast %54 : vector<24x1xf32> to vector<24x24xf32>
    %56 = arith.subf %52, %55 : vector<24x24xf32>
    %57 = math.exp %56 : vector<24x24xf32>
    %cst_32 = arith.constant dense<0.000000e+00> : vector<24xf32>
    %58 = vector.multi_reduction <add>, %57, %cst_32 [1] : vector<24x24xf32> to vector<24xf32>
    %59 = vector.shape_cast %58 : vector<24xf32> to vector<24x1xf32>
    %60 = tpu.reciprocal %59 {approx = true} : vector<24x1xf32> -> vector<24x1xf32>
    %61 = vector.broadcast %60 : vector<24x1xf32> to vector<24x24xf32>
    %62 = arith.mulf %57, %61 : vector<24x24xf32>
    %cst_33 = arith.constant dense<0.000000e+00> : vector<24x16xf32>
    %63 = tpu.matmul %62, %47, %cst_33 {dimension_numbers = #tpu.dot_dimension_numbers<[1], [0], [0], [1], [0, 0, 1, 1], [], []>} : vector<24x24xf32>, vector<24x16xf32>, vector<24x16xf32> -> vector<24x16xf32>
    %64 = vector.extract_strided_slice %43 {offsets = [0, 0], sizes = [16, 32], strides = [1, 1]} : vector<32x32xf32> to vector<16x32xf32>
    %cst_34 = arith.constant dense<0.000000e+00> : vector<24x32xf32>
    %65 = tpu.matmul %63, %64, %cst_34 {dimension_numbers = #tpu.dot_dimension_numbers<[1], [0], [0], [1], [0, 0, 1, 1], [], []>} : vector<24x16xf32>, vector<16x32xf32>, vector<24x32xf32> -> vector<24x32xf32>
    %66 = arith.addf %44, %65 : vector<24x32xf32>
    %67 = vector.extract_strided_slice %41 {offsets = [0, 16], sizes = [24, 16], strides = [1, 1]} : vector<24x96xf32> to vector<24x16xf32>
    %68 = vector.extract_strided_slice %41 {offsets = [0, 48], sizes = [24, 16], strides = [1, 1]} : vector<24x96xf32> to vector<24x16xf32>
    %69 = vector.extract_strided_slice %41 {offsets = [0, 80], sizes = [24, 16], strides = [1, 1]} : vector<24x96xf32> to vector<24x16xf32>
    %cst_35 = arith.constant dense<0.000000e+00> : vector<24x24xf32>
    %70 = tpu.matmul %67, %68, %cst_35 {dimension_numbers = #tpu.dot_dimension_numbers<[1], [1], [0], [0], [0, 0, 1, 0], [], []>} : vector<24x16xf32>, vector<24x16xf32>, vector<24x24xf32> -> vector<24x24xf32>
    %cst_36 = arith.constant 2.500000e-01 : f32
    %71 = vector.broadcast %cst_36 : f32 to vector<24x24xf32>
    %72 = arith.mulf %70, %71 : vector<24x24xf32>
    %cst_37 = arith.constant -1.000000e+30 : f32
    %73 = vector.broadcast %cst_37 : f32 to vector<24x24xf32>
    %74 = arith.select %8, %72, %73 : vector<24x24xi1>, vector<24x24xf32>
    %cst_38 = arith.constant dense<0xFF800000> : vector<24xf32>
    %75 = vector.multi_reduction <maximumf>, %74, %cst_38 [1] : vector<24x24xf32> to vector<24xf32>
    %76 = vector.shape_cast %75 : vector<24xf32> to vector<24x1xf32>
    %77 = vector.broadcast %76 : vector<24x1xf32> to vector<24x24xf32>
    %78 = arith.subf %74, %77 : vector<24x24xf32>
    %79 = math.exp %78 : vector<24x24xf32>
    %cst_39 = arith.constant dense<0.000000e+00> : vector<24xf32>
    %80 = vector.multi_reduction <add>, %79, %cst_39 [1] : vector<24x24xf32> to vector<24xf32>
    %81 = vector.shape_cast %80 : vector<24xf32> to vector<24x1xf32>
    %82 = tpu.reciprocal %81 {approx = true} : vector<24x1xf32> -> vector<24x1xf32>
    %83 = vector.broadcast %82 : vector<24x1xf32> to vector<24x24xf32>
    %84 = arith.mulf %79, %83 : vector<24x24xf32>
    %cst_40 = arith.constant dense<0.000000e+00> : vector<24x16xf32>
    %85 = tpu.matmul %84, %69, %cst_40 {dimension_numbers = #tpu.dot_dimension_numbers<[1], [0], [0], [1], [0, 0, 1, 1], [], []>} : vector<24x24xf32>, vector<24x16xf32>, vector<24x16xf32> -> vector<24x16xf32>
    %86 = vector.extract_strided_slice %43 {offsets = [16, 0], sizes = [16, 32], strides = [1, 1]} : vector<32x32xf32> to vector<16x32xf32>
    %cst_41 = arith.constant dense<0.000000e+00> : vector<24x32xf32>
    %87 = tpu.matmul %85, %86, %cst_41 {dimension_numbers = #tpu.dot_dimension_numbers<[1], [0], [0], [1], [0, 0, 1, 1], [], []>} : vector<24x16xf32>, vector<16x32xf32>, vector<24x32xf32> -> vector<24x32xf32>
    %88 = arith.addf %66, %87 : vector<24x32xf32>
    %89 = arith.addf %5, %88 : vector<24x32xf32>
    %c0_42 = arith.constant 0 : index
    %c0_43 = arith.constant 0 : index
    %c0_44 = arith.constant 0 : index
    %90 = vector.load %arg9[%c0_42, %c0_43, %c0_44] : memref<2x1x32xf32, #tpu.memory_space<vmem>>, vector<1x1x32xf32>
    %91 = vector.shape_cast %90 : vector<1x1x32xf32> to vector<1x32xf32>
    %92 = vector.broadcast %91 : vector<1x32xf32> to vector<24x32xf32>
    %93 = arith.addf %89, %92 : vector<24x32xf32>
    %c0_45 = arith.constant 0 : index
    %c0_46 = arith.constant 0 : index
    %c0_47 = arith.constant 0 : index
    %94 = vector.load %arg10[%c0_45, %c0_46, %c0_47] : memref<2x1x32xf32, #tpu.memory_space<vmem>>, vector<1x1x32xf32>
    %95 = vector.shape_cast %94 : vector<1x1x32xf32> to vector<1x32xf32>
    %c0_48 = arith.constant 0 : index
    %c0_49 = arith.constant 0 : index
    %c0_50 = arith.constant 0 : index
    %96 = vector.load %arg11[%c0_48, %c0_49, %c0_50] : memref<2x1x32xf32, #tpu.memory_space<vmem>>, vector<1x1x32xf32>
    %97 = vector.shape_cast %96 : vector<1x1x32xf32> to vector<1x32xf32>
    %cst_51 = arith.constant dense<0.000000e+00> : vector<24xf32>
    %98 = vector.multi_reduction <add>, %93, %cst_51 [1] : vector<24x32xf32> to vector<24xf32>
    %99 = vector.shape_cast %98 : vector<24xf32> to vector<24x1xf32>
    %cst_52 = arith.constant 3.200000e+01 : f32
    %100 = vector.broadcast %cst_52 : f32 to vector<24x1xf32>
    %101 = arith.divf %99, %100 : vector<24x1xf32>
    %102 = vector.broadcast %101 : vector<24x1xf32> to vector<24x32xf32>
    %103 = arith.subf %93, %102 : vector<24x32xf32>
    %104 = arith.mulf %103, %103 : vector<24x32xf32>
    %cst_53 = arith.constant dense<0.000000e+00> : vector<24xf32>
    %105 = vector.multi_reduction <add>, %104, %cst_53 [1] : vector<24x32xf32> to vector<24xf32>
    %106 = vector.shape_cast %105 : vector<24xf32> to vector<24x1xf32>
    %cst_54 = arith.constant 3.200000e+01 : f32
    %107 = vector.broadcast %cst_54 : f32 to vector<24x1xf32>
    %108 = arith.divf %106, %107 : vector<24x1xf32>
    %109 = vector.broadcast %101 : vector<24x1xf32> to vector<24x32xf32>
    %110 = arith.subf %93, %109 : vector<24x32xf32>
    %cst_55 = arith.constant 9.99999996E-13 : f32
    %111 = vector.broadcast %cst_55 : f32 to vector<24x1xf32>
    %112 = arith.addf %108, %111 : vector<24x1xf32>
    %113 = math.rsqrt %112 : vector<24x1xf32>
    %114 = vector.broadcast %113 : vector<24x1xf32> to vector<24x32xf32>
    %115 = arith.mulf %110, %114 : vector<24x32xf32>
    %116 = vector.broadcast %95 : vector<1x32xf32> to vector<24x32xf32>
    %117 = arith.mulf %115, %116 : vector<24x32xf32>
    %118 = vector.broadcast %97 : vector<1x32xf32> to vector<24x32xf32>
    %119 = arith.addf %117, %118 : vector<24x32xf32>
    %c0_56 = arith.constant 0 : index
    %c0_57 = arith.constant 0 : index
    %c0_58 = arith.constant 0 : index
    %120 = vector.load %arg12[%c0_56, %c0_57, %c0_58] : memref<2x32x64xf32, #tpu.memory_space<vmem>>, vector<1x32x64xf32>
    %121 = vector.shape_cast %120 : vector<1x32x64xf32> to vector<32x64xf32>
    %cst_59 = arith.constant dense<0.000000e+00> : vector<24x64xf32>
    %122 = tpu.matmul %119, %121, %cst_59 {dimension_numbers = #tpu.dot_dimension_numbers<[1], [0], [0], [1], [0, 0, 1, 1], [], []>} : vector<24x32xf32>, vector<32x64xf32>, vector<24x64xf32> -> vector<24x64xf32>
    %c0_60 = arith.constant 0 : index
    %c0_61 = arith.constant 0 : index
    %c0_62 = arith.constant 0 : index
    %123 = vector.load %arg13[%c0_60, %c0_61, %c0_62] : memref<2x1x64xf32, #tpu.memory_space<vmem>>, vector<1x1x64xf32>
    %124 = vector.shape_cast %123 : vector<1x1x64xf32> to vector<1x64xf32>
    %125 = vector.broadcast %124 : vector<1x64xf32> to vector<24x64xf32>
    %126 = arith.addf %122, %125 : vector<24x64xf32>
    %cst_63 = arith.constant 5.000000e-01 : f32
    %127 = vector.broadcast %cst_63 : f32 to vector<24x64xf32>
    %128 = arith.mulf %127, %126 : vector<24x64xf32>
    %cst_64 = arith.constant 0.707106769 : f32
    %129 = vector.broadcast %cst_64 : f32 to vector<24x64xf32>
    %130 = arith.mulf %126, %129 : vector<24x64xf32>
    %cst_65 = arith.constant 0.000000e+00 : f32
    %131 = vector.broadcast %cst_65 : f32 to vector<24x64xf32>
    %132 = arith.cmpf oge, %130, %131 : vector<24x64xf32>
    %cst_66 = arith.constant 1.000000e+00 : f32
    %cst_67 = arith.constant -1.000000e+00 : f32
    %133 = vector.broadcast %cst_66 : f32 to vector<24x64xf32>
    %134 = vector.broadcast %cst_67 : f32 to vector<24x64xf32>
    %135 = arith.select %132, %133, %134 : vector<24x64xi1>, vector<24x64xf32>
    %136 = math.absf %130 : vector<24x64xf32>
    %cst_68 = arith.constant 0.327591091 : f32
    %137 = vector.broadcast %cst_68 : f32 to vector<24x64xf32>
    %138 = arith.mulf %137, %136 : vector<24x64xf32>
    %cst_69 = arith.constant 1.000000e+00 : f32
    %139 = vector.broadcast %cst_69 : f32 to vector<24x64xf32>
    %140 = arith.addf %139, %138 : vector<24x64xf32>
    %cst_70 = arith.constant 1.000000e+00 : f32
    %141 = vector.broadcast %cst_70 : f32 to vector<24x64xf32>
    %142 = arith.divf %141, %140 : vector<24x64xf32>
    %cst_71 = arith.constant 1.06140542 : f32
    %143 = vector.broadcast %cst_71 : f32 to vector<24x64xf32>
    %144 = arith.mulf %142, %143 : vector<24x64xf32>
    %cst_72 = arith.constant -1.45315206 : f32
    %145 = vector.broadcast %cst_72 : f32 to vector<24x64xf32>
    %146 = arith.addf %145, %144 : vector<24x64xf32>
    %147 = arith.mulf %142, %146 : vector<24x64xf32>
    %cst_73 = arith.constant 1.42141378 : f32
    %148 = vector.broadcast %cst_73 : f32 to vector<24x64xf32>
    %149 = arith.addf %148, %147 : vector<24x64xf32>
    %150 = arith.mulf %142, %149 : vector<24x64xf32>
    %cst_74 = arith.constant -0.284496725 : f32
    %151 = vector.broadcast %cst_74 : f32 to vector<24x64xf32>
    %152 = arith.addf %151, %150 : vector<24x64xf32>
    %153 = arith.mulf %142, %152 : vector<24x64xf32>
    %cst_75 = arith.constant 0.254829586 : f32
    %154 = vector.broadcast %cst_75 : f32 to vector<24x64xf32>
    %155 = arith.addf %154, %153 : vector<24x64xf32>
    %156 = arith.mulf %142, %155 : vector<24x64xf32>
    %cst_76 = arith.constant 0.000000e+00 : f32
    %157 = vector.broadcast %cst_76 : f32 to vector<24x64xf32>
    %158 = arith.subf %157, %136 : vector<24x64xf32>
    %159 = arith.mulf %158, %136 : vector<24x64xf32>
    %160 = math.exp %159 : vector<24x64xf32>
    %161 = arith.mulf %156, %160 : vector<24x64xf32>
    %cst_77 = arith.constant 1.000000e+00 : f32
    %162 = vector.broadcast %cst_77 : f32 to vector<24x64xf32>
    %163 = arith.subf %162, %161 : vector<24x64xf32>
    %164 = arith.mulf %135, %163 : vector<24x64xf32>
    %cst_78 = arith.constant 1.000000e+00 : f32
    %165 = vector.broadcast %cst_78 : f32 to vector<24x64xf32>
    %166 = arith.addf %165, %164 : vector<24x64xf32>
    %167 = arith.mulf %128, %166 : vector<24x64xf32>
    %c0_79 = arith.constant 0 : index
    %c0_80 = arith.constant 0 : index
    %c0_81 = arith.constant 0 : index
    %168 = vector.load %arg14[%c0_79, %c0_80, %c0_81] : memref<2x64x32xf32, #tpu.memory_space<vmem>>, vector<1x64x32xf32>
    %169 = vector.shape_cast %168 : vector<1x64x32xf32> to vector<64x32xf32>
    %cst_82 = arith.constant dense<0.000000e+00> : vector<24x32xf32>
    %170 = tpu.matmul %167, %169, %cst_82 {dimension_numbers = #tpu.dot_dimension_numbers<[1], [0], [0], [1], [0, 0, 1, 1], [], []>} : vector<24x64xf32>, vector<64x32xf32>, vector<24x32xf32> -> vector<24x32xf32>
    %c0_83 = arith.constant 0 : index
    %c0_84 = arith.constant 0 : index
    %c0_85 = arith.constant 0 : index
    %171 = vector.load %arg15[%c0_83, %c0_84, %c0_85] : memref<2x1x32xf32, #tpu.memory_space<vmem>>, vector<1x1x32xf32>
    %172 = vector.shape_cast %171 : vector<1x1x32xf32> to vector<1x32xf32>
    %173 = vector.broadcast %172 : vector<1x32xf32> to vector<24x32xf32>
    %174 = arith.addf %170, %173 : vector<24x32xf32>
    %175 = arith.addf %93, %174 : vector<24x32xf32>
    %c1 = arith.constant 1 : index
    %c0_86 = arith.constant 0 : index
    %c0_87 = arith.constant 0 : index
    %176 = vector.load %arg4[%c1, %c0_86, %c0_87] : memref<2x1x32xf32, #tpu.memory_space<vmem>>, vector<1x1x32xf32>
    %177 = vector.shape_cast %176 : vector<1x1x32xf32> to vector<1x32xf32>
    %c1_88 = arith.constant 1 : index
    %c0_89 = arith.constant 0 : index
    %c0_90 = arith.constant 0 : index
    %178 = vector.load %arg5[%c1_88, %c0_89, %c0_90] : memref<2x1x32xf32, #tpu.memory_space<vmem>>, vector<1x1x32xf32>
    %179 = vector.shape_cast %178 : vector<1x1x32xf32> to vector<1x32xf32>
    %cst_91 = arith.constant dense<0.000000e+00> : vector<24xf32>
    %180 = vector.multi_reduction <add>, %175, %cst_91 [1] : vector<24x32xf32> to vector<24xf32>
    %181 = vector.shape_cast %180 : vector<24xf32> to vector<24x1xf32>
    %cst_92 = arith.constant 3.200000e+01 : f32
    %182 = vector.broadcast %cst_92 : f32 to vector<24x1xf32>
    %183 = arith.divf %181, %182 : vector<24x1xf32>
    %184 = vector.broadcast %183 : vector<24x1xf32> to vector<24x32xf32>
    %185 = arith.subf %175, %184 : vector<24x32xf32>
    %186 = arith.mulf %185, %185 : vector<24x32xf32>
    %cst_93 = arith.constant dense<0.000000e+00> : vector<24xf32>
    %187 = vector.multi_reduction <add>, %186, %cst_93 [1] : vector<24x32xf32> to vector<24xf32>
    %188 = vector.shape_cast %187 : vector<24xf32> to vector<24x1xf32>
    %cst_94 = arith.constant 3.200000e+01 : f32
    %189 = vector.broadcast %cst_94 : f32 to vector<24x1xf32>
    %190 = arith.divf %188, %189 : vector<24x1xf32>
    %191 = vector.broadcast %183 : vector<24x1xf32> to vector<24x32xf32>
    %192 = arith.subf %175, %191 : vector<24x32xf32>
    %cst_95 = arith.constant 9.99999996E-13 : f32
    %193 = vector.broadcast %cst_95 : f32 to vector<24x1xf32>
    %194 = arith.addf %190, %193 : vector<24x1xf32>
    %195 = math.rsqrt %194 : vector<24x1xf32>
    %196 = vector.broadcast %195 : vector<24x1xf32> to vector<24x32xf32>
    %197 = arith.mulf %192, %196 : vector<24x32xf32>
    %198 = vector.broadcast %177 : vector<1x32xf32> to vector<24x32xf32>
    %199 = arith.mulf %197, %198 : vector<24x32xf32>
    %200 = vector.broadcast %179 : vector<1x32xf32> to vector<24x32xf32>
    %201 = arith.addf %199, %200 : vector<24x32xf32>
    %c1_96 = arith.constant 1 : index
    %c0_97 = arith.constant 0 : index
    %c0_98 = arith.constant 0 : index
    %202 = vector.load %arg6[%c1_96, %c0_97, %c0_98] : memref<2x32x96xf32, #tpu.memory_space<vmem>>, vector<1x32x96xf32>
    %203 = vector.shape_cast %202 : vector<1x32x96xf32> to vector<32x96xf32>
    %cst_99 = arith.constant dense<0.000000e+00> : vector<24x96xf32>
    %204 = tpu.matmul %201, %203, %cst_99 {dimension_numbers = #tpu.dot_dimension_numbers<[1], [0], [0], [1], [0, 0, 1, 1], [], []>} : vector<24x32xf32>, vector<32x96xf32>, vector<24x96xf32> -> vector<24x96xf32>
    %c1_100 = arith.constant 1 : index
    %c0_101 = arith.constant 0 : index
    %c0_102 = arith.constant 0 : index
    %205 = vector.load %arg7[%c1_100, %c0_101, %c0_102] : memref<2x1x96xf32, #tpu.memory_space<vmem>>, vector<1x1x96xf32>
    %206 = vector.shape_cast %205 : vector<1x1x96xf32> to vector<1x96xf32>
    %207 = vector.broadcast %206 : vector<1x96xf32> to vector<24x96xf32>
    %208 = arith.addf %204, %207 : vector<24x96xf32>
    %c1_103 = arith.constant 1 : index
    %c0_104 = arith.constant 0 : index
    %c0_105 = arith.constant 0 : index
    %209 = vector.load %arg8[%c1_103, %c0_104, %c0_105] : memref<2x32x32xf32, #tpu.memory_space<vmem>>, vector<1x32x32xf32>
    %210 = vector.shape_cast %209 : vector<1x32x32xf32> to vector<32x32xf32>
    %cst_106 = arith.constant 0.000000e+00 : f32
    %211 = vector.broadcast %cst_106 : f32 to vector<24x32xf32>
    %212 = vector.extract_strided_slice %208 {offsets = [0, 0], sizes = [24, 16], strides = [1, 1]} : vector<24x96xf32> to vector<24x16xf32>
    %213 = vector.extract_strided_slice %208 {offsets = [0, 32], sizes = [24, 16], strides = [1, 1]} : vector<24x96xf32> to vector<24x16xf32>
    %214 = vector.extract_strided_slice %208 {offsets = [0, 64], sizes = [24, 16], strides = [1, 1]} : vector<24x96xf32> to vector<24x16xf32>
    %cst_107 = arith.constant dense<0.000000e+00> : vector<24x24xf32>
    %215 = tpu.matmul %212, %213, %cst_107 {dimension_numbers = #tpu.dot_dimension_numbers<[1], [1], [0], [0], [0, 0, 1, 0], [], []>} : vector<24x16xf32>, vector<24x16xf32>, vector<24x24xf32> -> vector<24x24xf32>
    %cst_108 = arith.constant 2.500000e-01 : f32
    %216 = vector.broadcast %cst_108 : f32 to vector<24x24xf32>
    %217 = arith.mulf %215, %216 : vector<24x24xf32>
    %cst_109 = arith.constant -1.000000e+30 : f32
    %218 = vector.broadcast %cst_109 : f32 to vector<24x24xf32>
    %219 = arith.select %8, %217, %218 : vector<24x24xi1>, vector<24x24xf32>
    %cst_110 = arith.constant dense<0xFF800000> : vector<24xf32>
    %220 = vector.multi_reduction <maximumf>, %219, %cst_110 [1] : vector<24x24xf32> to vector<24xf32>
    %221 = vector.shape_cast %220 : vector<24xf32> to vector<24x1xf32>
    %222 = vector.broadcast %221 : vector<24x1xf32> to vector<24x24xf32>
    %223 = arith.subf %219, %222 : vector<24x24xf32>
    %224 = math.exp %223 : vector<24x24xf32>
    %cst_111 = arith.constant dense<0.000000e+00> : vector<24xf32>
    %225 = vector.multi_reduction <add>, %224, %cst_111 [1] : vector<24x24xf32> to vector<24xf32>
    %226 = vector.shape_cast %225 : vector<24xf32> to vector<24x1xf32>
    %227 = tpu.reciprocal %226 {approx = true} : vector<24x1xf32> -> vector<24x1xf32>
    %228 = vector.broadcast %227 : vector<24x1xf32> to vector<24x24xf32>
    %229 = arith.mulf %224, %228 : vector<24x24xf32>
    %cst_112 = arith.constant dense<0.000000e+00> : vector<24x16xf32>
    %230 = tpu.matmul %229, %214, %cst_112 {dimension_numbers = #tpu.dot_dimension_numbers<[1], [0], [0], [1], [0, 0, 1, 1], [], []>} : vector<24x24xf32>, vector<24x16xf32>, vector<24x16xf32> -> vector<24x16xf32>
    %231 = vector.extract_strided_slice %210 {offsets = [0, 0], sizes = [16, 32], strides = [1, 1]} : vector<32x32xf32> to vector<16x32xf32>
    %cst_113 = arith.constant dense<0.000000e+00> : vector<24x32xf32>
    %232 = tpu.matmul %230, %231, %cst_113 {dimension_numbers = #tpu.dot_dimension_numbers<[1], [0], [0], [1], [0, 0, 1, 1], [], []>} : vector<24x16xf32>, vector<16x32xf32>, vector<24x32xf32> -> vector<24x32xf32>
    %233 = arith.addf %211, %232 : vector<24x32xf32>
    %234 = vector.extract_strided_slice %208 {offsets = [0, 16], sizes = [24, 16], strides = [1, 1]} : vector<24x96xf32> to vector<24x16xf32>
    %235 = vector.extract_strided_slice %208 {offsets = [0, 48], sizes = [24, 16], strides = [1, 1]} : vector<24x96xf32> to vector<24x16xf32>
    %236 = vector.extract_strided_slice %208 {offsets = [0, 80], sizes = [24, 16], strides = [1, 1]} : vector<24x96xf32> to vector<24x16xf32>
    %cst_114 = arith.constant dense<0.000000e+00> : vector<24x24xf32>
    %237 = tpu.matmul %234, %235, %cst_114 {dimension_numbers = #tpu.dot_dimension_numbers<[1], [1], [0], [0], [0, 0, 1, 0], [], []>} : vector<24x16xf32>, vector<24x16xf32>, vector<24x24xf32> -> vector<24x24xf32>
    %cst_115 = arith.constant 2.500000e-01 : f32
    %238 = vector.broadcast %cst_115 : f32 to vector<24x24xf32>
    %239 = arith.mulf %237, %238 : vector<24x24xf32>
    %cst_116 = arith.constant -1.000000e+30 : f32
    %240 = vector.broadcast %cst_116 : f32 to vector<24x24xf32>
    %241 = arith.select %8, %239, %240 : vector<24x24xi1>, vector<24x24xf32>
    %cst_117 = arith.constant dense<0xFF800000> : vector<24xf32>
    %242 = vector.multi_reduction <maximumf>, %241, %cst_117 [1] : vector<24x24xf32> to vector<24xf32>
    %243 = vector.shape_cast %242 : vector<24xf32> to vector<24x1xf32>
    %244 = vector.broadcast %243 : vector<24x1xf32> to vector<24x24xf32>
    %245 = arith.subf %241, %244 : vector<24x24xf32>
    %246 = math.exp %245 : vector<24x24xf32>
    %cst_118 = arith.constant dense<0.000000e+00> : vector<24xf32>
    %247 = vector.multi_reduction <add>, %246, %cst_118 [1] : vector<24x24xf32> to vector<24xf32>
    %248 = vector.shape_cast %247 : vector<24xf32> to vector<24x1xf32>
    %249 = tpu.reciprocal %248 {approx = true} : vector<24x1xf32> -> vector<24x1xf32>
    %250 = vector.broadcast %249 : vector<24x1xf32> to vector<24x24xf32>
    %251 = arith.mulf %246, %250 : vector<24x24xf32>
    %cst_119 = arith.constant dense<0.000000e+00> : vector<24x16xf32>
    %252 = tpu.matmul %251, %236, %cst_119 {dimension_numbers = #tpu.dot_dimension_numbers<[1], [0], [0], [1], [0, 0, 1, 1], [], []>} : vector<24x24xf32>, vector<24x16xf32>, vector<24x16xf32> -> vector<24x16xf32>
    %253 = vector.extract_strided_slice %210 {offsets = [16, 0], sizes = [16, 32], strides = [1, 1]} : vector<32x32xf32> to vector<16x32xf32>
    %cst_120 = arith.constant dense<0.000000e+00> : vector<24x32xf32>
    %254 = tpu.matmul %252, %253, %cst_120 {dimension_numbers = #tpu.dot_dimension_numbers<[1], [0], [0], [1], [0, 0, 1, 1], [], []>} : vector<24x16xf32>, vector<16x32xf32>, vector<24x32xf32> -> vector<24x32xf32>
    %255 = arith.addf %233, %254 : vector<24x32xf32>
    %256 = arith.addf %175, %255 : vector<24x32xf32>
    %c1_121 = arith.constant 1 : index
    %c0_122 = arith.constant 0 : index
    %c0_123 = arith.constant 0 : index
    %257 = vector.load %arg9[%c1_121, %c0_122, %c0_123] : memref<2x1x32xf32, #tpu.memory_space<vmem>>, vector<1x1x32xf32>
    %258 = vector.shape_cast %257 : vector<1x1x32xf32> to vector<1x32xf32>
    %259 = vector.broadcast %258 : vector<1x32xf32> to vector<24x32xf32>
    %260 = arith.addf %256, %259 : vector<24x32xf32>
    %c1_124 = arith.constant 1 : index
    %c0_125 = arith.constant 0 : index
    %c0_126 = arith.constant 0 : index
    %261 = vector.load %arg10[%c1_124, %c0_125, %c0_126] : memref<2x1x32xf32, #tpu.memory_space<vmem>>, vector<1x1x32xf32>
    %262 = vector.shape_cast %261 : vector<1x1x32xf32> to vector<1x32xf32>
    %c1_127 = arith.constant 1 : index
    %c0_128 = arith.constant 0 : index
    %c0_129 = arith.constant 0 : index
    %263 = vector.load %arg11[%c1_127, %c0_128, %c0_129] : memref<2x1x32xf32, #tpu.memory_space<vmem>>, vector<1x1x32xf32>
    %264 = vector.shape_cast %263 : vector<1x1x32xf32> to vector<1x32xf32>
    %cst_130 = arith.constant dense<0.000000e+00> : vector<24xf32>
    %265 = vector.multi_reduction <add>, %260, %cst_130 [1] : vector<24x32xf32> to vector<24xf32>
    %266 = vector.shape_cast %265 : vector<24xf32> to vector<24x1xf32>
    %cst_131 = arith.constant 3.200000e+01 : f32
    %267 = vector.broadcast %cst_131 : f32 to vector<24x1xf32>
    %268 = arith.divf %266, %267 : vector<24x1xf32>
    %269 = vector.broadcast %268 : vector<24x1xf32> to vector<24x32xf32>
    %270 = arith.subf %260, %269 : vector<24x32xf32>
    %271 = arith.mulf %270, %270 : vector<24x32xf32>
    %cst_132 = arith.constant dense<0.000000e+00> : vector<24xf32>
    %272 = vector.multi_reduction <add>, %271, %cst_132 [1] : vector<24x32xf32> to vector<24xf32>
    %273 = vector.shape_cast %272 : vector<24xf32> to vector<24x1xf32>
    %cst_133 = arith.constant 3.200000e+01 : f32
    %274 = vector.broadcast %cst_133 : f32 to vector<24x1xf32>
    %275 = arith.divf %273, %274 : vector<24x1xf32>
    %276 = vector.broadcast %268 : vector<24x1xf32> to vector<24x32xf32>
    %277 = arith.subf %260, %276 : vector<24x32xf32>
    %cst_134 = arith.constant 9.99999996E-13 : f32
    %278 = vector.broadcast %cst_134 : f32 to vector<24x1xf32>
    %279 = arith.addf %275, %278 : vector<24x1xf32>
    %280 = math.rsqrt %279 : vector<24x1xf32>
    %281 = vector.broadcast %280 : vector<24x1xf32> to vector<24x32xf32>
    %282 = arith.mulf %277, %281 : vector<24x32xf32>
    %283 = vector.broadcast %262 : vector<1x32xf32> to vector<24x32xf32>
    %284 = arith.mulf %282, %283 : vector<24x32xf32>
    %285 = vector.broadcast %264 : vector<1x32xf32> to vector<24x32xf32>
    %286 = arith.addf %284, %285 : vector<24x32xf32>
    %c1_135 = arith.constant 1 : index
    %c0_136 = arith.constant 0 : index
    %c0_137 = arith.constant 0 : index
    %287 = vector.load %arg12[%c1_135, %c0_136, %c0_137] : memref<2x32x64xf32, #tpu.memory_space<vmem>>, vector<1x32x64xf32>
    %288 = vector.shape_cast %287 : vector<1x32x64xf32> to vector<32x64xf32>
    %cst_138 = arith.constant dense<0.000000e+00> : vector<24x64xf32>
    %289 = tpu.matmul %286, %288, %cst_138 {dimension_numbers = #tpu.dot_dimension_numbers<[1], [0], [0], [1], [0, 0, 1, 1], [], []>} : vector<24x32xf32>, vector<32x64xf32>, vector<24x64xf32> -> vector<24x64xf32>
    %c1_139 = arith.constant 1 : index
    %c0_140 = arith.constant 0 : index
    %c0_141 = arith.constant 0 : index
    %290 = vector.load %arg13[%c1_139, %c0_140, %c0_141] : memref<2x1x64xf32, #tpu.memory_space<vmem>>, vector<1x1x64xf32>
    %291 = vector.shape_cast %290 : vector<1x1x64xf32> to vector<1x64xf32>
    %292 = vector.broadcast %291 : vector<1x64xf32> to vector<24x64xf32>
    %293 = arith.addf %289, %292 : vector<24x64xf32>
    %cst_142 = arith.constant 5.000000e-01 : f32
    %294 = vector.broadcast %cst_142 : f32 to vector<24x64xf32>
    %295 = arith.mulf %294, %293 : vector<24x64xf32>
    %cst_143 = arith.constant 0.707106769 : f32
    %296 = vector.broadcast %cst_143 : f32 to vector<24x64xf32>
    %297 = arith.mulf %293, %296 : vector<24x64xf32>
    %cst_144 = arith.constant 0.000000e+00 : f32
    %298 = vector.broadcast %cst_144 : f32 to vector<24x64xf32>
    %299 = arith.cmpf oge, %297, %298 : vector<24x64xf32>
    %cst_145 = arith.constant 1.000000e+00 : f32
    %cst_146 = arith.constant -1.000000e+00 : f32
    %300 = vector.broadcast %cst_145 : f32 to vector<24x64xf32>
    %301 = vector.broadcast %cst_146 : f32 to vector<24x64xf32>
    %302 = arith.select %299, %300, %301 : vector<24x64xi1>, vector<24x64xf32>
    %303 = math.absf %297 : vector<24x64xf32>
    %cst_147 = arith.constant 0.327591091 : f32
    %304 = vector.broadcast %cst_147 : f32 to vector<24x64xf32>
    %305 = arith.mulf %304, %303 : vector<24x64xf32>
    %cst_148 = arith.constant 1.000000e+00 : f32
    %306 = vector.broadcast %cst_148 : f32 to vector<24x64xf32>
    %307 = arith.addf %306, %305 : vector<24x64xf32>
    %cst_149 = arith.constant 1.000000e+00 : f32
    %308 = vector.broadcast %cst_149 : f32 to vector<24x64xf32>
    %309 = arith.divf %308, %307 : vector<24x64xf32>
    %cst_150 = arith.constant 1.06140542 : f32
    %310 = vector.broadcast %cst_150 : f32 to vector<24x64xf32>
    %311 = arith.mulf %309, %310 : vector<24x64xf32>
    %cst_151 = arith.constant -1.45315206 : f32
    %312 = vector.broadcast %cst_151 : f32 to vector<24x64xf32>
    %313 = arith.addf %312, %311 : vector<24x64xf32>
    %314 = arith.mulf %309, %313 : vector<24x64xf32>
    %cst_152 = arith.constant 1.42141378 : f32
    %315 = vector.broadcast %cst_152 : f32 to vector<24x64xf32>
    %316 = arith.addf %315, %314 : vector<24x64xf32>
    %317 = arith.mulf %309, %316 : vector<24x64xf32>
    %cst_153 = arith.constant -0.284496725 : f32
    %318 = vector.broadcast %cst_153 : f32 to vector<24x64xf32>
    %319 = arith.addf %318, %317 : vector<24x64xf32>
    %320 = arith.mulf %309, %319 : vector<24x64xf32>
    %cst_154 = arith.constant 0.254829586 : f32
    %321 = vector.broadcast %cst_154 : f32 to vector<24x64xf32>
    %322 = arith.addf %321, %320 : vector<24x64xf32>
    %323 = arith.mulf %309, %322 : vector<24x64xf32>
    %cst_155 = arith.constant 0.000000e+00 : f32
    %324 = vector.broadcast %cst_155 : f32 to vector<24x64xf32>
    %325 = arith.subf %324, %303 : vector<24x64xf32>
    %326 = arith.mulf %325, %303 : vector<24x64xf32>
    %327 = math.exp %326 : vector<24x64xf32>
    %328 = arith.mulf %323, %327 : vector<24x64xf32>
    %cst_156 = arith.constant 1.000000e+00 : f32
    %329 = vector.broadcast %cst_156 : f32 to vector<24x64xf32>
    %330 = arith.subf %329, %328 : vector<24x64xf32>
    %331 = arith.mulf %302, %330 : vector<24x64xf32>
    %cst_157 = arith.constant 1.000000e+00 : f32
    %332 = vector.broadcast %cst_157 : f32 to vector<24x64xf32>
    %333 = arith.addf %332, %331 : vector<24x64xf32>
    %334 = arith.mulf %295, %333 : vector<24x64xf32>
    %c1_158 = arith.constant 1 : index
    %c0_159 = arith.constant 0 : index
    %c0_160 = arith.constant 0 : index
    %335 = vector.load %arg14[%c1_158, %c0_159, %c0_160] : memref<2x64x32xf32, #tpu.memory_space<vmem>>, vector<1x64x32xf32>
    %336 = vector.shape_cast %335 : vector<1x64x32xf32> to vector<64x32xf32>
    %cst_161 = arith.constant dense<0.000000e+00> : vector<24x32xf32>
    %337 = tpu.matmul %334, %336, %cst_161 {dimension_numbers = #tpu.dot_dimension_numbers<[1], [0], [0], [1], [0, 0, 1, 1], [], []>} : vector<24x64xf32>, vector<64x32xf32>, vector<24x32xf32> -> vector<24x32xf32>
    %c1_162 = arith.constant 1 : index
    %c0_163 = arith.constant 0 : index
    %c0_164 = arith.constant 0 : index
    %338 = vector.load %arg15[%c1_162, %c0_163, %c0_164] : memref<2x1x32xf32, #tpu.memory_space<vmem>>, vector<1x1x32xf32>
    %339 = vector.shape_cast %338 : vector<1x1x32xf32> to vector<1x32xf32>
    %340 = vector.broadcast %339 : vector<1x32xf32> to vector<24x32xf32>
    %341 = arith.addf %337, %340 : vector<24x32xf32>
    %342 = arith.addf %260, %341 : vector<24x32xf32>
    %c0_165 = arith.constant 0 : index
    %c0_166 = arith.constant 0 : index
    %343 = vector.load %arg16[%c0_165, %c0_166] : memref<1x32xf32, #tpu.memory_space<vmem>>, vector<1x32xf32>
    %c0_167 = arith.constant 0 : index
    %c0_168 = arith.constant 0 : index
    %344 = vector.load %arg17[%c0_167, %c0_168] : memref<1x32xf32, #tpu.memory_space<vmem>>, vector<1x32xf32>
    %cst_169 = arith.constant dense<0.000000e+00> : vector<24xf32>
    %345 = vector.multi_reduction <add>, %342, %cst_169 [1] : vector<24x32xf32> to vector<24xf32>
    %346 = vector.shape_cast %345 : vector<24xf32> to vector<24x1xf32>
    %cst_170 = arith.constant 3.200000e+01 : f32
    %347 = vector.broadcast %cst_170 : f32 to vector<24x1xf32>
    %348 = arith.divf %346, %347 : vector<24x1xf32>
    %349 = vector.broadcast %348 : vector<24x1xf32> to vector<24x32xf32>
    %350 = arith.subf %342, %349 : vector<24x32xf32>
    %351 = arith.mulf %350, %350 : vector<24x32xf32>
    %cst_171 = arith.constant dense<0.000000e+00> : vector<24xf32>
    %352 = vector.multi_reduction <add>, %351, %cst_171 [1] : vector<24x32xf32> to vector<24xf32>
    %353 = vector.shape_cast %352 : vector<24xf32> to vector<24x1xf32>
    %cst_172 = arith.constant 3.200000e+01 : f32
    %354 = vector.broadcast %cst_172 : f32 to vector<24x1xf32>
    %355 = arith.divf %353, %354 : vector<24x1xf32>
    %356 = vector.broadcast %348 : vector<24x1xf32> to vector<24x32xf32>
    %357 = arith.subf %342, %356 : vector<24x32xf32>
    %cst_173 = arith.constant 9.99999996E-13 : f32
    %358 = vector.broadcast %cst_173 : f32 to vector<24x1xf32>
    %359 = arith.addf %355, %358 : vector<24x1xf32>
    %360 = math.rsqrt %359 : vector<24x1xf32>
    %361 = vector.broadcast %360 : vector<24x1xf32> to vector<24x32xf32>
    %362 = arith.mulf %357, %361 : vector<24x32xf32>
    %363 = vector.broadcast %343 : vector<1x32xf32> to vector<24x32xf32>
    %364 = arith.mulf %362, %363 : vector<24x32xf32>
    %365 = vector.broadcast %344 : vector<1x32xf32> to vector<24x32xf32>
    %366 = arith.addf %364, %365 : vector<24x32xf32>
    %367 = vector.extract_strided_slice %366 {offsets = [0, 0], sizes = [1, 32], strides = [1, 1]} : vector<24x32xf32> to vector<1x32xf32>
    %c0_174 = arith.constant 0 : index
    %c0_175 = arith.constant 0 : index
    %368 = vector.load %arg18[%c0_174, %c0_175] : memref<32x2xf32, #tpu.memory_space<vmem>>, vector<32x2xf32>
    %cst_176 = arith.constant dense<0.000000e+00> : vector<1x2xf32>
    %369 = tpu.matmul %367, %368, %cst_176 {dimension_numbers = #tpu.dot_dimension_numbers<[1], [0], [0], [1], [0, 0, 1, 1], [], []>} : vector<1x32xf32>, vector<32x2xf32>, vector<1x2xf32> -> vector<1x2xf32>
    %c0_177 = arith.constant 0 : index
    %c0_178 = arith.constant 0 : index
    %370 = vector.load %arg19[%c0_177, %c0_178] : memref<1x2xf32, #tpu.memory_space<vmem>>, vector<1x2xf32>
    %371 = arith.addf %369, %370 : vector<1x2xf32>
    %cst_179 = arith.constant dense<0xFF800000> : vector<1xf32>
    %372 = vector.multi_reduction <maximumf>, %371, %cst_179 [1] : vector<1x2xf32> to vector<1xf32>
    %373 = vector.shape_cast %372 : vector<1xf32> to vector<1x1xf32>
    %374 = vector.broadcast %373 : vector<1x1xf32> to vector<1x2xf32>
    %375 = arith.subf %371, %374 : vector<1x2xf32>
    %376 = math.exp %375 : vector<1x2xf32>
    %cst_180 = arith.constant dense<0.000000e+00> : vector<1xf32>
    %377 = vector.multi_reduction <add>, %376, %cst_180 [1] : vector<1x2xf32> to vector<1xf32>
    %378 = vector.shape_cast %377 : vector<1xf32> to vector<1x1xf32>
    %379 = vector.broadcast %378 : vector<1x1xf32> to vector<1x2xf32>
    %380 = arith.divf %376, %379 : vector<1x2xf32>
    %c0_181 = arith.constant 0 : index
    %c0_182 = arith.constant 0 : index
    %c0_183 = arith.constant 0 : index
    %381 = vector.load %arg20[%c0_181, %c0_182, %c0_183] : memref<1x1x2xf32, #tpu.memory_space<vmem>>, vector<1x1x2xf32>
    %382 = vector.shape_cast %381 : vector<1x1x2xf32> to vector<1x2xf32>
    %383 = vector.shape_cast %380 : vector<1x2xf32> to vector<1x1x2xf32>
    tpu.vector_store %arg20[%c0_181, %c0_182, %c0_183], %383 {strides = array<i32>} : memref<1x1x2xf32, #tpu.memory_space<vmem>>, vector<1x1x2xf32>,
    return
  }
  func.func @transform_0(%arg0: i32) -> (i32, i32, i32) {
    %c0_i32 = arith.constant 0 : i32
    %c0_i32_0 = arith.constant 0 : i32
    %c0_i32_1 = arith.constant 0 : i32
    return %arg0, %c0_i32, %c0_i32_0 : i32, i32, i32
  }
  func.func @transform_1(%arg0: i32) -> (i32, i32) {
    %c0_i32 = arith.constant 0 : i32
    %c0_i32_0 = arith.constant 0 : i32
    %c0_i32_1 = arith.constant 0 : i32
    return %c0_i32, %c0_i32_0 : i32, i32
  }
  func.func @transform_2(%arg0: i32) -> (i32, i32) {
    %c0_i32 = arith.constant 0 : i32
    %c0_i32_0 = arith.constant 0 : i32
    %c0_i32_1 = arith.constant 0 : i32
    return %c0_i32, %c0_i32_0 : i32, i32
  }
  func.func @transform_3(%arg0: i32) -> (i32, i32, i32) {
    %c0_i32 = arith.constant 0 : i32
    %c0_i32_0 = arith.constant 0 : i32
    %c0_i32_1 = arith.constant 0 : i32
    %c0_i32_2 = arith.constant 0 : i32
    return %c0_i32, %c0_i32_0, %c0_i32_1 : i32, i32, i32
  }
  func.func @transform_4(%arg0: i32) -> (i32, i32, i32) {
    %c0_i32 = arith.constant 0 : i32
    %c0_i32_0 = arith.constant 0 : i32
    %c0_i32_1 = arith.constant 0 : i32
    %c0_i32_2 = arith.constant 0 : i32
    return %c0_i32, %c0_i32_0, %c0_i32_1 : i32, i32, i32
  }
  func.func @transform_5(%arg0: i32) -> (i32, i32, i32) {
    %c0_i32 = arith.constant 0 : i32
    %c0_i32_0 = arith.constant 0 : i32
    %c0_i32_1 = arith.constant 0 : i32
    %c0_i32_2 = arith.constant 0 : i32
    return %c0_i32, %c0_i32_0, %c0_i32_1 : i32, i32, i32
  }
  func.func @transform_6(%arg0: i32) -> (i32, i32, i32) {
    %c0_i32 = arith.constant 0 : i32
    %c0_i32_0 = arith.constant 0 : i32
    %c0_i32_1 = arith.constant 0 : i32
    %c0_i32_2 = arith.constant 0 : i32
    return %c0_i32, %c0_i32_0, %c0_i32_1 : i32, i32, i32
  }
  func.func @transform_7(%arg0: i32) -> (i32, i32, i32) {
    %c0_i32 = arith.constant 0 : i32
    %c0_i32_0 = arith.constant 0 : i32
    %c0_i32_1 = arith.constant 0 : i32
    %c0_i32_2 = arith.constant 0 : i32
    return %c0_i32, %c0_i32_0, %c0_i32_1 : i32, i32, i32
  }
  func.func @transform_8(%arg0: i32) -> (i32, i32, i32) {
    %c0_i32 = arith.constant 0 : i32
    %c0_i32_0 = arith.constant 0 : i32
    %c0_i32_1 = arith.constant 0 : i32
    %c0_i32_2 = arith.constant 0 : i32
    return %c0_i32, %c0_i32_0, %c0_i32_1 : i32, i32, i32
  }
  func.func @transform_9(%arg0: i32) -> (i32, i32, i32) {
    %c0_i32 = arith.constant 0 : i32
    %c0_i32_0 = arith.constant 0 : i32
    %c0_i32_1 = arith.constant 0 : i32
    %c0_i32_2 = arith.constant 0 : i32
    return %c0_i32, %c0_i32_0, %c0_i32_1 : i32, i32, i32
  }
  func.func @transform_10(%arg0: i32) -> (i32, i32, i32) {
    %c0_i32 = arith.constant 0 : i32
    %c0_i32_0 = arith.constant 0 : i32
    %c0_i32_1 = arith.constant 0 : i32
    %c0_i32_2 = arith.constant 0 : i32
    return %c0_i32, %c0_i32_0, %c0_i32_1 : i32, i32, i32
  }
  func.func @transform_11(%arg0: i32) -> (i32, i32, i32) {
    %c0_i32 = arith.constant 0 : i32
    %c0_i32_0 = arith.constant 0 : i32
    %c0_i32_1 = arith.constant 0 : i32
    %c0_i32_2 = arith.constant 0 : i32
    return %c0_i32, %c0_i32_0, %c0_i32_1 : i32, i32, i32
  }
  func.func @transform_12(%arg0: i32) -> (i32, i32, i32) {
    %c0_i32 = arith.constant 0 : i32
    %c0_i32_0 = arith.constant 0 : i32
    %c0_i32_1 = arith.constant 0 : i32
    %c0_i32_2 = arith.constant 0 : i32
    return %c0_i32, %c0_i32_0, %c0_i32_1 : i32, i32, i32
  }
  func.func @transform_13(%arg0: i32) -> (i32, i32, i32) {
    %c0_i32 = arith.constant 0 : i32
    %c0_i32_0 = arith.constant 0 : i32
    %c0_i32_1 = arith.constant 0 : i32
    %c0_i32_2 = arith.constant 0 : i32
    return %c0_i32, %c0_i32_0, %c0_i32_1 : i32, i32, i32
  }
  func.func @transform_14(%arg0: i32) -> (i32, i32, i32) {
    %c0_i32 = arith.constant 0 : i32
    %c0_i32_0 = arith.constant 0 : i32
    %c0_i32_1 = arith.constant 0 : i32
    %c0_i32_2 = arith.constant 0 : i32
    return %c0_i32, %c0_i32_0, %c0_i32_1 : i32, i32, i32
  }
  func.func @transform_15(%arg0: i32) -> (i32, i32) {
    %c0_i32 = arith.constant 0 : i32
    %c0_i32_0 = arith.constant 0 : i32
    %c0_i32_1 = arith.constant 0 : i32
    return %c0_i32, %c0_i32_0 : i32, i32
  }
  func.func @transform_16(%arg0: i32) -> (i32, i32) {
    %c0_i32 = arith.constant 0 : i32
    %c0_i32_0 = arith.constant 0 : i32
    %c0_i32_1 = arith.constant 0 : i32
    return %c0_i32, %c0_i32_0 : i32, i32
  }
  func.func @transform_17(%arg0: i32) -> (i32, i32) {
    %c0_i32 = arith.constant 0 : i32
    %c0_i32_0 = arith.constant 0 : i32
    %c0_i32_1 = arith.constant 0 : i32
    return %c0_i32, %c0_i32_0 : i32, i32
  }
  func.func @transform_18(%arg0: i32) -> (i32, i32) {
    %c0_i32 = arith.constant 0 : i32
    %c0_i32_0 = arith.constant 0 : i32
    %c0_i32_1 = arith.constant 0 : i32
    return %c0_i32, %c0_i32_0 : i32, i32
  }
  func.func @transform_19(%arg0: i32) -> (i32, i32, i32) {
    %c0_i32 = arith.constant 0 : i32
    %c0_i32_0 = arith.constant 0 : i32
    %c0_i32_1 = arith.constant 0 : i32
    return %arg0, %c0_i32, %c0_i32_0 : i32, i32, i32
  }
}

</mosaic_0001>

<llo_original>
// kernel: model_forward.1
$region0: #{model_forward.1}
  #allocation0 [shape = 'u32[]', space=smem, size = 0x4, offset = 0x4, fixed_abs, tag = 'smem constant byte address 0x4 - core index']
  #allocation1 [shape = 'u32[144,128]{1,0:T(1,128)}', space=vmem, size = 0x12000, scoped, tag = 'internal scratch']
  %s0 = inlined_call_operand.vmem [shape: f32[2,24,48], index: 0, kind: input, shape index: {}]
  %s1 = inlined_call_operand.vmem [shape: f32[48,32], index: 1, kind: input, shape index: {}]
  %s2 = inlined_call_operand.vmem [shape: f32[24,32], index: 2, kind: input, shape index: {}]
  %s3 = inlined_call_operand.vmem [shape: f32[2,1,32], index: 3, kind: input, shape index: {}]
  %s4 = inlined_call_operand.vmem [shape: f32[2,1,32], index: 4, kind: input, shape index: {}]
  %s5 = inlined_call_operand.vmem [shape: f32[2,32,96], index: 5, kind: input, shape index: {}]
  %s6 = inlined_call_operand.vmem [shape: f32[2,1,96], index: 6, kind: input, shape index: {}]
  %s7 = inlined_call_operand.vmem [shape: f32[2,32,32], index: 7, kind: input, shape index: {}]
  %s8 = inlined_call_operand.vmem [shape: f32[2,1,32], index: 8, kind: input, shape index: {}]
  %s9 = inlined_call_operand.vmem [shape: f32[2,1,32], index: 9, kind: input, shape index: {}]
  %s10 = inlined_call_operand.vmem [shape: f32[2,1,32], index: 10, kind: input, shape index: {}]
  %s11 = inlined_call_operand.vmem [shape: f32[2,32,64], index: 11, kind: input, shape index: {}]
  %s12 = inlined_call_operand.vmem [shape: f32[2,1,64], index: 12, kind: input, shape index: {}]
  %s13 = inlined_call_operand.vmem [shape: f32[2,64,32], index: 13, kind: input, shape index: {}]
  %s14 = inlined_call_operand.vmem [shape: f32[2,1,32], index: 14, kind: input, shape index: {}]
  %s15 = inlined_call_operand.vmem [shape: f32[1,32], index: 15, kind: input, shape index: {}]
  %s16 = inlined_call_operand.vmem [shape: f32[1,32], index: 16, kind: input, shape index: {}]
  %s17 = inlined_call_operand.vmem [shape: f32[32,2], index: 17, kind: input, shape index: {}]
  %s18 = inlined_call_operand.vmem [shape: f32[1,2], index: 18, kind: input, shape index: {}]
  %s19 = inlined_call_operand.hbm [shape: f32[2,1,2], index: 19, kind: output, shape index: {}]
  %s20 = sld [smem:[#allocation0]]
  $region109: #{model_forward.1} parent=0
    _
  %s22 = ssub.s32 1, %s20
  %s23 = scalar_select 0, %s22, %s20
  $region1: #{model_forward.1} parent=0
    #allocation2 [shape = 'u8[1024]{0}', space=vmem, size = 0x400, scoped, tag = 'output window, operand 0']
    #allocation3 [shape = 's32[2]{0}', space=sflag, size = 0x8, scoped, tag = 'scoped memory for model_forward.1']
    %24 = vsyncpa [#allocation3], 0
    %s25 = scalar_lea.sflag [#allocation3], 1
    %26 = vsyncpa %s25, 0
    loop: start=0, step=1, limit=4
    $region2: #{model_forward.1} parent=1 // loop_pre_header
      _
    $region3: #{model_forward.1} parent=1 // loop_header
      %s28 = sphi 0, %s32
      %p29 = scmp.ge.s32.totalorder %s28, 4
      %s38 = sphi 0, %s40
      %s41 = sphi 0, %s38
      %s42 = sphi 0, %s41
      %s58 = sphi 0, %s42
      %s62 = sphi 0, %s62
      %s64 = sphi 0, %s62
      %s65 = sphi 0, %s64
      %s79 = sphi 0, %s65
      %s83 = sphi 0, %s83
      %s85 = sphi 0, %s83
      %s86 = sphi 0, %s85
      %s100 = sphi 0, %s86
      %s104 = sphi 0, %s104
      %s106 = sphi 0, %s104
      %s107 = sphi 0, %s106
      %s121 = sphi 0, %s107
      %s125 = sphi 0, %s125
      %s127 = sphi 0, %s125
      %s128 = sphi 0, %s127
      %s142 = sphi 0, %s128
      %s146 = sphi 0, %s146
      %s148 = sphi 0, %s146
      %s149 = sphi 0, %s148
      %s163 = sphi 0, %s149
      %s167 = sphi 0, %s167
      %s169 = sphi 0, %s167
      %s170 = sphi 0, %s169
      %s184 = sphi 0, %s170
      %s188 = sphi 0, %s188
      %s190 = sphi 0, %s188
      %s191 = sphi 0, %s190
      %s205 = sphi 0, %s191
      %s209 = sphi 0, %s209
      %s211 = sphi 0, %s209
      %s212 = sphi 0, %s211
      %s226 = sphi 0, %s212
      %s230 = sphi 0, %s230
      %s232 = sphi 0, %s230
      %s233 = sphi 0, %s232
      %s247 = sphi 0, %s233
      %s251 = sphi 0, %s251
      %s253 = sphi 0, %s251
      %s254 = sphi 0, %s253
      %s268 = sphi 0, %s254
      %s272 = sphi 0, %s272
      %s274 = sphi 0, %s272
      %s275 = sphi 0, %s274
      %s289 = sphi 0, %s275
      %s293 = sphi 0, %s293
      %s295 = sphi 0, %s293
      %s296 = sphi 0, %s295
      %s310 = sphi 0, %s296
      %s314 = sphi 0, %s314
      %s316 = sphi 0, %s314
      %s317 = sphi 0, %s316
      %s331 = sphi 0, %s317
      %s335 = sphi 0, %s335
      %s337 = sphi 0, %s335
      %s338 = sphi 0, %s337
      %s352 = sphi 0, %s338
      %s356 = sphi 0, %s356
      %s358 = sphi 0, %s356
      %s359 = sphi 0, %s358
      %s373 = sphi 0, %s359
      %s377 = sphi 0, %s377
      %s379 = sphi 0, %s377
      %s380 = sphi 0, %s379
      %s394 = sphi 0, %s380
      %s398 = sphi 0, %s398
      %s400 = sphi 0, %s398
      %s401 = sphi 0, %s400
      %s415 = sphi 0, %s401
      %s419 = sphi 0, %s419
      %s421 = sphi 0, %s419
      %s422 = sphi 0, %s421
      %s436 = sphi 0, %s422
      %s442 = sphi 0, %s444
      %s445 = sphi 0, %s442
      %s446 = sphi 0, %s445
      %s462 = sphi 0, %s446
    $region4: #{model_forward.1} parent=1 // loop_header_branch
      %31 = sbr.rel (%p29) target = $region8
    $region5: #{model_forward.1} parent=1 // loop_body
      %s33 = ssub.s32 %s28, 1
      %s34 = ssub.s32 %s28, 2
      %s35 = sadd.s32 %s28, 1
      %s36 = ssub.s32 %s28, %s35
      %p37 = scmp.eq.s32.totalorder %s36, 0
      %s39 = sadd.s32 %s38, 1
      %s40 = scalar_select %p37, %s38, %s39
      %p43 = pneg %p37
      %p44 = scmp.eq.s32.totalorder %s28, 1
      %p45 = por %p43, %p44
      %p46 = scmp.ne.s32.totalorder %s38, %s41
      %p47 = scmp.eq.s32.totalorder %s28, 0
      %p48 = por %p46, %p47
      %p49 = scmp.ne.s32.totalorder %s38, %s41
      %p50 = scmp.eq.s32.totalorder %s33, 1
      %p51 = por %p49, %p50
      %p52 = scmp.ne.s32.totalorder %s41, %s42
      %p53 = scmp.eq.s32.totalorder %s33, 0
      %p54 = por %p52, %p53
      %p55 = scmp.ne.s32.totalorder %s41, %s42
      %p56 = scmp.eq.s32.totalorder %s34, 1
      %p57 = por %p55, %p56
      %p59 = scmp.ne.s32.totalorder %s42, %s58
      %p60 = scmp.eq.s32.totalorder %s34, 0
      %p61 = por %p59, %p60
      %s63 = sadd.s32 %s62, 1
      %p66 = scmp.eq.s32.totalorder %s28, 1
      %p67 = scmp.ne.s32.totalorder %s62, %s64
      %p68 = scmp.eq.s32.totalorder %s28, 0
      %p69 = por %p67, %p68
      %p70 = scmp.ne.s32.totalorder %s62, %s64
      %p71 = scmp.eq.s32.totalorder %s33, 1
      %p72 = por %p70, %p71
      %p73 = scmp.ne.s32.totalorder %s64, %s65
      %p74 = scmp.eq.s32.totalorder %s33, 0
      %p75 = por %p73, %p74
      %p76 = scmp.ne.s32.totalorder %s64, %s65
      %p77 = scmp.eq.s32.totalorder %s34, 1
      %p78 = por %p76, %p77
      %p80 = scmp.ne.s32.totalorder %s65, %s79
      %p81 = scmp.eq.s32.totalorder %s34, 0
      %p82 = por %p80, %p81
      %s84 = sadd.s32 %s83, 1
      %p87 = scmp.eq.s32.totalorder %s28, 1
      %p88 = scmp.ne.s32.totalorder %s83, %s85
      %p89 = scmp.eq.s32.totalorder %s28, 0
      %p90 = por %p88, %p89
      %p91 = scmp.ne.s32.totalorder %s83, %s85
      %p92 = scmp.eq.s32.totalorder %s33, 1
      %p93 = por %p91, %p92
      %p94 = scmp.ne.s32.totalorder %s85, %s86
      %p95 = scmp.eq.s32.totalorder %s33, 0
      %p96 = por %p94, %p95
      %p97 = scmp.ne.s32.totalorder %s85, %s86
      %p98 = scmp.eq.s32.totalorder %s34, 1
      %p99 = por %p97, %p98
      %p101 = scmp.ne.s32.totalorder %s86, %s100
      %p102 = scmp.eq.s32.totalorder %s34, 0
      %p103 = por %p101, %p102
      %s105 = sadd.s32 %s104, 1
      %p108 = scmp.eq.s32.totalorder %s28, 1
      %p109 = scmp.ne.s32.totalorder %s104, %s106
      %p110 = scmp.eq.s32.totalorder %s28, 0
      %p111 = por %p109, %p110
      %p112 = scmp.ne.s32.totalorder %s104, %s106
      %p113 = scmp.eq.s32.totalorder %s33, 1
      %p114 = por %p112, %p113
      %p115 = scmp.ne.s32.totalorder %s106, %s107
      %p116 = scmp.eq.s32.totalorder %s33, 0
      %p117 = por %p115, %p116
      %p118 = scmp.ne.s32.totalorder %s106, %s107
      %p119 = scmp.eq.s32.totalorder %s34, 1
      %p120 = por %p118, %p119
      %p122 = scmp.ne.s32.totalorder %s107, %s121
      %p123 = scmp.eq.s32.totalorder %s34, 0
      %p124 = por %p122, %p123
      %s126 = sadd.s32 %s125, 1
      %p129 = scmp.eq.s32.totalorder %s28, 1
      %p130 = scmp.ne.s32.totalorder %s125, %s127
      %p131 = scmp.eq.s32.totalorder %s28, 0
      %p132 = por %p130, %p131
      %p133 = scmp.ne.s32.totalorder %s125, %s127
      %p134 = scmp.eq.s32.totalorder %s33, 1
      %p135 = por %p133, %p134
      %p136 = scmp.ne.s32.totalorder %s127, %s128
      %p137 = scmp.eq.s32.totalorder %s33, 0
      %p138 = por %p136, %p137
      %p139 = scmp.ne.s32.totalorder %s127, %s128
      %p140 = scmp.eq.s32.totalorder %s34, 1
      %p141 = por %p139, %p140
      %p143 = scmp.ne.s32.totalorder %s128, %s142
      %p144 = scmp.eq.s32.totalorder %s34, 0
      %p145 = por %p143, %p144
      %s147 = sadd.s32 %s146, 1
      %p150 = scmp.eq.s32.totalorder %s28, 1
      %p151 = scmp.ne.s32.totalorder %s146, %s148
      %p152 = scmp.eq.s32.totalorder %s28, 0
      %p153 = por %p151, %p152
      %p154 = scmp.ne.s32.totalorder %s146, %s148
      %p155 = scmp.eq.s32.totalorder %s33, 1
      %p156 = por %p154, %p155
      %p157 = scmp.ne.s32.totalorder %s148, %s149
      %p158 = scmp.eq.s32.totalorder %s33, 0
      %p159 = por %p157, %p158
      %p160 = scmp.ne.s32.totalorder %s148, %s149
      %p161 = scmp.eq.s32.totalorder %s34, 1
      %p162 = por %p160, %p161
      %p164 = scmp.ne.s32.totalorder %s149, %s163
      %p165 = scmp.eq.s32.totalorder %s34, 0
      %p166 = por %p164, %p165
      %s168 = sadd.s32 %s167, 1
      %p171 = scmp.eq.s32.totalorder %s28, 1
      %p172 = scmp.ne.s32.totalorder %s167, %s169
      %p173 = scmp.eq.s32.totalorder %s28, 0
      %p174 = por %p172, %p173
      %p175 = scmp.ne.s32.totalorder %s167, %s169
      %p176 = scmp.eq.s32.totalorder %s33, 1
      %p177 = por %p175, %p176
      %p178 = scmp.ne.s32.totalorder %s169, %s170
      %p179 = scmp.eq.s32.totalorder %s33, 0
      %p180 = por %p178, %p179
      %p181 = scmp.ne.s32.totalorder %s169, %s170
      %p182 = scmp.eq.s32.totalorder %s34, 1
      %p183 = por %p181, %p182
      %p185 = scmp.ne.s32.totalorder %s170, %s184
      %p186 = scmp.eq.s32.totalorder %s34, 0
      %p187 = por %p185, %p186
      %s189 = sadd.s32 %s188, 1
      %p192 = scmp.eq.s32.totalorder %s28, 1
      %p193 = scmp.ne.s32.totalorder %s188, %s190
      %p194 = scmp.eq.s32.totalorder %s28, 0
      %p195 = por %p193, %p194
      %p196 = scmp.ne.s32.totalorder %s188, %s190
      %p197 = scmp.eq.s32.totalorder %s33, 1
      %p198 = por %p196, %p197
      %p199 = scmp.ne.s32.totalorder %s190, %s191
      %p200 = scmp.eq.s32.totalorder %s33, 0
      %p201 = por %p199, %p200
      %p202 = scmp.ne.s32.totalorder %s190, %s191
      %p203 = scmp.eq.s32.totalorder %s34, 1
      %p204 = por %p202, %p203
      %p206 = scmp.ne.s32.totalorder %s191, %s205
      %p207 = scmp.eq.s32.totalorder %s34, 0
      %p208 = por %p206, %p207
      %s210 = sadd.s32 %s209, 1
      %p213 = scmp.eq.s32.totalorder %s28, 1
      %p214 = scmp.ne.s32.totalorder %s209, %s211
      %p215 = scmp.eq.s32.totalorder %s28, 0
      %p216 = por %p214, %p215
      %p217 = scmp.ne.s32.totalorder %s209, %s211
      %p218 = scmp.eq.s32.totalorder %s33, 1
      %p219 = por %p217, %p218
      %p220 = scmp.ne.s32.totalorder %s211, %s212
      %p221 = scmp.eq.s32.totalorder %s33, 0
      %p222 = por %p220, %p221
      %p223 = scmp.ne.s32.totalorder %s211, %s212
      %p224 = scmp.eq.s32.totalorder %s34, 1
      %p225 = por %p223, %p224
      %p227 = scmp.ne.s32.totalorder %s212, %s226
      %p228 = scmp.eq.s32.totalorder %s34, 0
      %p229 = por %p227, %p228
      %s231 = sadd.s32 %s230, 1
      %p234 = scmp.eq.s32.totalorder %s28, 1
      %p235 = scmp.ne.s32.totalorder %s230, %s232
      %p236 = scmp.eq.s32.totalorder %s28, 0
      %p237 = por %p235, %p236
      %p238 = scmp.ne.s32.totalorder %s230, %s232
      %p239 = scmp.eq.s32.totalorder %s33, 1
      %p240 = por %p238, %p239
      %p241 = scmp.ne.s32.totalorder %s232, %s233
      %p242 = scmp.eq.s32.totalorder %s33, 0
      %p243 = por %p241, %p242
      %p244 = scmp.ne.s32.totalorder %s232, %s233
      %p245 = scmp.eq.s32.totalorder %s34, 1
      %p246 = por %p244, %p245
      %p248 = scmp.ne.s32.totalorder %s233, %s247
      %p249 = scmp.eq.s32.totalorder %s34, 0
      %p250 = por %p248, %p249
      %s252 = sadd.s32 %s251, 1
      %p255 = scmp.eq.s32.totalorder %s28, 1
      %p256 = scmp.ne.s32.totalorder %s251, %s253
      %p257 = scmp.eq.s32.totalorder %s28, 0
      %p258 = por %p256, %p257
      %p259 = scmp.ne.s32.totalorder %s251, %s253
      %p260 = scmp.eq.s32.totalorder %s33, 1
      %p261 = por %p259, %p260
      %p262 = scmp.ne.s32.totalorder %s253, %s254
      %p263 = scmp.eq.s32.totalorder %s33, 0
      %p264 = por %p262, %p263
      %p265 = scmp.ne.s32.totalorder %s253, %s254
      %p266 = scmp.eq.s32.totalorder %s34, 1
      %p267 = por %p265, %p266
      %p269 = scmp.ne.s32.totalorder %s254, %s268
      %p270 = scmp.eq.s32.totalorder %s34, 0
      %p271 = por %p269, %p270
      %s273 = sadd.s32 %s272, 1
      %p276 = scmp.eq.s32.totalorder %s28, 1
      %p277 = scmp.ne.s32.totalorder %s272, %s274
      %p278 = scmp.eq.s32.totalorder %s28, 0
      %p279 = por %p277, %p278
      %p280 = scmp.ne.s32.totalorder %s272, %s274
      %p281 = scmp.eq.s32.totalorder %s33, 1
      %p282 = por %p280, %p281
      %p283 = scmp.ne.s32.totalorder %s274, %s275
      %p284 = scmp.eq.s32.totalorder %s33, 0
      %p285 = por %p283, %p284
      %p286 = scmp.ne.s32.totalorder %s274, %s275
      %p287 = scmp.eq.s32.totalorder %s34, 1
      %p288 = por %p286, %p287
      %p290 = scmp.ne.s32.totalorder %s275, %s289
      %p291 = scmp.eq.s32.totalorder %s34, 0
      %p292 = por %p290, %p291
      %s294 = sadd.s32 %s293, 1
      %p297 = scmp.eq.s32.totalorder %s28, 1
      %p298 = scmp.ne.s32.totalorder %s293, %s295
      %p299 = scmp.eq.s32.totalorder %s28, 0
      %p300 = por %p298, %p299
      %p301 = scmp.ne.s32.totalorder %s293, %s295
      %p302 = scmp.eq.s32.totalorder %s33, 1
      %p303 = por %p301, %p302
      %p304 = scmp.ne.s32.totalorder %s295, %s296
      %p305 = scmp.eq.s32.totalorder %s33, 0
      %p306 = por %p304, %p305
      %p307 = scmp.ne.s32.totalorder %s295, %s296
      %p308 = scmp.eq.s32.totalorder %s34, 1
      %p309 = por %p307, %p308
      %p311 = scmp.ne.s32.totalorder %s296, %s310
      %p312 = scmp.eq.s32.totalorder %s34, 0
      %p313 = por %p311, %p312
      %s315 = sadd.s32 %s314, 1
      %p318 = scmp.eq.s32.totalorder %s28, 1
      %p319 = scmp.ne.s32.totalorder %s314, %s316
      %p320 = scmp.eq.s32.totalorder %s28, 0
      %p321 = por %p319, %p320
      %p322 = scmp.ne.s32.totalorder %s314, %s316
      %p323 = scmp.eq.s32.totalorder %s33, 1
      %p324 = por %p322, %p323
      %p325 = scmp.ne.s32.totalorder %s316, %s317
      %p326 = scmp.eq.s32.totalorder %s33, 0
      %p327 = por %p325, %p326
      %p328 = scmp.ne.s32.totalorder %s316, %s317
      %p329 = scmp.eq.s32.totalorder %s34, 1
      %p330 = por %p328, %p329
      %p332 = scmp.ne.s32.totalorder %s317, %s331
      %p333 = scmp.eq.s32.totalorder %s34, 0
      %p334 = por %p332, %p333
      %s336 = sadd.s32 %s335, 1
      %p339 = scmp.eq.s32.totalorder %s28, 1
      %p340 = scmp.ne.s32.totalorder %s335, %s337
      %p341 = scmp.eq.s32.totalorder %s28, 0
      %p342 = por %p340, %p341
      %p343 = scmp.ne.s32.totalorder %s335, %s337
      %p344 = scmp.eq.s32.totalorder %s33, 1
      %p345 = por %p343, %p344
      %p346 = scmp.ne.s32.totalorder %s337, %s338
      %p347 = scmp.eq.s32.totalorder %s33, 0
      %p348 = por %p346, %p347
      %p349 = scmp.ne.s32.totalorder %s337, %s338
      %p350 = scmp.eq.s32.totalorder %s34, 1
      %p351 = por %p349, %p350
      %p353 = scmp.ne.s32.totalorder %s338, %s352
      %p354 = scmp.eq.s32.totalorder %s34, 0
      %p355 = por %p353, %p354
      %s357 = sadd.s32 %s356, 1
      %p360 = scmp.eq.s32.totalorder %s28, 1
      %p361 = scmp.ne.s32.totalorder %s356, %s358
      %p362 = scmp.eq.s32.totalorder %s28, 0
      %p363 = por %p361, %p362
      %p364 = scmp.ne.s32.totalorder %s356, %s358
      %p365 = scmp.eq.s32.totalorder %s33, 1
      %p366 = por %p364, %p365
      %p367 = scmp.ne.s32.totalorder %s358, %s359
      %p368 = scmp.eq.s32.totalorder %s33, 0
      %p369 = por %p367, %p368
      %p370 = scmp.ne.s32.totalorder %s358, %s359
      %p371 = scmp.eq.s32.totalorder %s34, 1
      %p372 = por %p370, %p371
      %p374 = scmp.ne.s32.totalorder %s359, %s373
      %p375 = scmp.eq.s32.totalorder %s34, 0
      %p376 = por %p374, %p375
      %s378 = sadd.s32 %s377, 1
      %p381 = scmp.eq.s32.totalorder %s28, 1
      %p382 = scmp.ne.s32.totalorder %s377, %s379
      %p383 = scmp.eq.s32.totalorder %s28, 0
      %p384 = por %p382, %p383
      %p385 = scmp.ne.s32.totalorder %s377, %s379
      %p386 = scmp.eq.s32.totalorder %s33, 1
      %p387 = por %p385, %p386
      %p388 = scmp.ne.s32.totalorder %s379, %s380
      %p389 = scmp.eq.s32.totalorder %s33, 0
      %p390 = por %p388, %p389
      %p391 = scmp.ne.s32.totalorder %s379, %s380
      %p392 = scmp.eq.s32.totalorder %s34, 1
      %p393 = por %p391, %p392
      %p395 = scmp.ne.s32.totalorder %s380, %s394
      %p396 = scmp.eq.s32.totalorder %s34, 0
      %p397 = por %p395, %p396
      %s399 = sadd.s32 %s398, 1
      %p402 = scmp.eq.s32.totalorder %s28, 1
      %p403 = scmp.ne.s32.totalorder %s398, %s400
      %p404 = scmp.eq.s32.totalorder %s28, 0
      %p405 = por %p403, %p404
      %p406 = scmp.ne.s32.totalorder %s398, %s400
      %p407 = scmp.eq.s32.totalorder %s33, 1
      %p408 = por %p406, %p407
      %p409 = scmp.ne.s32.totalorder %s400, %s401
      %p410 = scmp.eq.s32.totalorder %s33, 0
      %p411 = por %p409, %p410
      %p412 = scmp.ne.s32.totalorder %s400, %s401
      %p413 = scmp.eq.s32.totalorder %s34, 1
      %p414 = por %p412, %p413
      %p416 = scmp.ne.s32.totalorder %s401, %s415
      %p417 = scmp.eq.s32.totalorder %s34, 0
      %p418 = por %p416, %p417
      %s420 = sadd.s32 %s419, 1
      %p423 = scmp.eq.s32.totalorder %s28, 1
      %p424 = scmp.ne.s32.totalorder %s419, %s421
      %p425 = scmp.eq.s32.totalorder %s28, 0
      %p426 = por %p424, %p425
      %p427 = scmp.ne.s32.totalorder %s419, %s421
      %p428 = scmp.eq.s32.totalorder %s33, 1
      %p429 = por %p427, %p428
      %p430 = scmp.ne.s32.totalorder %s421, %s422
      %p431 = scmp.eq.s32.totalorder %s33, 0
      %p432 = por %p430, %p431
      %p433 = scmp.ne.s32.totalorder %s421, %s422
      %p434 = scmp.eq.s32.totalorder %s34, 1
      %p435 = por %p433, %p434
      %p437 = scmp.ne.s32.totalorder %s422, %s436
      %p438 = scmp.eq.s32.totalorder %s34, 0
      %p439 = por %p437, %p438
      %s440 = ssub.s32 %s28, %s35
      %p441 = scmp.eq.s32.totalorder %s440, 0
      %s443 = sadd.s32 %s442, 1
      %s444 = scalar_select %p441, %s442, %s443
      %p447 = pneg %p441
      %p448 = scmp.eq.s32.totalorder %s28, 1
      %p449 = por %p447, %p448
      %p450 = scmp.ne.s32.totalorder %s442, %s445
      %p451 = scmp.eq.s32.totalorder %s28, 0
      %p452 = por %p450, %p451
      %p453 = scmp.ne.s32.totalorder %s442, %s445
      %p454 = scmp.eq.s32.totalorder %s33, 1
      %p455 = por %p453, %p454
      %p456 = scmp.ne.s32.totalorder %s445, %s446
      %p457 = scmp.eq.s32.totalorder %s33, 0
      %p458 = por %p456, %p457
      %p459 = scmp.ne.s32.totalorder %s445, %s446
      %p460 = scmp.eq.s32.totalorder %s34, 1
      %p461 = por %p459, %p460
      %p463 = scmp.ne.s32.totalorder %s446, %s462
      %p464 = scmp.eq.s32.totalorder %s34, 0
      %p465 = por %p463, %p464
      %p466 = scmp.le.s32.totalorder 1, %s28
      %p467 = scmp.lt.s32.totalorder %s28, 3
      %p468 = pnand %p466, %p467
      %p469 = pneg %p468
      // Predicated region
      $region9: #{model_forward.1} parent=5 // pred_check
        _
      $region10: #{model_forward.1} parent=5 // pred_check_branch
        %471 = sbr.rel (%p468) target = $region12
      $region11: #{model_forward.1} parent=5 // pred_region
        %s472 = ssub.s32 %s28, 1
        // Predicated region
        $region13: #{model_forward.1} parent=11 // pred_check
          %p473 = pneg %p75
        $region14: #{model_forward.1} parent=11 // pred_check_branch
          %475 = sbr.rel (%p473) target = $region16
        $region15: #{model_forward.1} parent=11 // pred_region
          _
        $region16: #{model_forward.1} parent=11 // pred_fallthru
          _
        // Predicated region
        $region17: #{model_forward.1} parent=11 // pred_check
          %p476 = pneg %p96
        $region18: #{model_forward.1} parent=11 // pred_check_branch
          %478 = sbr.rel (%p476) target = $region20
        $region19: #{model_forward.1} parent=11 // pred_region
          _
        $region20: #{model_forward.1} parent=11 // pred_fallthru
          _
        // Predicated region
        $region21: #{model_forward.1} parent=11 // pred_check
          %p479 = pneg %p117
        $region22: #{model_forward.1} parent=11 // pred_check_branch
          %481 = sbr.rel (%p479) target = $region24
        $region23: #{model_forward.1} parent=11 // pred_region
          _
        $region24: #{model_forward.1} parent=11 // pred_fallthru
          _
        // Predicated region
        $region25: #{model_forward.1} parent=11 // pred_check
          %p482 = pneg %p138
        $region26: #{model_forward.1} parent=11 // pred_check_branch
          %484 = sbr.rel (%p482) target = $region28
        $region27: #{model_forward.1} parent=11 // pred_region
          _
        $region28: #{model_forward.1} parent=11 // pred_fallthru
          _
        // Predicated region
        $region29: #{model_forward.1} parent=11 // pred_check
          %p485 = pneg %p159
        $region30: #{model_forward.1} parent=11 // pred_check_branch
          %487 = sbr.rel (%p485) target = $region32
        $region31: #{model_forward.1} parent=11 // pred_region
          _
        $region32: #{model_forward.1} parent=11 // pred_fallthru
          _
        // Predicated region
        $region33: #{model_forward.1} parent=11 // pred_check
          %p488 = pneg %p180
        $region34: #{model_forward.1} parent=11 // pred_check_branch
          %490 = sbr.rel (%p488) target = $region36
        $region35: #{model_forward.1} parent=11 // pred_region
          _
        $region36: #{model_forward.1} parent=11 // pred_fallthru
          _
        // Predicated region
        $region37: #{model_forward.1} parent=11 // pred_check
          %p491 = pneg %p201
        $region38: #{model_forward.1} parent=11 // pred_check_branch
          %493 = sbr.rel (%p491) target = $region40
        $region39: #{model_forward.1} parent=11 // pred_region
          _
        $region40: #{model_forward.1} parent=11 // pred_fallthru
          _
        // Predicated region
        $region41: #{model_forward.1} parent=11 // pred_check
          %p494 = pneg %p222
        $region42: #{model_forward.1} parent=11 // pred_check_branch
          %496 = sbr.rel (%p494) target = $region44
        $region43: #{model_forward.1} parent=11 // pred_region
          _
        $region44: #{model_forward.1} parent=11 // pred_fallthru
          _
        // Predicated region
        $region45: #{model_forward.1} parent=11 // pred_check
          %p497 = pneg %p243
        $region46: #{model_forward.1} parent=11 // pred_check_branch
          %499 = sbr.rel (%p497) target = $region48
        $region47: #{model_forward.1} parent=11 // pred_region
          _
        $region48: #{model_forward.1} parent=11 // pred_fallthru
          _
        // Predicated region
        $region49: #{model_forward.1} parent=11 // pred_check
          %p500 = pneg %p264
        $region50: #{model_forward.1} parent=11 // pred_check_branch
          %502 = sbr.rel (%p500) target = $region52
        $region51: #{model_forward.1} parent=11 // pred_region
          _
        $region52: #{model_forward.1} parent=11 // pred_fallthru
          _
        // Predicated region
        $region53: #{model_forward.1} parent=11 // pred_check
          %p503 = pneg %p285
        $region54: #{model_forward.1} parent=11 // pred_check_branch
          %505 = sbr.rel (%p503) target = $region56
        $region55: #{model_forward.1} parent=11 // pred_region
          _
        $region56: #{model_forward.1} parent=11 // pred_fallthru
          _
        // Predicated region
        $region57: #{model_forward.1} parent=11 // pred_check
          %p506 = pneg %p306
        $region58: #{model_forward.1} parent=11 // pred_check_branch
          %508 = sbr.rel (%p506) target = $region60
        $region59: #{model_forward.1} parent=11 // pred_region
          _
        $region60: #{model_forward.1} parent=11 // pred_fallthru
          _
        // Predicated region
        $region61: #{model_forward.1} parent=11 // pred_check
          %p509 = pneg %p327
        $region62: #{model_forward.1} parent=11 // pred_check_branch
          %511 = sbr.rel (%p509) target = $region64
        $region63: #{model_forward.1} parent=11 // pred_region
          _
        $region64: #{model_forward.1} parent=11 // pred_fallthru
          _
        // Predicated region
        $region65: #{model_forward.1} parent=11 // pred_check
          %p512 = pneg %p348
        $region66: #{model_forward.1} parent=11 // pred_check_branch
          %514 = sbr.rel (%p512) target = $region68
        $region67: #{model_forward.1} parent=11 // pred_region
          _
        $region68: #{model_forward.1} parent=11 // pred_fallthru
          _
        // Predicated region
        $region69: #{model_forward.1} parent=11 // pred_check
          %p515 = pneg %p369
        $region70: #{model_forward.1} parent=11 // pred_check_branch
          %517 = sbr.rel (%p515) target = $region72
        $region71: #{model_forward.1} parent=11 // pred_region
          _
        $region72: #{model_forward.1} parent=11 // pred_fallthru
          _
        // Predicated region
        $region73: #{model_forward.1} parent=11 // pred_check
          %p518 = pneg %p390
        $region74: #{model_forward.1} parent=11 // pred_check_branch
          %520 = sbr.rel (%p518) target = $region76
        $region75: #{model_forward.1} parent=11 // pred_region
          _
        $region76: #{model_forward.1} parent=11 // pred_fallthru
          _
        // Predicated region
        $region77: #{model_forward.1} parent=11 // pred_check
          %p521 = pneg %p411
        $region78: #{model_forward.1} parent=11 // pred_check_branch
          %523 = sbr.rel (%p521) target = $region80
        $region79: #{model_forward.1} parent=11 // pred_region
          _
        $region80: #{model_forward.1} parent=11 // pred_fallthru
          _
        // Predicated region
        $region81: #{model_forward.1} parent=11 // pred_check
          %p524 = pneg %p432
        $region82: #{model_forward.1} parent=11 // pred_check_branch
          %526 = sbr.rel (%p524) target = $region84
        $region83: #{model_forward.1} parent=11 // pred_region
          _
        $region84: #{model_forward.1} parent=11 // pred_fallthru
          _
      $region12: #{model_forward.1} parent=5 // pred_fallthru
        _
      %p527 = scmp.lt.s32.totalorder %s28, 2
      // Predicated region
      $region85: #{model_forward.1} parent=5 // pred_check
        %p528 = pneg %p527
      $region86: #{model_forward.1} parent=5 // pred_check_branch
        %530 = sbr.rel (%p528) target = $region88
      $region87: #{model_forward.1} parent=5 // pred_region
        // Predicated region
        $region89: #{model_forward.1} parent=87 // pred_check
          %p531 = pneg %p48
        $region90: #{model_forward.1} parent=87 // pred_check_branch
          %533 = sbr.rel (%p531) target = $region92
        $region91: #{model_forward.1} parent=87 // pred_region
          %p534 = scmp.lt.s32.totalorder %s28, 1
          %s535 = scalar_select %p534, %s28, 1
          %s536 = smul.addr %s535, 3
          %s537 = smul.addr %s536, 8
          %s538 = scalar_lea.vmem %s0, %s537
        $region92: #{model_forward.1} parent=87 // pred_fallthru
          _
      $region88: #{model_forward.1} parent=5 // pred_fallthru
        _
      %p539 = scmp.le.s32.totalorder 1, %s28
      %p540 = scmp.lt.s32.totalorder %s28, 3
      %p541 = pnand %p539, %p540
      %p542 = pneg %p541
      // Predicated region
      $region93: #{model_forward.1} parent=5 // pred_check
        _
      $region94: #{model_forward.1} parent=5 // pred_check_branch
        %544 = sbr.rel (%p541) target = $region96
      $region95: #{model_forward.1} parent=5 // pred_region
        %s545 = ssub.s32 %s28, 1
        %p546 = scmp.lt.s32.totalorder %s33, 1
        %s547 = scalar_select %p546, %s33, 1
        %s548 = smul.addr %s547, 3
        %s549 = smul.addr %s548, 8
        %s550 = scalar_lea.vmem %s0, %s549
        %p551 = pneg %p54
        %p552 = pneg %p51
        %p553 = pneg %p75
        %p554 = pneg %p72
        %p555 = pneg %p96
        %p556 = pneg %p93
        %p557 = pneg %p117
        %p558 = pneg %p114
        %p559 = pneg %p138
        %p560 = pneg %p135
        %p561 = pneg %p159
        %p562 = pneg %p156
        %p563 = pneg %p180
        %p564 = pneg %p177
        %p565 = pneg %p201
        %p566 = pneg %p198
        %p567 = pneg %p222
        %p568 = pneg %p219
        %p569 = pneg %p243
        %p570 = pneg %p240
        %p571 = pneg %p264
        %p572 = pneg %p261
        %p573 = pneg %p285
        %p574 = pneg %p282
        %p575 = pneg %p306
        %p576 = pneg %p303
        %p577 = pneg %p327
        %p578 = pneg %p324
        %p579 = pneg %p348
        %p580 = pneg %p345
        %p581 = pneg %p369
        %p582 = pneg %p366
        %p583 = pneg %p390
        %p584 = pneg %p387
        %p585 = pneg %p411
        %p586 = pneg %p408
        %p587 = pneg %p432
        %p588 = pneg %p429
        %p589 = pneg %p458
        %p590 = pneg %p455
        %s591 = sand.u32 %s445, 1
        %s592 = scalar_lea.sflag [#allocation3], %s591
        %s593 = sand.u32 %s445, 1
        %s594 = scalar_lea.vmem [#allocation2], %s593
        %p595 = scmp.lt.s32.totalorder %s33, 1
        %s596 = scalar_select %p595, %s33, 1
        %s597 = smul.addr %s596, 3
        %s598 = smul.addr %s597, 8
        %s599 = scalar_lea.vmem %s0, %s598
        %v600 = vld [vmem:[%s599] sm:$0xff]
        %v601 = vld [vmem:[%s599 + $0x8] sm:$0xff]
        %v602 = vld [vmem:[%s599 + $0x10] sm:$0xff]
        %v603 = vld [vmem:[%s1] sm:$0xff]
        %v604 = vld [vmem:[%s1 + $0x8] sm:$0xff]
        %v605 = vld [vmem:[%s1 + $0x10] sm:$0xff]
        %v606 = vld [vmem:[%s1 + $0x18] sm:$0xff]
        %v607 = vld [vmem:[%s1 + $0x20] sm:$0xff]
        %v608 = vld [vmem:[%s1 + $0x28] sm:$0xff]
        %v609 = vld [vmem:[%s2] sm:$0xff]
        %v610 = vld [vmem:[%s2 + $0x8] sm:$0xff]
        %v611 = vld [vmem:[%s2 + $0x10] sm:$0xff]
        %vm612 = vcmask 392192
        %v614 = vsel %vm612, %v600, 0
        %v617 = vsel %vm612, %v601, 0
        %v620 = vsel %vm612, %v602, 0
        %622 = vmatprep.subr.mxu0 0.0
        %623 = vmatpush1.msra.mxu0 0.0
        %624 = vmatprep.subr.mxu0 0.0
        %625 = vmatpush1.msra.mxu0 0.0
        %626 = vmatprep.subr.mxu0 0.0
        %627 = vmatpush1.msra.mxu0 0.0
        %628 = vmatprep.subr.mxu0 0.0
        %629 = vmatpush1.msra.mxu0 0.0
        %630 = vmatprep.subr.mxu0 0.0
        %631 = vmatpush1.msra.mxu0 0.0
        %632 = vmatprep.subr.mxu0 0.0
        %633 = vmatpush1.msra.mxu0 0.0
        %634 = vmatprep.subr.mxu0 0.0
        %635 = vmatpush1.msra.mxu0 0.0
        %636 = vmatprep.subr.mxu0 0.0
        %637 = vmatpush1.msra.mxu0 0.0
        %638 = vmatprep.subr.mxu0 0.0
        %639 = vmatpush1.msra.mxu0 0.0
        %640 = vmatprep.subr.mxu0 0.0
        %641 = vmatpush1.msra.mxu0 0.0
        %642 = vmatprep.subr.mxu0 0.0
        %643 = vmatpush1.msra.mxu0 %v608
        %644 = vmatprep.subr.mxu0 0.0
        %645 = vmatpush1.msra.mxu0 %v607
        %646 = vmatprep.subr.mxu0 0.0
        %647 = vmatpush1.msra.mxu0 %v606
        %648 = vmatprep.subr.mxu0 0.0
        %649 = vmatpush1.msra.mxu0 %v605
        %650 = vmatprep.subr.mxu0 0.0
        %651 = vmatpush1.msra.mxu0 %v604
        %652 = vmatprep.subr.mxu0 0.0
        %653 = vmatpush1.msra.mxu0 %v603
        %654 = vmatprep.subr.mxu0 0.0
        %655 = vmatpush2.msra.mxu0 0.0
        %656 = vmatprep.subr.mxu0 0.0
        %657 = vmatpush2.msra.mxu0 0.0
        %658 = vmatprep.subr.mxu0 0.0
        %659 = vmatpush2.msra.mxu0 0.0
        %660 = vmatprep.subr.mxu0 0.0
        %661 = vmatpush2.msra.mxu0 0.0
        %662 = vmatprep.subr.mxu0 0.0
        %663 = vmatpush2.msra.mxu0 0.0
        %664 = vmatprep.subr.mxu0 0.0
        %665 = vmatpush2.msra.mxu0 0.0
        %666 = vmatprep.subr.mxu0 0.0
        %667 = vmatpush2.msra.mxu0 0.0
        %668 = vmatprep.subr.mxu0 0.0
        %669 = vmatpush2.msra.mxu0 0.0
        %670 = vmatprep.subr.mxu0 0.0
        %671 = vmatpush2.msra.mxu0 0.0
        %672 = vmatprep.subr.mxu0 0.0
        %673 = vmatpush2.msra.mxu0 0.0
        %674 = vmatprep.subr.mxu0 0.0
        %675 = vmatpush2.msra.mxu0 0.0
        %676 = vmatprep.subr.mxu0 0.0
        %677 = vmatpush2.msra.mxu0 0.0
        %678 = vmatprep.subr.mxu0 0.0
        %679 = vmatpush2.msra.mxu0 0.0
        %680 = vmatprep.subr.mxu0 0.0
        %681 = vmatpush2.msra.mxu0 0.0
        %682 = vmatprep.subr.mxu0 0.0
        %683 = vmatpush2.msra.mxu0 0.0
        %684 = vmatprep.subr.mxu0 0.0
        %685 = vmatpush2.msra.mxu0 0.0
        %686 = vmatprep.mubr.f32.mxu0 0.0
        %687 = vmatmul.mubr.f32.gmra.mxu0 %v614
        %v688 = vpop.f32.mrf.mxu0
        %v689 = vadd.f32 %v609, %v688
        %v690 = vpop.f32.mrf.mxu0
        %691 = vmatprep.mubr.f32.mxu0 0.0
        %692 = vmatmul.mubr.f32.gmra.mxu0 %v617
        %v693 = vpop.f32.mrf.mxu0
        %v694 = vadd.f32 %v610, %v693
        %v695 = vpop.f32.mrf.mxu0
        %696 = vmatprep.mubr.f32.mxu0 0.0
        %697 = vmatmul.mubr.f32.gmra.mxu0 %v620
        %v698 = vpop.f32.mrf.mxu0
        %v699 = vadd.f32 %v611, %v698
        %v700 = vpop.f32.mrf.mxu0
        %701 = vdwg.mxu0
        %v702 = vlaneseq
        %v703 = vand.u32 %v702, 127
        %vm704 = vcmp.lt.s32.totalorder %v703, 17
        %v705 = vld [vmem:[%s3] sm:$0x1]
        %v706 = vld [vmem:[%s4] sm:$0x1]
        %vm707 = vcmask 261120
        %v708 = vsel %vm707, %v689, 0.0
        %709 = vadd.xlane.f32.xlu0 %v708
        %v710 = vpop.xlane.xlu0 %709
        %v711 = vsel %vm707, %v694, 0.0
        %712 = vadd.xlane.f32.xlu0 %v711
        %v713 = vpop.xlane.xlu0 %712
        %v714 = vsel %vm707, %v699, 0.0
        %715 = vadd.xlane.f32.xlu0 %v714
        %v716 = vpop.xlane.xlu0 %715
        %v717 = vrcp.pop 32.0
        %v718 = vmul.f32 %v710, %v717
        %v719 = vmul.f32 %v713, %v717
        %v720 = vmul.f32 %v716, %v717
        %v721 = vsub.f32 %v689, %v718
        %v722 = vsub.f32 %v694, %v719
        %v723 = vsub.f32 %v699, %v720
        %v724 = vmul.f32 %v721, %v721
        %v725 = vmul.f32 %v722, %v722
        %v726 = vmul.f32 %v723, %v723
        %v727 = vsel %vm707, %v724, 0.0
        %728 = vadd.xlane.f32.xlu0 %v727
        %v729 = vpop.xlane.xlu0 %728
        %v730 = vsel %vm707, %v725, 0.0
        %731 = vadd.xlane.f32.xlu0 %v730
        %v732 = vpop.xlane.xlu0 %731
        %v733 = vsel %vm707, %v726, 0.0
        %734 = vadd.xlane.f32.xlu0 %v733
        %v735 = vpop.xlane.xlu0 %734
        %v736 = vmul.f32 %v729, %v717
        %v737 = vmul.f32 %v732, %v717
        %v738 = vmul.f32 %v735, %v717
        %v739 = vadd.f32 %v736, 1e-12
        %v740 = vadd.f32 %v737, 1e-12
        %v741 = vadd.f32 %v738, 1e-12
        %v742 = vrsqrt.pop %v739
        %v743 = vrsqrt.pop %v740
        %v744 = vrsqrt.pop %v741
        %v745 = vmul.f32 %v721, %v742
        %v746 = vmul.f32 %v722, %v743
        %v747 = vmul.f32 %v723, %v744
        %v749 = vlaneseq
        %v750 = vshrl.u32 %v749, 7
        %v751 = vsub.s32 0, %v750
        %v752 = vrot.slane %v705, %v751
        %v754 = vmul.f32 %v745, %v752
        %v755 = vmul.f32 %v746, %v752
        %v756 = vmul.f32 %v747, %v752
        %v758 = vlaneseq
        %v759 = vshrl.u32 %v758, 7
        %v760 = vsub.s32 0, %v759
        %v761 = vrot.slane %v706, %v760
        %v763 = vadd.f32 %v754, %v761
        %v764 = vadd.f32 %v755, %v761
        %v765 = vadd.f32 %v756, %v761
        %v766 = vld [vmem:[%s5] sm:$0xff]
        %v767 = vld [vmem:[%s5 + $0x8] sm:$0xff]
        %v768 = vld [vmem:[%s5 + $0x10] sm:$0xff]
        %v769 = vld [vmem:[%s5 + $0x18] sm:$0xff]
        %v770 = vld [vmem:[%s6] sm:$0x1]
        %v772 = vlaneseq
        %v773 = vshrl.u32 %v772, 7
        %v774 = vsub.s32 0, %v773
        %v775 = vrot.slane %v770, %v774
        %v778 = vsel %vm707, %v763, 0
        %v781 = vsel %vm707, %v764, 0
        %v784 = vsel %vm707, %v765, 0
        %786 = vmatprep.subr.mxu0 0.0
        %787 = vmatpush1.msra.mxu0 0.0
        %788 = vmatprep.subr.mxu0 0.0
        %789 = vmatpush1.msra.mxu0 0.0
        %790 = vmatprep.subr.mxu0 0.0
        %791 = vmatpush1.msra.mxu0 0.0
        %792 = vmatprep.subr.mxu0 0.0
        %793 = vmatpush1.msra.mxu0 0.0
        %794 = vmatprep.subr.mxu0 0.0
        %795 = vmatpush1.msra.mxu0 0.0
        %796 = vmatprep.subr.mxu0 0.0
        %797 = vmatpush1.msra.mxu0 0.0
        %798 = vmatprep.subr.mxu0 0.0
        %799 = vmatpush1.msra.mxu0 0.0
        %800 = vmatprep.subr.mxu0 0.0
        %801 = vmatpush1.msra.mxu0 0.0
        %802 = vmatprep.subr.mxu0 0.0
        %803 = vmatpush1.msra.mxu0 0.0
        %804 = vmatprep.subr.mxu0 0.0
        %805 = vmatpush1.msra.mxu0 0.0
        %806 = vmatprep.subr.mxu0 0.0
        %807 = vmatpush1.msra.mxu0 0.0
        %808 = vmatprep.subr.mxu0 0.0
        %809 = vmatpush1.msra.mxu0 0.0
        %810 = vmatprep.subr.mxu0 0.0
        %811 = vmatpush1.msra.mxu0 %v769
        %812 = vmatprep.subr.mxu0 0.0
        %813 = vmatpush1.msra.mxu0 %v768
        %814 = vmatprep.subr.mxu0 0.0
        %815 = vmatpush1.msra.mxu0 %v767
        %816 = vmatprep.subr.mxu0 0.0
        %817 = vmatpush1.msra.mxu0 %v766
        %818 = vmatprep.subr.mxu0 0.0
        %819 = vmatpush2.msra.mxu0 0.0
        %820 = vmatprep.subr.mxu0 0.0
        %821 = vmatpush2.msra.mxu0 0.0
        %822 = vmatprep.subr.mxu0 0.0
        %823 = vmatpush2.msra.mxu0 0.0
        %824 = vmatprep.subr.mxu0 0.0
        %825 = vmatpush2.msra.mxu0 0.0
        %826 = vmatprep.subr.mxu0 0.0
        %827 = vmatpush2.msra.mxu0 0.0
        %828 = vmatprep.subr.mxu0 0.0
        %829 = vmatpush2.msra.mxu0 0.0
        %830 = vmatprep.subr.mxu0 0.0
        %831 = vmatpush2.msra.mxu0 0.0
        %832 = vmatprep.subr.mxu0 0.0
        %833 = vmatpush2.msra.mxu0 0.0
        %834 = vmatprep.subr.mxu0 0.0
        %835 = vmatpush2.msra.mxu0 0.0
        %836 = vmatprep.subr.mxu0 0.0
        %837 = vmatpush2.msra.mxu0 0.0
        %838 = vmatprep.subr.mxu0 0.0
        %839 = vmatpush2.msra.mxu0 0.0
        %840 = vmatprep.subr.mxu0 0.0
        %841 = vmatpush2.msra.mxu0 0.0
        %842 = vmatprep.subr.mxu0 0.0
        %843 = vmatpush2.msra.mxu0 0.0
        %844 = vmatprep.subr.mxu0 0.0
        %845 = vmatpush2.msra.mxu0 0.0
        %846 = vmatprep.subr.mxu0 0.0
        %847 = vmatpush2.msra.mxu0 0.0
        %848 = vmatprep.subr.mxu0 0.0
        %849 = vmatpush2.msra.mxu0 0.0
        %850 = vmatprep.mubr.f32.mxu0 0.0
        %851 = vmatmul.mubr.f32.gmra.mxu0 %v778
        %v852 = vpop.f32.mrf.mxu0
        %v853 = vadd.f32 %v775, %v852
        %v854 = vpop.f32.mrf.mxu0
        %855 = vmatprep.mubr.f32.mxu0 0.0
        %856 = vmatmul.mubr.f32.gmra.mxu0 %v781
        %v857 = vpop.f32.mrf.mxu0
        %v858 = vadd.f32 %v775, %v857
        %v859 = vpop.f32.mrf.mxu0
        %860 = vmatprep.mubr.f32.mxu0 0.0
        %861 = vmatmul.mubr.f32.gmra.mxu0 %v784
        %v862 = vpop.f32.mrf.mxu0
        %v863 = vadd.f32 %v775, %v862
        %v864 = vpop.f32.mrf.mxu0
        %865 = vdwg.mxu0
        %v866 = vld [vmem:[%s7] sm:$0xff]
        %v867 = vld [vmem:[%s7 + $0x8] sm:$0xff]
        %v868 = vld [vmem:[%s7 + $0x10] sm:$0xff]
        %v869 = vld [vmem:[%s7 + $0x18] sm:$0xff]
        %873 = vrot.lane.b32.xlu0 %v853, 96
        %v874 = vpop.permute.xlu0 %873
        %875 = vrot.lane.b32.xlu0 %v858, 96
        %v876 = vpop.permute.xlu0 %875
        %877 = vrot.lane.b32.xlu0 %v863, 96
        %v878 = vpop.permute.xlu0 %877
        %vm879 = vcmask 130048
        %v880 = vsel %vm879, %v853, 0
        %v882 = vsel %vm879, %v858, 0
        %v884 = vsel %vm879, %v863, 0
        %v886 = vsel %vm879, %v874, 0
        %v888 = vsel %vm879, %v876, 0
        %v890 = vsel %vm879, %v878, 0
        %892 = vmatprep.subr.mxu0 0.0
        %893 = vmatpush1.xpose.msra.mxu0 0.0
        %894 = vmatprep.subr.mxu0 0.0
        %895 = vmatpush1.xpose.msra.mxu0 0.0
        %896 = vmatprep.subr.mxu0 0.0
        %897 = vmatpush1.xpose.msra.mxu0 0.0
        %898 = vmatprep.subr.mxu0 0.0
        %899 = vmatpush1.xpose.msra.mxu0 0.0
        %900 = vmatprep.subr.mxu0 0.0
        %901 = vmatpush1.xpose.msra.mxu0 0.0
        %902 = vmatprep.subr.mxu0 0.0
        %903 = vmatpush1.xpose.msra.mxu0 0.0
        %904 = vmatprep.subr.mxu0 0.0
        %905 = vmatpush1.xpose.msra.mxu0 0.0
        %906 = vmatprep.subr.mxu0 0.0
        %907 = vmatpush1.xpose.msra.mxu0 0.0
        %908 = vmatprep.subr.mxu0 0.0
        %909 = vmatpush1.xpose.msra.mxu0 0.0
        %910 = vmatprep.subr.mxu0 0.0
        %911 = vmatpush1.xpose.msra.mxu0 0.0
        %912 = vmatprep.subr.mxu0 0.0
        %913 = vmatpush1.xpose.msra.mxu0 0.0
        %914 = vmatprep.subr.mxu0 0.0
        %915 = vmatpush1.xpose.msra.mxu0 0.0
        %916 = vmatprep.subr.mxu0 0.0
        %917 = vmatpush1.xpose.msra.mxu0 0.0
        %918 = vmatprep.subr.mxu0 0.0
        %919 = vmatpush1.xpose.msra.mxu0 %v890
        %920 = vmatprep.subr.mxu0 0.0
        %921 = vmatpush1.xpose.msra.mxu0 %v888
        %922 = vmatprep.subr.mxu0 0.0
        %923 = vmatpush1.xpose.msra.mxu0 %v886
        %924 = vmatprep.subr.mxu0 0.0
        %925 = vmatpush2.xpose.msra.mxu0 0.0
        %926 = vmatprep.subr.mxu0 0.0
        %927 = vmatpush2.xpose.msra.mxu0 0.0
        %928 = vmatprep.subr.mxu0 0.0
        %929 = vmatpush2.xpose.msra.mxu0 0.0
        %930 = vmatprep.subr.mxu0 0.0
        %931 = vmatpush2.xpose.msra.mxu0 0.0
        %932 = vmatprep.subr.mxu0 0.0
        %933 = vmatpush2.xpose.msra.mxu0 0.0
        %934 = vmatprep.subr.mxu0 0.0
        %935 = vmatpush2.xpose.msra.mxu0 0.0
        %936 = vmatprep.subr.mxu0 0.0
        %937 = vmatpush2.xpose.msra.mxu0 0.0
        %938 = vmatprep.subr.mxu0 0.0
        %939 = vmatpush2.xpose.msra.mxu0 0.0
        %940 = vmatprep.subr.mxu0 0.0
        %941 = vmatpush2.xpose.msra.mxu0 0.0
        %942 = vmatprep.subr.mxu0 0.0
        %943 = vmatpush2.xpose.msra.mxu0 0.0
        %944 = vmatprep.subr.mxu0 0.0
        %945 = vmatpush2.xpose.msra.mxu0 0.0
        %946 = vmatprep.subr.mxu0 0.0
        %947 = vmatpush2.xpose.msra.mxu0 0.0
        %948 = vmatprep.subr.mxu0 0.0
        %949 = vmatpush2.xpose.msra.mxu0 0.0
        %950 = vmatprep.subr.mxu0 0.0
        %951 = vmatpush2.xpose.msra.mxu0 0.0
        %952 = vmatprep.subr.mxu0 0.0
        %953 = vmatpush2.xpose.msra.mxu0 0.0
        %954 = vmatprep.subr.mxu0 0.0
        %955 = vmatpush2.xpose.msra.mxu0 0.0
        %956 = vmatprep.mubr.f32.mxu0 0.0
        %957 = vmatmul.mubr.f32.gmra.mxu0 %v880
        %v958 = vpop.f32.mrf.mxu0
        %v959 = vadd.f32 0.0, %v958
        %v960 = vpop.f32.mrf.mxu0
        %961 = vmatprep.mubr.f32.mxu0 0.0
        %962 = vmatmul.mubr.f32.gmra.mxu0 %v882
        %v963 = vpop.f32.mrf.mxu0
        %v964 = vadd.f32 0.0, %v963
        %v965 = vpop.f32.mrf.mxu0
        %966 = vmatprep.mubr.f32.mxu0 0.0
        %967 = vmatmul.mubr.f32.gmra.mxu0 %v884
        %v968 = vpop.f32.mrf.mxu0
        %v969 = vadd.f32 0.0, %v968
        %v970 = vpop.f32.mrf.mxu0
        %971 = vdwg.mxu0
        %v972 = vmul.f32 %v959, 0.25
        %v973 = vmul.f32 %v964, 0.25
        %v974 = vmul.f32 %v969, 0.25
        %v975 = vsel %vm704, %v972, -1e+30
        %v976 = vsel %vm704, %v973, -1e+30
        %v977 = vsel %vm704, %v974, -1e+30
        %vm978 = vcmask 195584
        %v979 = vsel %vm978, %v975, -inf
        %980 = vmax.xlane.f32.xlu0 %v979
        %v981 = vpop.xlane.xlu0 %980
        %v982 = vsel %vm978, %v976, -inf
        %983 = vmax.xlane.f32.xlu0 %v982
        %v984 = vpop.xlane.xlu0 %983
        %v985 = vsel %vm978, %v977, -inf
        %986 = vmax.xlane.f32.xlu0 %v985
        %v987 = vpop.xlane.xlu0 %986
        %v988 = vsub.f32 %v975, %v981
        %v989 = vsub.f32 %v976, %v984
        %v990 = vsub.f32 %v977, %v987
        %v991 = vmul.f32 %v988, 1.442695
        %v992 = vpow.pop %v991
        %v993 = vmul.f32 %v989, 1.442695
        %v994 = vpow.pop %v993
        %v995 = vmul.f32 %v990, 1.442695
        %v996 = vpow.pop %v995
        %v997 = vsel %vm978, %v992, 0.0
        %998 = vadd.xlane.f32.xlu0 %v997
        %v999 = vpop.xlane.xlu0 %998
        %v1000 = vsel %vm978, %v994, 0.0
        %1001 = vadd.xlane.f32.xlu0 %v1000
        %v1002 = vpop.xlane.xlu0 %1001
        %v1003 = vsel %vm978, %v996, 0.0
        %1004 = vadd.xlane.f32.xlu0 %v1003
        %v1005 = vpop.xlane.xlu0 %1004
        %v1006 = vrcp.pop %v999
        %v1007 = vrcp.pop %v1002
        %v1008 = vrcp.pop %v1005
        %v1009 = vmul.f32 %v992, %v1006
        %v1010 = vmul.f32 %v994, %v1007
        %v1011 = vmul.f32 %v996, %v1008
        %1012 = vrot.lane.b32.xlu0 %v853, 64
        %v1013 = vpop.permute.xlu0 %1012
        %1014 = vrot.lane.b32.xlu0 %v858, 64
        %v1015 = vpop.permute.xlu0 %1014
        %1016 = vrot.lane.b32.xlu0 %v863, 64
        %v1017 = vpop.permute.xlu0 %1016
        %v1022 = vsel %vm978, %v1009, 0
        %v1025 = vsel %vm978, %v1010, 0
        %v1028 = vsel %vm978, %v1011, 0
        %1030 = vmatprep.subr.mxu0 0.0
        %1031 = vmatpush1.msra.mxu0 0.0
        %1032 = vmatprep.subr.mxu0 0.0
        %1033 = vmatpush1.msra.mxu0 0.0
        %1034 = vmatprep.subr.mxu0 0.0
        %1035 = vmatpush1.msra.mxu0 0.0
        %1036 = vmatprep.subr.mxu0 0.0
        %1037 = vmatpush1.msra.mxu0 0.0
        %1038 = vmatprep.subr.mxu0 0.0
        %1039 = vmatpush1.msra.mxu0 0.0
        %1040 = vmatprep.subr.mxu0 0.0
        %1041 = vmatpush1.msra.mxu0 0.0
        %1042 = vmatprep.subr.mxu0 0.0
        %1043 = vmatpush1.msra.mxu0 0.0
        %1044 = vmatprep.subr.mxu0 0.0
        %1045 = vmatpush1.msra.mxu0 0.0
        %1046 = vmatprep.subr.mxu0 0.0
        %1047 = vmatpush1.msra.mxu0 0.0
        %1048 = vmatprep.subr.mxu0 0.0
        %1049 = vmatpush1.msra.mxu0 0.0
        %1050 = vmatprep.subr.mxu0 0.0
        %1051 = vmatpush1.msra.mxu0 0.0
        %1052 = vmatprep.subr.mxu0 0.0
        %1053 = vmatpush1.msra.mxu0 0.0
        %1054 = vmatprep.subr.mxu0 0.0
        %1055 = vmatpush1.msra.mxu0 0.0
        %1056 = vmatprep.subr.mxu0 0.0
        %1057 = vmatpush1.msra.mxu0 %v1017
        %1058 = vmatprep.subr.mxu0 0.0
        %1059 = vmatpush1.msra.mxu0 %v1015
        %1060 = vmatprep.subr.mxu0 0.0
        %1061 = vmatpush1.msra.mxu0 %v1013
        %1062 = vmatprep.subr.mxu0 0.0
        %1063 = vmatpush2.msra.mxu0 0.0
        %1064 = vmatprep.subr.mxu0 0.0
        %1065 = vmatpush2.msra.mxu0 0.0
        %1066 = vmatprep.subr.mxu0 0.0
        %1067 = vmatpush2.msra.mxu0 0.0
        %1068 = vmatprep.subr.mxu0 0.0
        %1069 = vmatpush2.msra.mxu0 0.0
        %1070 = vmatprep.subr.mxu0 0.0
        %1071 = vmatpush2.msra.mxu0 0.0
        %1072 = vmatprep.subr.mxu0 0.0
        %1073 = vmatpush2.msra.mxu0 0.0
        %1074 = vmatprep.subr.mxu0 0.0
        %1075 = vmatpush2.msra.mxu0 0.0
        %1076 = vmatprep.subr.mxu0 0.0
        %1077 = vmatpush2.msra.mxu0 0.0
        %1078 = vmatprep.subr.mxu0 0.0
        %1079 = vmatpush2.msra.mxu0 0.0
        %1080 = vmatprep.subr.mxu0 0.0
        %1081 = vmatpush2.msra.mxu0 0.0
        %1082 = vmatprep.subr.mxu0 0.0
        %1083 = vmatpush2.msra.mxu0 0.0
        %1084 = vmatprep.subr.mxu0 0.0
        %1085 = vmatpush2.msra.mxu0 0.0
        %1086 = vmatprep.subr.mxu0 0.0
        %1087 = vmatpush2.msra.mxu0 0.0
        %1088 = vmatprep.subr.mxu0 0.0
        %1089 = vmatpush2.msra.mxu0 0.0
        %1090 = vmatprep.subr.mxu0 0.0
        %1091 = vmatpush2.msra.mxu0 0.0
        %1092 = vmatprep.subr.mxu0 0.0
        %1093 = vmatpush2.msra.mxu0 0.0
        %1094 = vmatprep.mubr.f32.mxu0 0.0
        %1095 = vmatmul.mubr.f32.gmra.mxu0 %v1022
        %v1096 = vpop.f32.mrf.mxu0
        %v1097 = vadd.f32 0.0, %v1096
        %v1098 = vpop.f32.mrf.mxu0
        %1099 = vmatprep.mubr.f32.mxu0 0.0
        %1100 = vmatmul.mubr.f32.gmra.mxu0 %v1025
        %v1101 = vpop.f32.mrf.mxu0
        %v1102 = vadd.f32 0.0, %v1101
        %v1103 = vpop.f32.mrf.mxu0
        %1104 = vmatprep.mubr.f32.mxu0 0.0
        %1105 = vmatmul.mubr.f32.gmra.mxu0 %v1028
        %v1106 = vpop.f32.mrf.mxu0
        %v1107 = vadd.f32 0.0, %v1106
        %v1108 = vpop.f32.mrf.mxu0
        %1109 = vdwg.mxu0
        %1110 = vrot.lane.b32.xlu0 %v853, 112
        %v1111 = vpop.permute.xlu0 %1110
        %1112 = vrot.lane.b32.xlu0 %v858, 112
        %v1113 = vpop.permute.xlu0 %1112
        %1114 = vrot.lane.b32.xlu0 %v863, 112
        %v1115 = vpop.permute.xlu0 %1114
        %1116 = vrot.lane.b32.xlu0 %v853, 80
        %v1117 = vpop.permute.xlu0 %1116
        %1118 = vrot.lane.b32.xlu0 %v858, 80
        %v1119 = vpop.permute.xlu0 %1118
        %1120 = vrot.lane.b32.xlu0 %v863, 80
        %v1121 = vpop.permute.xlu0 %1120
        %v1122 = vsel %vm879, %v1111, 0
        %v1124 = vsel %vm879, %v1113, 0
        %v1126 = vsel %vm879, %v1115, 0
        %v1128 = vsel %vm879, %v1117, 0
        %v1130 = vsel %vm879, %v1119, 0
        %v1132 = vsel %vm879, %v1121, 0
        %1134 = vmatprep.subr.mxu0 0.0
        %1135 = vmatpush1.xpose.msra.mxu0 0.0
        %1136 = vmatprep.subr.mxu0 0.0
        %1137 = vmatpush1.xpose.msra.mxu0 0.0
        %1138 = vmatprep.subr.mxu0 0.0
        %1139 = vmatpush1.xpose.msra.mxu0 0.0
        %1140 = vmatprep.subr.mxu0 0.0
        %1141 = vmatpush1.xpose.msra.mxu0 0.0
        %1142 = vmatprep.subr.mxu0 0.0
        %1143 = vmatpush1.xpose.msra.mxu0 0.0
        %1144 = vmatprep.subr.mxu0 0.0
        %1145 = vmatpush1.xpose.msra.mxu0 0.0
        %1146 = vmatprep.subr.mxu0 0.0
        %1147 = vmatpush1.xpose.msra.mxu0 0.0
        %1148 = vmatprep.subr.mxu0 0.0
        %1149 = vmatpush1.xpose.msra.mxu0 0.0
        %1150 = vmatprep.subr.mxu0 0.0
        %1151 = vmatpush1.xpose.msra.mxu0 0.0
        %1152 = vmatprep.subr.mxu0 0.0
        %1153 = vmatpush1.xpose.msra.mxu0 0.0
        %1154 = vmatprep.subr.mxu0 0.0
        %1155 = vmatpush1.xpose.msra.mxu0 0.0
        %1156 = vmatprep.subr.mxu0 0.0
        %1157 = vmatpush1.xpose.msra.mxu0 0.0
        %1158 = vmatprep.subr.mxu0 0.0
        %1159 = vmatpush1.xpose.msra.mxu0 0.0
        %1160 = vmatprep.subr.mxu0 0.0
        %1161 = vmatpush1.xpose.msra.mxu0 %v1132
        %1162 = vmatprep.subr.mxu0 0.0
        %1163 = vmatpush1.xpose.msra.mxu0 %v1130
        %1164 = vmatprep.subr.mxu0 0.0
        %1165 = vmatpush1.xpose.msra.mxu0 %v1128
        %1166 = vmatprep.subr.mxu0 0.0
        %1167 = vmatpush2.xpose.msra.mxu0 0.0
        %1168 = vmatprep.subr.mxu0 0.0
        %1169 = vmatpush2.xpose.msra.mxu0 0.0
        %1170 = vmatprep.subr.mxu0 0.0
        %1171 = vmatpush2.xpose.msra.mxu0 0.0
        %1172 = vmatprep.subr.mxu0 0.0
        %1173 = vmatpush2.xpose.msra.mxu0 0.0
        %1174 = vmatprep.subr.mxu0 0.0
        %1175 = vmatpush2.xpose.msra.mxu0 0.0
        %1176 = vmatprep.subr.mxu0 0.0
        %1177 = vmatpush2.xpose.msra.mxu0 0.0
        %1178 = vmatprep.subr.mxu0 0.0
        %1179 = vmatpush2.xpose.msra.mxu0 0.0
        %1180 = vmatprep.subr.mxu0 0.0
        %1181 = vmatpush2.xpose.msra.mxu0 0.0
        %1182 = vmatprep.subr.mxu0 0.0
        %1183 = vmatpush2.xpose.msra.mxu0 0.0
        %1184 = vmatprep.subr.mxu0 0.0
        %1185 = vmatpush2.xpose.msra.mxu0 0.0
        %1186 = vmatprep.subr.mxu0 0.0
        %1187 = vmatpush2.xpose.msra.mxu0 0.0
        %1188 = vmatprep.subr.mxu0 0.0
        %1189 = vmatpush2.xpose.msra.mxu0 0.0
        %1190 = vmatprep.subr.mxu0 0.0
        %1191 = vmatpush2.xpose.msra.mxu0 0.0
        %1192 = vmatprep.subr.mxu0 0.0
        %1193 = vmatpush2.xpose.msra.mxu0 0.0
        %1194 = vmatprep.subr.mxu0 0.0
        %1195 = vmatpush2.xpose.msra.mxu0 0.0
        %1196 = vmatprep.subr.mxu0 0.0
        %1197 = vmatpush2.xpose.msra.mxu0 0.0
        %1198 = vmatprep.mubr.f32.mxu0 0.0
        %1199 = vmatmul.mubr.f32.gmra.mxu0 %v1122
        %v1200 = vpop.f32.mrf.mxu0
        %v1201 = vadd.f32 0.0, %v1200
        %v1202 = vpop.f32.mrf.mxu0
        %1203 = vmatprep.mubr.f32.mxu0 0.0
        %1204 = vmatmul.mubr.f32.gmra.mxu0 %v1124
        %v1205 = vpop.f32.mrf.mxu0
        %v1206 = vadd.f32 0.0, %v1205
        %v1207 = vpop.f32.mrf.mxu0
        %1208 = vmatprep.mubr.f32.mxu0 0.0
        %1209 = vmatmul.mubr.f32.gmra.mxu0 %v1126
        %v1210 = vpop.f32.mrf.mxu0
        %v1211 = vadd.f32 0.0, %v1210
        %v1212 = vpop.f32.mrf.mxu0
        %1213 = vdwg.mxu0
        %v1214 = vmul.f32 %v1201, 0.25
        %v1215 = vmul.f32 %v1206, 0.25
        %v1216 = vmul.f32 %v1211, 0.25
        %v1217 = vsel %vm704, %v1214, -1e+30
        %v1218 = vsel %vm704, %v1215, -1e+30
        %v1219 = vsel %vm704, %v1216, -1e+30
        %v1220 = vsel %vm978, %v1217, -inf
        %1221 = vmax.xlane.f32.xlu0 %v1220
        %v1222 = vpop.xlane.xlu0 %1221
        %v1223 = vsel %vm978, %v1218, -inf
        %1224 = vmax.xlane.f32.xlu0 %v1223
        %v1225 = vpop.xlane.xlu0 %1224
        %v1226 = vsel %vm978, %v1219, -inf
        %1227 = vmax.xlane.f32.xlu0 %v1226
        %v1228 = vpop.xlane.xlu0 %1227
        %v1229 = vsub.f32 %v1217, %v1222
        %v1230 = vsub.f32 %v1218, %v1225
        %v1231 = vsub.f32 %v1219, %v1228
        %v1232 = vmul.f32 %v1229, 1.442695
        %v1233 = vpow.pop %v1232
        %v1234 = vmul.f32 %v1230, 1.442695
        %v1235 = vpow.pop %v1234
        %v1236 = vmul.f32 %v1231, 1.442695
        %v1237 = vpow.pop %v1236
        %v1238 = vsel %vm978, %v1233, 0.0
        %1239 = vadd.xlane.f32.xlu0 %v1238
        %v1240 = vpop.xlane.xlu0 %1239
        %v1241 = vsel %vm978, %v1235, 0.0
        %1242 = vadd.xlane.f32.xlu0 %v1241
        %v1243 = vpop.xlane.xlu0 %1242
        %v1244 = vsel %vm978, %v1237, 0.0
        %1245 = vadd.xlane.f32.xlu0 %v1244
        %v1246 = vpop.xlane.xlu0 %1245
        %v1247 = vrcp.pop %v1240
        %v1248 = vrcp.pop %v1243
        %v1249 = vrcp.pop %v1246
        %v1250 = vmul.f32 %v1233, %v1247
        %v1251 = vmul.f32 %v1235, %v1248
        %v1252 = vmul.f32 %v1237, %v1249
        %1253 = vrot.lane.b32.xlu0 %v853, 48
        %v1254 = vpop.permute.xlu0 %1253
        %1255 = vrot.lane.b32.xlu0 %v858, 48
        %v1256 = vpop.permute.xlu0 %1255
        %1257 = vrot.lane.b32.xlu0 %v863, 48
        %v1258 = vpop.permute.xlu0 %1257
        %v1263 = vsel %vm978, %v1250, 0
        %v1266 = vsel %vm978, %v1251, 0
        %v1269 = vsel %vm978, %v1252, 0
        %1271 = vmatprep.subr.mxu0 0.0
        %1272 = vmatpush1.msra.mxu0 0.0
        %1273 = vmatprep.subr.mxu0 0.0
        %1274 = vmatpush1.msra.mxu0 0.0
        %1275 = vmatprep.subr.mxu0 0.0
        %1276 = vmatpush1.msra.mxu0 0.0
        %1277 = vmatprep.subr.mxu0 0.0
        %1278 = vmatpush1.msra.mxu0 0.0
        %1279 = vmatprep.subr.mxu0 0.0
        %1280 = vmatpush1.msra.mxu0 0.0
        %1281 = vmatprep.subr.mxu0 0.0
        %1282 = vmatpush1.msra.mxu0 0.0
        %1283 = vmatprep.subr.mxu0 0.0
        %1284 = vmatpush1.msra.mxu0 0.0
        %1285 = vmatprep.subr.mxu0 0.0
        %1286 = vmatpush1.msra.mxu0 0.0
        %1287 = vmatprep.subr.mxu0 0.0
        %1288 = vmatpush1.msra.mxu0 0.0
        %1289 = vmatprep.subr.mxu0 0.0
        %1290 = vmatpush1.msra.mxu0 0.0
        %1291 = vmatprep.subr.mxu0 0.0
        %1292 = vmatpush1.msra.mxu0 0.0
        %1293 = vmatprep.subr.mxu0 0.0
        %1294 = vmatpush1.msra.mxu0 0.0
        %1295 = vmatprep.subr.mxu0 0.0
        %1296 = vmatpush1.msra.mxu0 0.0
        %1297 = vmatprep.subr.mxu0 0.0
        %1298 = vmatpush1.msra.mxu0 %v1258
        %1299 = vmatprep.subr.mxu0 0.0
        %1300 = vmatpush1.msra.mxu0 %v1256
        %1301 = vmatprep.subr.mxu0 0.0
        %1302 = vmatpush1.msra.mxu0 %v1254
        %1303 = vmatprep.subr.mxu0 0.0
        %1304 = vmatpush2.msra.mxu0 0.0
        %1305 = vmatprep.subr.mxu0 0.0
        %1306 = vmatpush2.msra.mxu0 0.0
        %1307 = vmatprep.subr.mxu0 0.0
        %1308 = vmatpush2.msra.mxu0 0.0
        %1309 = vmatprep.subr.mxu0 0.0
        %1310 = vmatpush2.msra.mxu0 0.0
        %1311 = vmatprep.subr.mxu0 0.0
        %1312 = vmatpush2.msra.mxu0 0.0
        %1313 = vmatprep.subr.mxu0 0.0
        %1314 = vmatpush2.msra.mxu0 0.0
        %1315 = vmatprep.subr.mxu0 0.0
        %1316 = vmatpush2.msra.mxu0 0.0
        %1317 = vmatprep.subr.mxu0 0.0
        %1318 = vmatpush2.msra.mxu0 0.0
        %1319 = vmatprep.subr.mxu0 0.0
        %1320 = vmatpush2.msra.mxu0 0.0
        %1321 = vmatprep.subr.mxu0 0.0
        %1322 = vmatpush2.msra.mxu0 0.0
        %1323 = vmatprep.subr.mxu0 0.0
        %1324 = vmatpush2.msra.mxu0 0.0
        %1325 = vmatprep.subr.mxu0 0.0
        %1326 = vmatpush2.msra.mxu0 0.0
        %1327 = vmatprep.subr.mxu0 0.0
        %1328 = vmatpush2.msra.mxu0 0.0
        %1329 = vmatprep.subr.mxu0 0.0
        %1330 = vmatpush2.msra.mxu0 0.0
        %1331 = vmatprep.subr.mxu0 0.0
        %1332 = vmatpush2.msra.mxu0 0.0
        %1333 = vmatprep.subr.mxu0 0.0
        %1334 = vmatpush2.msra.mxu0 0.0
        %1335 = vmatprep.mubr.f32.mxu0 0.0
        %1336 = vmatmul.mubr.f32.gmra.mxu0 %v1263
        %v1337 = vpop.f32.mrf.mxu0
        %v1338 = vadd.f32 0.0, %v1337
        %v1339 = vpop.f32.mrf.mxu0
        %1340 = vmatprep.mubr.f32.mxu0 0.0
        %1341 = vmatmul.mubr.f32.gmra.mxu0 %v1266
        %v1342 = vpop.f32.mrf.mxu0
        %v1343 = vadd.f32 0.0, %v1342
        %v1344 = vpop.f32.mrf.mxu0
        %1345 = vmatprep.mubr.f32.mxu0 0.0
        %1346 = vmatmul.mubr.f32.gmra.mxu0 %v1269
        %v1347 = vpop.f32.mrf.mxu0
        %v1348 = vadd.f32 0.0, %v1347
        %v1349 = vpop.f32.mrf.mxu0
        %1350 = vdwg.mxu0
        %v1352 = vsel %vm879, %v1338, 0
        %v1355 = vsel %vm879, %v1343, 0
        %v1358 = vsel %vm879, %v1348, 0
        %1360 = vmatprep.subr.mxu0 0.0
        %1361 = vmatpush1.msra.mxu0 0.0
        %1362 = vmatprep.subr.mxu0 0.0
        %1363 = vmatpush1.msra.mxu0 0.0
        %1364 = vmatprep.subr.mxu0 0.0
        %1365 = vmatpush1.msra.mxu0 0.0
        %1366 = vmatprep.subr.mxu0 0.0
        %1367 = vmatpush1.msra.mxu0 0.0
        %1368 = vmatprep.subr.mxu0 0.0
        %1369 = vmatpush1.msra.mxu0 0.0
        %1370 = vmatprep.subr.mxu0 0.0
        %1371 = vmatpush1.msra.mxu0 0.0
        %1372 = vmatprep.subr.mxu0 0.0
        %1373 = vmatpush1.msra.mxu0 0.0
        %1374 = vmatprep.subr.mxu0 0.0
        %1375 = vmatpush1.msra.mxu0 0.0
        %1376 = vmatprep.subr.mxu0 0.0
        %1377 = vmatpush1.msra.mxu0 0.0
        %1378 = vmatprep.subr.mxu0 0.0
        %1379 = vmatpush1.msra.mxu0 0.0
        %1380 = vmatprep.subr.mxu0 0.0
        %1381 = vmatpush1.msra.mxu0 0.0
        %1382 = vmatprep.subr.mxu0 0.0
        %1383 = vmatpush1.msra.mxu0 0.0
        %1384 = vmatprep.subr.mxu0 0.0
        %1385 = vmatpush1.msra.mxu0 0.0
        %1386 = vmatprep.subr.mxu0 0.0
        %1387 = vmatpush1.msra.mxu0 0.0
        %1388 = vmatprep.subr.mxu0 0.0
        %1389 = vmatpush1.msra.mxu0 %v869
        %1390 = vmatprep.subr.mxu0 0.0
        %1391 = vmatpush1.msra.mxu0 %v868
        %1392 = vmatprep.subr.mxu0 0.0
        %1393 = vmatpush2.msra.mxu0 0.0
        %1394 = vmatprep.subr.mxu0 0.0
        %1395 = vmatpush2.msra.mxu0 0.0
        %1396 = vmatprep.subr.mxu0 0.0
        %1397 = vmatpush2.msra.mxu0 0.0
        %1398 = vmatprep.subr.mxu0 0.0
        %1399 = vmatpush2.msra.mxu0 0.0
        %1400 = vmatprep.subr.mxu0 0.0
        %1401 = vmatpush2.msra.mxu0 0.0
        %1402 = vmatprep.subr.mxu0 0.0
        %1403 = vmatpush2.msra.mxu0 0.0
        %1404 = vmatprep.subr.mxu0 0.0
        %1405 = vmatpush2.msra.mxu0 0.0
        %1406 = vmatprep.subr.mxu0 0.0
        %1407 = vmatpush2.msra.mxu0 0.0
        %1408 = vmatprep.subr.mxu0 0.0
        %1409 = vmatpush2.msra.mxu0 0.0
        %1410 = vmatprep.subr.mxu0 0.0
        %1411 = vmatpush2.msra.mxu0 0.0
        %1412 = vmatprep.subr.mxu0 0.0
        %1413 = vmatpush2.msra.mxu0 0.0
        %1414 = vmatprep.subr.mxu0 0.0
        %1415 = vmatpush2.msra.mxu0 0.0
        %1416 = vmatprep.subr.mxu0 0.0
        %1417 = vmatpush2.msra.mxu0 0.0
        %1418 = vmatprep.subr.mxu0 0.0
        %1419 = vmatpush2.msra.mxu0 0.0
        %1420 = vmatprep.subr.mxu0 0.0
        %1421 = vmatpush2.msra.mxu0 0.0
        %1422 = vmatprep.subr.mxu0 0.0
        %1423 = vmatpush2.msra.mxu0 0.0
        %1424 = vmatprep.mubr.f32.mxu0 0.0
        %1425 = vmatmul.mubr.f32.gmra.mxu0 %v1352
        %v1426 = vpop.f32.mrf.mxu0
        %v1427 = vadd.f32 0.0, %v1426
        %v1428 = vpop.f32.mrf.mxu0
        %1429 = vmatprep.mubr.f32.mxu0 0.0
        %1430 = vmatmul.mubr.f32.gmra.mxu0 %v1355
        %v1431 = vpop.f32.mrf.mxu0
        %v1432 = vadd.f32 0.0, %v1431
        %v1433 = vpop.f32.mrf.mxu0
        %1434 = vmatprep.mubr.f32.mxu0 0.0
        %1435 = vmatmul.mubr.f32.gmra.mxu0 %v1358
        %v1436 = vpop.f32.mrf.mxu0
        %v1437 = vadd.f32 0.0, %v1436
        %v1438 = vpop.f32.mrf.mxu0
        %1439 = vdwg.mxu0
        %v1441 = vsel %vm879, %v1097, 0
        %v1444 = vsel %vm879, %v1102, 0
        %v1447 = vsel %vm879, %v1107, 0
        %1449 = vmatprep.subr.mxu0 0.0
        %1450 = vmatpush1.msra.mxu0 0.0
        %1451 = vmatprep.subr.mxu0 0.0
        %1452 = vmatpush1.msra.mxu0 0.0
        %1453 = vmatprep.subr.mxu0 0.0
        %1454 = vmatpush1.msra.mxu0 0.0
        %1455 = vmatprep.subr.mxu0 0.0
        %1456 = vmatpush1.msra.mxu0 0.0
        %1457 = vmatprep.subr.mxu0 0.0
        %1458 = vmatpush1.msra.mxu0 0.0
        %1459 = vmatprep.subr.mxu0 0.0
        %1460 = vmatpush1.msra.mxu0 0.0
        %1461 = vmatprep.subr.mxu0 0.0
        %1462 = vmatpush1.msra.mxu0 0.0
        %1463 = vmatprep.subr.mxu0 0.0
        %1464 = vmatpush1.msra.mxu0 0.0
        %1465 = vmatprep.subr.mxu0 0.0
        %1466 = vmatpush1.msra.mxu0 0.0
        %1467 = vmatprep.subr.mxu0 0.0
        %1468 = vmatpush1.msra.mxu0 0.0
        %1469 = vmatprep.subr.mxu0 0.0
        %1470 = vmatpush1.msra.mxu0 0.0
        %1471 = vmatprep.subr.mxu0 0.0
        %1472 = vmatpush1.msra.mxu0 0.0
        %1473 = vmatprep.subr.mxu0 0.0
        %1474 = vmatpush1.msra.mxu0 0.0
        %1475 = vmatprep.subr.mxu0 0.0
        %1476 = vmatpush1.msra.mxu0 0.0
        %1477 = vmatprep.subr.mxu0 0.0
        %1478 = vmatpush1.msra.mxu0 %v867
        %1479 = vmatprep.subr.mxu0 0.0
        %1480 = vmatpush1.msra.mxu0 %v866
        %1481 = vmatprep.subr.mxu0 0.0
        %1482 = vmatpush2.msra.mxu0 0.0
        %1483 = vmatprep.subr.mxu0 0.0
        %1484 = vmatpush2.msra.mxu0 0.0
        %1485 = vmatprep.subr.mxu0 0.0
        %1486 = vmatpush2.msra.mxu0 0.0
        %1487 = vmatprep.subr.mxu0 0.0
        %1488 = vmatpush2.msra.mxu0 0.0
        %1489 = vmatprep.subr.mxu0 0.0
        %1490 = vmatpush2.msra.mxu0 0.0
        %1491 = vmatprep.subr.mxu0 0.0
        %1492 = vmatpush2.msra.mxu0 0.0
        %1493 = vmatprep.subr.mxu0 0.0
        %1494 = vmatpush2.msra.mxu0 0.0
        %1495 = vmatprep.subr.mxu0 0.0
        %1496 = vmatpush2.msra.mxu0 0.0
        %1497 = vmatprep.subr.mxu0 0.0
        %1498 = vmatpush2.msra.mxu0 0.0
        %1499 = vmatprep.subr.mxu0 0.0
        %1500 = vmatpush2.msra.mxu0 0.0
        %1501 = vmatprep.subr.mxu0 0.0
        %1502 = vmatpush2.msra.mxu0 0.0
        %1503 = vmatprep.subr.mxu0 0.0
        %1504 = vmatpush2.msra.mxu0 0.0
        %1505 = vmatprep.subr.mxu0 0.0
        %1506 = vmatpush2.msra.mxu0 0.0
        %1507 = vmatprep.subr.mxu0 0.0
        %1508 = vmatpush2.msra.mxu0 0.0
        %1509 = vmatprep.subr.mxu0 0.0
        %1510 = vmatpush2.msra.mxu0 0.0
        %1511 = vmatprep.subr.mxu0 0.0
        %1512 = vmatpush2.msra.mxu0 0.0
        %1513 = vmatprep.mubr.f32.mxu0 0.0
        %1514 = vmatmul.mubr.f32.gmra.mxu0 %v1441
        %v1515 = vpop.f32.mrf.mxu0
        %v1516 = vadd.f32 %v1427, %v1515
        %v1517 = vpop.f32.mrf.mxu0
        %1518 = vmatprep.mubr.f32.mxu0 0.0
        %1519 = vmatmul.mubr.f32.gmra.mxu0 %v1444
        %v1520 = vpop.f32.mrf.mxu0
        %v1521 = vadd.f32 %v1432, %v1520
        %v1522 = vpop.f32.mrf.mxu0
        %1523 = vmatprep.mubr.f32.mxu0 0.0
        %1524 = vmatmul.mubr.f32.gmra.mxu0 %v1447
        %v1525 = vpop.f32.mrf.mxu0
        %v1526 = vadd.f32 %v1437, %v1525
        %v1527 = vpop.f32.mrf.mxu0
        %1528 = vdwg.mxu0
        %v1529 = vadd.f32 %v689, %v1516
        %v1530 = vadd.f32 %v694, %v1521
        %v1531 = vadd.f32 %v699, %v1526
        %v1532 = vld [vmem:[%s8] sm:$0x1]
        %v1534 = vlaneseq
        %v1535 = vshrl.u32 %v1534, 7
        %v1536 = vsub.s32 0, %v1535
        %v1537 = vrot.slane %v1532, %v1536
        %v1539 = vadd.f32 %v1529, %v1537
        %v1540 = vadd.f32 %v1530, %v1537
        %v1541 = vadd.f32 %v1531, %v1537
        %v1542 = vld [vmem:[%s9] sm:$0x1]
        %v1543 = vld [vmem:[%s10] sm:$0x1]
        %v1544 = vsel %vm707, %v1539, 0.0
        %1545 = vadd.xlane.f32.xlu0 %v1544
        %v1546 = vpop.xlane.xlu0 %1545
        %v1547 = vsel %vm707, %v1540, 0.0
        %1548 = vadd.xlane.f32.xlu0 %v1547
        %v1549 = vpop.xlane.xlu0 %1548
        %v1550 = vsel %vm707, %v1541, 0.0
        %1551 = vadd.xlane.f32.xlu0 %v1550
        %v1552 = vpop.xlane.xlu0 %1551
        %v1553 = vmul.f32 %v1546, %v717
        %v1554 = vmul.f32 %v1549, %v717
        %v1555 = vmul.f32 %v1552, %v717
        %v1556 = vsub.f32 %v1539, %v1553
        %v1557 = vsub.f32 %v1540, %v1554
        %v1558 = vsub.f32 %v1541, %v1555
        %v1559 = vmul.f32 %v1556, %v1556
        %v1560 = vmul.f32 %v1557, %v1557
        %v1561 = vmul.f32 %v1558, %v1558
        %v1562 = vsel %vm707, %v1559, 0.0
        %1563 = vadd.xlane.f32.xlu0 %v1562
        %v1564 = vpop.xlane.xlu0 %1563
        %v1565 = vsel %vm707, %v1560, 0.0
        %1566 = vadd.xlane.f32.xlu0 %v1565
        %v1567 = vpop.xlane.xlu0 %1566
        %v1568 = vsel %vm707, %v1561, 0.0
        %1569 = vadd.xlane.f32.xlu0 %v1568
        %v1570 = vpop.xlane.xlu0 %1569
        %v1571 = vmul.f32 %v1564, %v717
        %v1572 = vmul.f32 %v1567, %v717
        %v1573 = vmul.f32 %v1570, %v717
        %v1574 = vadd.f32 %v1571, 1e-12
        %v1575 = vadd.f32 %v1572, 1e-12
        %v1576 = vadd.f32 %v1573, 1e-12
        %v1577 = vrsqrt.pop %v1574
        %v1578 = vrsqrt.pop %v1575
        %v1579 = vrsqrt.pop %v1576
        %v1580 = vmul.f32 %v1556, %v1577
        %v1581 = vmul.f32 %v1557, %v1578
        %v1582 = vmul.f32 %v1558, %v1579
        %v1584 = vlaneseq
        %v1585 = vshrl.u32 %v1584, 7
        %v1586 = vsub.s32 0, %v1585
        %v1587 = vrot.slane %v1542, %v1586
        %v1589 = vmul.f32 %v1580, %v1587
        %v1590 = vmul.f32 %v1581, %v1587
        %v1591 = vmul.f32 %v1582, %v1587
        %v1593 = vlaneseq
        %v1594 = vshrl.u32 %v1593, 7
        %v1595 = vsub.s32 0, %v1594
        %v1596 = vrot.slane %v1543, %v1595
        %v1598 = vadd.f32 %v1589, %v1596
        %v1599 = vadd.f32 %v1590, %v1596
        %v1600 = vadd.f32 %v1591, %v1596
        %v1601 = vld [vmem:[%s11] sm:$0xff]
        %v1602 = vld [vmem:[%s11 + $0x8] sm:$0xff]
        %v1603 = vld [vmem:[%s11 + $0x10] sm:$0xff]
        %v1604 = vld [vmem:[%s11 + $0x18] sm:$0xff]
        %v1605 = vld [vmem:[%s12] sm:$0x1]
        %v1607 = vlaneseq
        %v1608 = vshrl.u32 %v1607, 7
        %v1609 = vsub.s32 0, %v1608
        %v1610 = vrot.slane %v1605, %v1609
        %v1613 = vsel %vm707, %v1598, 0
        %v1616 = vsel %vm707, %v1599, 0
        %v1619 = vsel %vm707, %v1600, 0
        %1621 = vmatprep.subr.mxu0 0.0
        %1622 = vmatpush1.msra.mxu0 0.0
        %1623 = vmatprep.subr.mxu0 0.0
        %1624 = vmatpush1.msra.mxu0 0.0
        %1625 = vmatprep.subr.mxu0 0.0
        %1626 = vmatpush1.msra.mxu0 0.0
        %1627 = vmatprep.subr.mxu0 0.0
        %1628 = vmatpush1.msra.mxu0 0.0
        %1629 = vmatprep.subr.mxu0 0.0
        %1630 = vmatpush1.msra.mxu0 0.0
        %1631 = vmatprep.subr.mxu0 0.0
        %1632 = vmatpush1.msra.mxu0 0.0
        %1633 = vmatprep.subr.mxu0 0.0
        %1634 = vmatpush1.msra.mxu0 0.0
        %1635 = vmatprep.subr.mxu0 0.0
        %1636 = vmatpush1.msra.mxu0 0.0
        %1637 = vmatprep.subr.mxu0 0.0
        %1638 = vmatpush1.msra.mxu0 0.0
        %1639 = vmatprep.subr.mxu0 0.0
        %1640 = vmatpush1.msra.mxu0 0.0
        %1641 = vmatprep.subr.mxu0 0.0
        %1642 = vmatpush1.msra.mxu0 0.0
        %1643 = vmatprep.subr.mxu0 0.0
        %1644 = vmatpush1.msra.mxu0 0.0
        %1645 = vmatprep.subr.mxu0 0.0
        %1646 = vmatpush1.msra.mxu0 %v1604
        %1647 = vmatprep.subr.mxu0 0.0
        %1648 = vmatpush1.msra.mxu0 %v1603
        %1649 = vmatprep.subr.mxu0 0.0
        %1650 = vmatpush1.msra.mxu0 %v1602
        %1651 = vmatprep.subr.mxu0 0.0
        %1652 = vmatpush1.msra.mxu0 %v1601
        %1653 = vmatprep.subr.mxu0 0.0
        %1654 = vmatpush2.msra.mxu0 0.0
        %1655 = vmatprep.subr.mxu0 0.0
        %1656 = vmatpush2.msra.mxu0 0.0
        %1657 = vmatprep.subr.mxu0 0.0
        %1658 = vmatpush2.msra.mxu0 0.0
        %1659 = vmatprep.subr.mxu0 0.0
        %1660 = vmatpush2.msra.mxu0 0.0
        %1661 = vmatprep.subr.mxu0 0.0
        %1662 = vmatpush2.msra.mxu0 0.0
        %1663 = vmatprep.subr.mxu0 0.0
        %1664 = vmatpush2.msra.mxu0 0.0
        %1665 = vmatprep.subr.mxu0 0.0
        %1666 = vmatpush2.msra.mxu0 0.0
        %1667 = vmatprep.subr.mxu0 0.0
        %1668 = vmatpush2.msra.mxu0 0.0
        %1669 = vmatprep.subr.mxu0 0.0
        %1670 = vmatpush2.msra.mxu0 0.0
        %1671 = vmatprep.subr.mxu0 0.0
        %1672 = vmatpush2.msra.mxu0 0.0
        %1673 = vmatprep.subr.mxu0 0.0
        %1674 = vmatpush2.msra.mxu0 0.0
        %1675 = vmatprep.subr.mxu0 0.0
        %1676 = vmatpush2.msra.mxu0 0.0
        %1677 = vmatprep.subr.mxu0 0.0
        %1678 = vmatpush2.msra.mxu0 0.0
        %1679 = vmatprep.subr.mxu0 0.0
        %1680 = vmatpush2.msra.mxu0 0.0
        %1681 = vmatprep.subr.mxu0 0.0
        %1682 = vmatpush2.msra.mxu0 0.0
        %1683 = vmatprep.subr.mxu0 0.0
        %1684 = vmatpush2.msra.mxu0 0.0
        %1685 = vmatprep.mubr.f32.mxu0 0.0
        %1686 = vmatmul.mubr.f32.gmra.mxu0 %v1613
        %v1687 = vpop.f32.mrf.mxu0
        %v1688 = vadd.f32 %v1610, %v1687
        %v1689 = vpop.f32.mrf.mxu0
        %1690 = vmatprep.mubr.f32.mxu0 0.0
        %1691 = vmatmul.mubr.f32.gmra.mxu0 %v1616
        %v1692 = vpop.f32.mrf.mxu0
        %v1693 = vadd.f32 %v1610, %v1692
        %v1694 = vpop.f32.mrf.mxu0
        %1695 = vmatprep.mubr.f32.mxu0 0.0
        %1696 = vmatmul.mubr.f32.gmra.mxu0 %v1619
        %v1697 = vpop.f32.mrf.mxu0
        %v1698 = vadd.f32 %v1610, %v1697
        %v1699 = vpop.f32.mrf.mxu0
        %1700 = vdwg.mxu0
        %v1701 = vmul.f32 %v1688, 0.5
        %v1702 = vmul.f32 %v1693, 0.5
        %v1703 = vmul.f32 %v1698, 0.5
        %v1704 = vmul.f32 %v1688, 0.70710677
        %v1705 = vmul.f32 %v1693, 0.70710677
        %v1706 = vmul.f32 %v1698, 0.70710677
        %vm1707 = vcmp.ge.f32.partialorder %v1704, 0.0
        %vm1708 = vcmp.ge.f32.partialorder %v1705, 0.0
        %vm1709 = vcmp.ge.f32.partialorder %v1706, 0.0
        %v1710 = vsel %vm1707, 1.0, -1.0
        %v1711 = vsel %vm1708, 1.0, -1.0
        %v1712 = vsel %vm1709, 1.0, -1.0
        %v1713 = vand.u32 2147483647, %v1704
        %v1714 = vand.u32 2147483647, %v1705
        %v1715 = vand.u32 2147483647, %v1706
        %v1716 = vmul.f32 %v1713, 0.3275911
        %v1717 = vmul.f32 %v1714, 0.3275911
        %v1718 = vmul.f32 %v1715, 0.3275911
        %v1719 = vadd.f32 %v1716, 1.0
        %v1720 = vadd.f32 %v1717, 1.0
        %v1721 = vadd.f32 %v1718, 1.0
        %v1722 = vrcp.pop %v1719
        %v1723 = vmul.f32 1.0, %v1722
        %v1724 = vrcp.pop %v1720
        %v1725 = vmul.f32 1.0, %v1724
        %v1726 = vrcp.pop %v1721
        %v1727 = vmul.f32 1.0, %v1726
        %v1728 = vmul.f32 %v1723, 1.0614054
        %v1729 = vmul.f32 %v1725, 1.0614054
        %v1730 = vmul.f32 %v1727, 1.0614054
        %v1731 = vadd.f32 %v1728, -1.4531521
        %v1732 = vadd.f32 %v1729, -1.4531521
        %v1733 = vadd.f32 %v1730, -1.4531521
        %v1734 = vmul.f32 %v1723, %v1731
        %v1735 = vmul.f32 %v1725, %v1732
        %v1736 = vmul.f32 %v1727, %v1733
        %v1737 = vadd.f32 %v1734, 1.4214138
        %v1738 = vadd.f32 %v1735, 1.4214138
        %v1739 = vadd.f32 %v1736, 1.4214138
        %v1740 = vmul.f32 %v1723, %v1737
        %v1741 = vmul.f32 %v1725, %v1738
        %v1742 = vmul.f32 %v1727, %v1739
        %v1743 = vadd.f32 %v1740, -0.28449672
        %v1744 = vadd.f32 %v1741, -0.28449672
        %v1745 = vadd.f32 %v1742, -0.28449672
        %v1746 = vmul.f32 %v1723, %v1743
        %v1747 = vmul.f32 %v1725, %v1744
        %v1748 = vmul.f32 %v1727, %v1745
        %v1749 = vadd.f32 %v1746, 0.2548296
        %v1750 = vadd.f32 %v1747, 0.2548296
        %v1751 = vadd.f32 %v1748, 0.2548296
        %v1752 = vmul.f32 %v1723, %v1749
        %v1753 = vmul.f32 %v1725, %v1750
        %v1754 = vmul.f32 %v1727, %v1751
        %v1755 = vsub.f32 0.0, %v1713
        %v1756 = vsub.f32 0.0, %v1714
        %v1757 = vsub.f32 0.0, %v1715
        %v1758 = vmul.f32 %v1755, %v1713
        %v1759 = vmul.f32 %v1756, %v1714
        %v1760 = vmul.f32 %v1757, %v1715
        %v1761 = vmul.f32 %v1758, 1.442695
        %v1762 = vpow.pop %v1761
        %v1763 = vmul.f32 %v1759, 1.442695
        %v1764 = vpow.pop %v1763
        %v1765 = vmul.f32 %v1760, 1.442695
        %v1766 = vpow.pop %v1765
        %v1767 = vmul.f32 %v1752, %v1762
        %v1768 = vmul.f32 %v1753, %v1764
        %v1769 = vmul.f32 %v1754, %v1766
        %v1770 = vsub.f32 1.0, %v1767
        %v1771 = vsub.f32 1.0, %v1768
        %v1772 = vsub.f32 1.0, %v1769
        %v1773 = vmul.f32 %v1710, %v1770
        %v1774 = vmul.f32 %v1711, %v1771
        %v1775 = vmul.f32 %v1712, %v1772
        %v1776 = vadd.f32 %v1773, 1.0
        %v1777 = vadd.f32 %v1774, 1.0
        %v1778 = vadd.f32 %v1775, 1.0
        %v1779 = vmul.f32 %v1701, %v1776
        %v1780 = vmul.f32 %v1702, %v1777
        %v1781 = vmul.f32 %v1703, %v1778
        %v1782 = vld [vmem:[%s13] sm:$0xff]
        %v1783 = vld [vmem:[%s13 + $0x8] sm:$0xff]
        %v1784 = vld [vmem:[%s13 + $0x10] sm:$0xff]
        %v1785 = vld [vmem:[%s13 + $0x18] sm:$0xff]
        %v1786 = vld [vmem:[%s13 + $0x20] sm:$0xff]
        %v1787 = vld [vmem:[%s13 + $0x28] sm:$0xff]
        %v1788 = vld [vmem:[%s13 + $0x30] sm:$0xff]
        %v1789 = vld [vmem:[%s13 + $0x38] sm:$0xff]
        %v1790 = vld [vmem:[%s14] sm:$0x1]
        %v1792 = vlaneseq
        %v1793 = vshrl.u32 %v1792, 7
        %v1794 = vsub.s32 0, %v1793
        %v1795 = vrot.slane %v1790, %v1794
        %vm1797 = vcmask 523264
        %v1799 = vsel %vm1797, %v1779, 0
        %v1802 = vsel %vm1797, %v1780, 0
        %v1805 = vsel %vm1797, %v1781, 0
        %1807 = vmatprep.subr.mxu0 0.0
        %1808 = vmatpush1.msra.mxu0 0.0
        %1809 = vmatprep.subr.mxu0 0.0
        %1810 = vmatpush1.msra.mxu0 0.0
        %1811 = vmatprep.subr.mxu0 0.0
        %1812 = vmatpush1.msra.mxu0 0.0
        %1813 = vmatprep.subr.mxu0 0.0
        %1814 = vmatpush1.msra.mxu0 0.0
        %1815 = vmatprep.subr.mxu0 0.0
        %1816 = vmatpush1.msra.mxu0 0.0
        %1817 = vmatprep.subr.mxu0 0.0
        %1818 = vmatpush1.msra.mxu0 0.0
        %1819 = vmatprep.subr.mxu0 0.0
        %1820 = vmatpush1.msra.mxu0 0.0
        %1821 = vmatprep.subr.mxu0 0.0
        %1822 = vmatpush1.msra.mxu0 0.0
        %1823 = vmatprep.subr.mxu0 0.0
        %1824 = vmatpush1.msra.mxu0 %v1789
        %1825 = vmatprep.subr.mxu0 0.0
        %1826 = vmatpush1.msra.mxu0 %v1788
        %1827 = vmatprep.subr.mxu0 0.0
        %1828 = vmatpush1.msra.mxu0 %v1787
        %1829 = vmatprep.subr.mxu0 0.0
        %1830 = vmatpush1.msra.mxu0 %v1786
        %1831 = vmatprep.subr.mxu0 0.0
        %1832 = vmatpush1.msra.mxu0 %v1785
        %1833 = vmatprep.subr.mxu0 0.0
        %1834 = vmatpush1.msra.mxu0 %v1784
        %1835 = vmatprep.subr.mxu0 0.0
        %1836 = vmatpush1.msra.mxu0 %v1783
        %1837 = vmatprep.subr.mxu0 0.0
        %1838 = vmatpush1.msra.mxu0 %v1782
        %1839 = vmatprep.subr.mxu0 0.0
        %1840 = vmatpush2.msra.mxu0 0.0
        %1841 = vmatprep.subr.mxu0 0.0
        %1842 = vmatpush2.msra.mxu0 0.0
        %1843 = vmatprep.subr.mxu0 0.0
        %1844 = vmatpush2.msra.mxu0 0.0
        %1845 = vmatprep.subr.mxu0 0.0
        %1846 = vmatpush2.msra.mxu0 0.0
        %1847 = vmatprep.subr.mxu0 0.0
        %1848 = vmatpush2.msra.mxu0 0.0
        %1849 = vmatprep.subr.mxu0 0.0
        %1850 = vmatpush2.msra.mxu0 0.0
        %1851 = vmatprep.subr.mxu0 0.0
        %1852 = vmatpush2.msra.mxu0 0.0
        %1853 = vmatprep.subr.mxu0 0.0
        %1854 = vmatpush2.msra.mxu0 0.0
        %1855 = vmatprep.subr.mxu0 0.0
        %1856 = vmatpush2.msra.mxu0 0.0
        %1857 = vmatprep.subr.mxu0 0.0
        %1858 = vmatpush2.msra.mxu0 0.0
        %1859 = vmatprep.subr.mxu0 0.0
        %1860 = vmatpush2.msra.mxu0 0.0
        %1861 = vmatprep.subr.mxu0 0.0
        %1862 = vmatpush2.msra.mxu0 0.0
        %1863 = vmatprep.subr.mxu0 0.0
        %1864 = vmatpush2.msra.mxu0 0.0
        %1865 = vmatprep.subr.mxu0 0.0
        %1866 = vmatpush2.msra.mxu0 0.0
        %1867 = vmatprep.subr.mxu0 0.0
        %1868 = vmatpush2.msra.mxu0 0.0
        %1869 = vmatprep.subr.mxu0 0.0
        %1870 = vmatpush2.msra.mxu0 0.0
        %1871 = vmatprep.mubr.f32.mxu0 0.0
        %1872 = vmatmul.mubr.f32.gmra.mxu0 %v1799
        %v1873 = vpop.f32.mrf.mxu0
        %v1874 = vadd.f32 %v1795, %v1873
        %v1875 = vpop.f32.mrf.mxu0
        %1876 = vmatprep.mubr.f32.mxu0 0.0
        %1877 = vmatmul.mubr.f32.gmra.mxu0 %v1802
        %v1878 = vpop.f32.mrf.mxu0
        %v1879 = vadd.f32 %v1795, %v1878
        %v1880 = vpop.f32.mrf.mxu0
        %1881 = vmatprep.mubr.f32.mxu0 0.0
        %1882 = vmatmul.mubr.f32.gmra.mxu0 %v1805
        %v1883 = vpop.f32.mrf.mxu0
        %v1884 = vadd.f32 %v1795, %v1883
        %v1885 = vpop.f32.mrf.mxu0
        %1886 = vdwg.mxu0
        %v1887 = vadd.f32 %v1539, %v1874
        %v1888 = vadd.f32 %v1540, %v1879
        %v1889 = vadd.f32 %v1541, %v1884
        %s1890 = scalar_lea.vmem %s3, 1
        %v1891 = vld [vmem:[%s1890] sm:$0x1]
        %s1892 = scalar_lea.vmem %s4, 1
        %v1893 = vld [vmem:[%s1892] sm:$0x1]
        %v1894 = vsel %vm707, %v1887, 0.0
        %1895 = vadd.xlane.f32.xlu0 %v1894
        %v1896 = vpop.xlane.xlu0 %1895
        %v1897 = vsel %vm707, %v1888, 0.0
        %1898 = vadd.xlane.f32.xlu0 %v1897
        %v1899 = vpop.xlane.xlu0 %1898
        %v1900 = vsel %vm707, %v1889, 0.0
        %1901 = vadd.xlane.f32.xlu0 %v1900
        %v1902 = vpop.xlane.xlu0 %1901
        %v1903 = vmul.f32 %v1896, %v717
        %v1904 = vmul.f32 %v1899, %v717
        %v1905 = vmul.f32 %v1902, %v717
        %v1906 = vsub.f32 %v1887, %v1903
        %v1907 = vsub.f32 %v1888, %v1904
        %v1908 = vsub.f32 %v1889, %v1905
        %v1909 = vmul.f32 %v1906, %v1906
        %v1910 = vmul.f32 %v1907, %v1907
        %v1911 = vmul.f32 %v1908, %v1908
        %v1912 = vsel %vm707, %v1909, 0.0
        %1913 = vadd.xlane.f32.xlu0 %v1912
        %v1914 = vpop.xlane.xlu0 %1913
        %v1915 = vsel %vm707, %v1910, 0.0
        %1916 = vadd.xlane.f32.xlu0 %v1915
        %v1917 = vpop.xlane.xlu0 %1916
        %v1918 = vsel %vm707, %v1911, 0.0
        %1919 = vadd.xlane.f32.xlu0 %v1918
        %v1920 = vpop.xlane.xlu0 %1919
        %v1921 = vmul.f32 %v1914, %v717
        %v1922 = vmul.f32 %v1917, %v717
        %v1923 = vmul.f32 %v1920, %v717
        %v1924 = vadd.f32 %v1921, 1e-12
        %v1925 = vadd.f32 %v1922, 1e-12
        %v1926 = vadd.f32 %v1923, 1e-12
        %v1927 = vrsqrt.pop %v1924
        %v1928 = vrsqrt.pop %v1925
        %v1929 = vrsqrt.pop %v1926
        %v1930 = vmul.f32 %v1906, %v1927
        %v1931 = vmul.f32 %v1907, %v1928
        %v1932 = vmul.f32 %v1908, %v1929
        %v1934 = vlaneseq
        %v1935 = vshrl.u32 %v1934, 7
        %v1936 = vsub.s32 0, %v1935
        %v1937 = vrot.slane %v1891, %v1936
        %v1939 = vmul.f32 %v1930, %v1937
        %v1940 = vmul.f32 %v1931, %v1937
        %v1941 = vmul.f32 %v1932, %v1937
        %v1943 = vlaneseq
        %v1944 = vshrl.u32 %v1943, 7
        %v1945 = vsub.s32 0, %v1944
        %v1946 = vrot.slane %v1893, %v1945
        %v1948 = vadd.f32 %v1939, %v1946
        %v1949 = vadd.f32 %v1940, %v1946
        %v1950 = vadd.f32 %v1941, %v1946
        %s1951 = scalar_lea.vmem %s5, 32
        %v1952 = vld [vmem:[%s1951] sm:$0xff]
        %v1953 = vld [vmem:[%s1951 + $0x8] sm:$0xff]
        %v1954 = vld [vmem:[%s1951 + $0x10] sm:$0xff]
        %v1955 = vld [vmem:[%s1951 + $0x18] sm:$0xff]
        %s1956 = scalar_lea.vmem %s6, 1
        %v1957 = vld [vmem:[%s1956] sm:$0x1]
        %v1959 = vlaneseq
        %v1960 = vshrl.u32 %v1959, 7
        %v1961 = vsub.s32 0, %v1960
        %v1962 = vrot.slane %v1957, %v1961
        %v1965 = vsel %vm707, %v1948, 0
        %v1968 = vsel %vm707, %v1949, 0
        %v1971 = vsel %vm707, %v1950, 0
        %1973 = vmatprep.subr.mxu0 0.0
        %1974 = vmatpush1.msra.mxu0 0.0
        %1975 = vmatprep.subr.mxu0 0.0
        %1976 = vmatpush1.msra.mxu0 0.0
        %1977 = vmatprep.subr.mxu0 0.0
        %1978 = vmatpush1.msra.mxu0 0.0
        %1979 = vmatprep.subr.mxu0 0.0
        %1980 = vmatpush1.msra.mxu0 0.0
        %1981 = vmatprep.subr.mxu0 0.0
        %1982 = vmatpush1.msra.mxu0 0.0
        %1983 = vmatprep.subr.mxu0 0.0
        %1984 = vmatpush1.msra.mxu0 0.0
        %1985 = vmatprep.subr.mxu0 0.0
        %1986 = vmatpush1.msra.mxu0 0.0
        %1987 = vmatprep.subr.mxu0 0.0
        %1988 = vmatpush1.msra.mxu0 0.0
        %1989 = vmatprep.subr.mxu0 0.0
        %1990 = vmatpush1.msra.mxu0 0.0
        %1991 = vmatprep.subr.mxu0 0.0
        %1992 = vmatpush1.msra.mxu0 0.0
        %1993 = vmatprep.subr.mxu0 0.0
        %1994 = vmatpush1.msra.mxu0 0.0
        %1995 = vmatprep.subr.mxu0 0.0
        %1996 = vmatpush1.msra.mxu0 0.0
        %1997 = vmatprep.subr.mxu0 0.0
        %1998 = vmatpush1.msra.mxu0 %v1955
        %1999 = vmatprep.subr.mxu0 0.0
        %2000 = vmatpush1.msra.mxu0 %v1954
        %2001 = vmatprep.subr.mxu0 0.0
        %2002 = vmatpush1.msra.mxu0 %v1953
        %2003 = vmatprep.subr.mxu0 0.0
        %2004 = vmatpush1.msra.mxu0 %v1952
        %2005 = vmatprep.subr.mxu0 0.0
        %2006 = vmatpush2.msra.mxu0 0.0
        %2007 = vmatprep.subr.mxu0 0.0
        %2008 = vmatpush2.msra.mxu0 0.0
        %2009 = vmatprep.subr.mxu0 0.0
        %2010 = vmatpush2.msra.mxu0 0.0
        %2011 = vmatprep.subr.mxu0 0.0
        %2012 = vmatpush2.msra.mxu0 0.0
        %2013 = vmatprep.subr.mxu0 0.0
        %2014 = vmatpush2.msra.mxu0 0.0
        %2015 = vmatprep.subr.mxu0 0.0
        %2016 = vmatpush2.msra.mxu0 0.0
        %2017 = vmatprep.subr.mxu0 0.0
        %2018 = vmatpush2.msra.mxu0 0.0
        %2019 = vmatprep.subr.mxu0 0.0
        %2020 = vmatpush2.msra.mxu0 0.0
        %2021 = vmatprep.subr.mxu0 0.0
        %2022 = vmatpush2.msra.mxu0 0.0
        %2023 = vmatprep.subr.mxu0 0.0
        %2024 = vmatpush2.msra.mxu0 0.0
        %2025 = vmatprep.subr.mxu0 0.0
        %2026 = vmatpush2.msra.mxu0 0.0
        %2027 = vmatprep.subr.mxu0 0.0
        %2028 = vmatpush2.msra.mxu0 0.0
        %2029 = vmatprep.subr.mxu0 0.0
        %2030 = vmatpush2.msra.mxu0 0.0
        %2031 = vmatprep.subr.mxu0 0.0
        %2032 = vmatpush2.msra.mxu0 0.0
        %2033 = vmatprep.subr.mxu0 0.0
        %2034 = vmatpush2.msra.mxu0 0.0
        %2035 = vmatprep.subr.mxu0 0.0
        %2036 = vmatpush2.msra.mxu0 0.0
        %2037 = vmatprep.mubr.f32.mxu0 0.0
        %2038 = vmatmul.mubr.f32.gmra.mxu0 %v1965
        %v2039 = vpop.f32.mrf.mxu0
        %v2040 = vadd.f32 %v1962, %v2039
        %v2041 = vpop.f32.mrf.mxu0
        %2042 = vmatprep.mubr.f32.mxu0 0.0
        %2043 = vmatmul.mubr.f32.gmra.mxu0 %v1968
        %v2044 = vpop.f32.mrf.mxu0
        %v2045 = vadd.f32 %v1962, %v2044
        %v2046 = vpop.f32.mrf.mxu0
        %2047 = vmatprep.mubr.f32.mxu0 0.0
        %2048 = vmatmul.mubr.f32.gmra.mxu0 %v1971
        %v2049 = vpop.f32.mrf.mxu0
        %v2050 = vadd.f32 %v1962, %v2049
        %v2051 = vpop.f32.mrf.mxu0
        %2052 = vdwg.mxu0
        %s2053 = scalar_lea.vmem %s7, 32
        %v2054 = vld [vmem:[%s2053] sm:$0xff]
        %v2055 = vld [vmem:[%s2053 + $0x8] sm:$0xff]
        %v2056 = vld [vmem:[%s2053 + $0x10] sm:$0xff]
        %v2057 = vld [vmem:[%s2053 + $0x18] sm:$0xff]
        %2061 = vrot.lane.b32.xlu0 %v2040, 96
        %v2062 = vpop.permute.xlu0 %2061
        %2063 = vrot.lane.b32.xlu0 %v2045, 96
        %v2064 = vpop.permute.xlu0 %2063
        %2065 = vrot.lane.b32.xlu0 %v2050, 96
        %v2066 = vpop.permute.xlu0 %2065
        %v2067 = vsel %vm879, %v2040, 0
        %v2069 = vsel %vm879, %v2045, 0
        %v2071 = vsel %vm879, %v2050, 0
        %v2073 = vsel %vm879, %v2062, 0
        %v2075 = vsel %vm879, %v2064, 0
        %v2077 = vsel %vm879, %v2066, 0
        %2079 = vmatprep.subr.mxu0 0.0
        %2080 = vmatpush1.xpose.msra.mxu0 0.0
        %2081 = vmatprep.subr.mxu0 0.0
        %2082 = vmatpush1.xpose.msra.mxu0 0.0
        %2083 = vmatprep.subr.mxu0 0.0
        %2084 = vmatpush1.xpose.msra.mxu0 0.0
        %2085 = vmatprep.subr.mxu0 0.0
        %2086 = vmatpush1.xpose.msra.mxu0 0.0
        %2087 = vmatprep.subr.mxu0 0.0
        %2088 = vmatpush1.xpose.msra.mxu0 0.0
        %2089 = vmatprep.subr.mxu0 0.0
        %2090 = vmatpush1.xpose.msra.mxu0 0.0
        %2091 = vmatprep.subr.mxu0 0.0
        %2092 = vmatpush1.xpose.msra.mxu0 0.0
        %2093 = vmatprep.subr.mxu0 0.0
        %2094 = vmatpush1.xpose.msra.mxu0 0.0
        %2095 = vmatprep.subr.mxu0 0.0
        %2096 = vmatpush1.xpose.msra.mxu0 0.0
        %2097 = vmatprep.subr.mxu0 0.0
        %2098 = vmatpush1.xpose.msra.mxu0 0.0
        %2099 = vmatprep.subr.mxu0 0.0
        %2100 = vmatpush1.xpose.msra.mxu0 0.0
        %2101 = vmatprep.subr.mxu0 0.0
        %2102 = vmatpush1.xpose.msra.mxu0 0.0
        %2103 = vmatprep.subr.mxu0 0.0
        %2104 = vmatpush1.xpose.msra.mxu0 0.0
        %2105 = vmatprep.subr.mxu0 0.0
        %2106 = vmatpush1.xpose.msra.mxu0 %v2077
        %2107 = vmatprep.subr.mxu0 0.0
        %2108 = vmatpush1.xpose.msra.mxu0 %v2075
        %2109 = vmatprep.subr.mxu0 0.0
        %2110 = vmatpush1.xpose.msra.mxu0 %v2073
        %2111 = vmatprep.subr.mxu0 0.0
        %2112 = vmatpush2.xpose.msra.mxu0 0.0
        %2113 = vmatprep.subr.mxu0 0.0
        %2114 = vmatpush2.xpose.msra.mxu0 0.0
        %2115 = vmatprep.subr.mxu0 0.0
        %2116 = vmatpush2.xpose.msra.mxu0 0.0
        %2117 = vmatprep.subr.mxu0 0.0
        %2118 = vmatpush2.xpose.msra.mxu0 0.0
        %2119 = vmatprep.subr.mxu0 0.0
        %2120 = vmatpush2.xpose.msra.mxu0 0.0
        %2121 = vmatprep.subr.mxu0 0.0
        %2122 = vmatpush2.xpose.msra.mxu0 0.0
        %2123 = vmatprep.subr.mxu0 0.0
        %2124 = vmatpush2.xpose.msra.mxu0 0.0
        %2125 = vmatprep.subr.mxu0 0.0
        %2126 = vmatpush2.xpose.msra.mxu0 0.0
        %2127 = vmatprep.subr.mxu0 0.0
        %2128 = vmatpush2.xpose.msra.mxu0 0.0
        %2129 = vmatprep.subr.mxu0 0.0
        %2130 = vmatpush2.xpose.msra.mxu0 0.0
        %2131 = vmatprep.subr.mxu0 0.0
        %2132 = vmatpush2.xpose.msra.mxu0 0.0
        %2133 = vmatprep.subr.mxu0 0.0
        %2134 = vmatpush2.xpose.msra.mxu0 0.0
        %2135 = vmatprep.subr.mxu0 0.0
        %2136 = vmatpush2.xpose.msra.mxu0 0.0
        %2137 = vmatprep.subr.mxu0 0.0
        %2138 = vmatpush2.xpose.msra.mxu0 0.0
        %2139 = vmatprep.subr.mxu0 0.0
        %2140 = vmatpush2.xpose.msra.mxu0 0.0
        %2141 = vmatprep.subr.mxu0 0.0
        %2142 = vmatpush2.xpose.msra.mxu0 0.0
        %2143 = vmatprep.mubr.f32.mxu0 0.0
        %2144 = vmatmul.mubr.f32.gmra.mxu0 %v2067
        %v2145 = vpop.f32.mrf.mxu0
        %v2146 = vadd.f32 0.0, %v2145
        %v2147 = vpop.f32.mrf.mxu0
        %2148 = vmatprep.mubr.f32.mxu0 0.0
        %2149 = vmatmul.mubr.f32.gmra.mxu0 %v2069
        %v2150 = vpop.f32.mrf.mxu0
        %v2151 = vadd.f32 0.0, %v2150
        %v2152 = vpop.f32.mrf.mxu0
        %2153 = vmatprep.mubr.f32.mxu0 0.0
        %2154 = vmatmul.mubr.f32.gmra.mxu0 %v2071
        %v2155 = vpop.f32.mrf.mxu0
        %v2156 = vadd.f32 0.0, %v2155
        %v2157 = vpop.f32.mrf.mxu0
        %2158 = vdwg.mxu0
        %v2159 = vmul.f32 %v2146, 0.25
        %v2160 = vmul.f32 %v2151, 0.25
        %v2161 = vmul.f32 %v2156, 0.25
        %v2162 = vsel %vm704, %v2159, -1e+30
        %v2163 = vsel %vm704, %v2160, -1e+30
        %v2164 = vsel %vm704, %v2161, -1e+30
        %v2165 = vsel %vm978, %v2162, -inf
        %2166 = vmax.xlane.f32.xlu0 %v2165
        %v2167 = vpop.xlane.xlu0 %2166
        %v2168 = vsel %vm978, %v2163, -inf
        %2169 = vmax.xlane.f32.xlu0 %v2168
        %v2170 = vpop.xlane.xlu0 %2169
        %v2171 = vsel %vm978, %v2164, -inf
        %2172 = vmax.xlane.f32.xlu0 %v2171
        %v2173 = vpop.xlane.xlu0 %2172
        %v2174 = vsub.f32 %v2162, %v2167
        %v2175 = vsub.f32 %v2163, %v2170
        %v2176 = vsub.f32 %v2164, %v2173
        %v2177 = vmul.f32 %v2174, 1.442695
        %v2178 = vpow.pop %v2177
        %v2179 = vmul.f32 %v2175, 1.442695
        %v2180 = vpow.pop %v2179
        %v2181 = vmul.f32 %v2176, 1.442695
        %v2182 = vpow.pop %v2181
        %v2183 = vsel %vm978, %v2178, 0.0
        %2184 = vadd.xlane.f32.xlu0 %v2183
        %v2185 = vpop.xlane.xlu0 %2184
        %v2186 = vsel %vm978, %v2180, 0.0
        %2187 = vadd.xlane.f32.xlu0 %v2186
        %v2188 = vpop.xlane.xlu0 %2187
        %v2189 = vsel %vm978, %v2182, 0.0
        %2190 = vadd.xlane.f32.xlu0 %v2189
        %v2191 = vpop.xlane.xlu0 %2190
        %v2192 = vrcp.pop %v2185
        %v2193 = vrcp.pop %v2188
        %v2194 = vrcp.pop %v2191
        %v2195 = vmul.f32 %v2178, %v2192
        %v2196 = vmul.f32 %v2180, %v2193
        %v2197 = vmul.f32 %v2182, %v2194
        %2198 = vrot.lane.b32.xlu0 %v2040, 64
        %v2199 = vpop.permute.xlu0 %2198
        %2200 = vrot.lane.b32.xlu0 %v2045, 64
        %v2201 = vpop.permute.xlu0 %2200
        %2202 = vrot.lane.b32.xlu0 %v2050, 64
        %v2203 = vpop.permute.xlu0 %2202
        %v2208 = vsel %vm978, %v2195, 0
        %v2211 = vsel %vm978, %v2196, 0
        %v2214 = vsel %vm978, %v2197, 0
        %2216 = vmatprep.subr.mxu0 0.0
        %2217 = vmatpush1.msra.mxu0 0.0
        %2218 = vmatprep.subr.mxu0 0.0
        %2219 = vmatpush1.msra.mxu0 0.0
        %2220 = vmatprep.subr.mxu0 0.0
        %2221 = vmatpush1.msra.mxu0 0.0
        %2222 = vmatprep.subr.mxu0 0.0
        %2223 = vmatpush1.msra.mxu0 0.0
        %2224 = vmatprep.subr.mxu0 0.0
        %2225 = vmatpush1.msra.mxu0 0.0
        %2226 = vmatprep.subr.mxu0 0.0
        %2227 = vmatpush1.msra.mxu0 0.0
        %2228 = vmatprep.subr.mxu0 0.0
        %2229 = vmatpush1.msra.mxu0 0.0
        %2230 = vmatprep.subr.mxu0 0.0
        %2231 = vmatpush1.msra.mxu0 0.0
        %2232 = vmatprep.subr.mxu0 0.0
        %2233 = vmatpush1.msra.mxu0 0.0
        %2234 = vmatprep.subr.mxu0 0.0
        %2235 = vmatpush1.msra.mxu0 0.0
        %2236 = vmatprep.subr.mxu0 0.0
        %2237 = vmatpush1.msra.mxu0 0.0
        %2238 = vmatprep.subr.mxu0 0.0
        %2239 = vmatpush1.msra.mxu0 0.0
        %2240 = vmatprep.subr.mxu0 0.0
        %2241 = vmatpush1.msra.mxu0 0.0
        %2242 = vmatprep.subr.mxu0 0.0
        %2243 = vmatpush1.msra.mxu0 %v2203
        %2244 = vmatprep.subr.mxu0 0.0
        %2245 = vmatpush1.msra.mxu0 %v2201
        %2246 = vmatprep.subr.mxu0 0.0
        %2247 = vmatpush1.msra.mxu0 %v2199
        %2248 = vmatprep.subr.mxu0 0.0
        %2249 = vmatpush2.msra.mxu0 0.0
        %2250 = vmatprep.subr.mxu0 0.0
        %2251 = vmatpush2.msra.mxu0 0.0
        %2252 = vmatprep.subr.mxu0 0.0
        %2253 = vmatpush2.msra.mxu0 0.0
        %2254 = vmatprep.subr.mxu0 0.0
        %2255 = vmatpush2.msra.mxu0 0.0
        %2256 = vmatprep.subr.mxu0 0.0
        %2257 = vmatpush2.msra.mxu0 0.0
        %2258 = vmatprep.subr.mxu0 0.0
        %2259 = vmatpush2.msra.mxu0 0.0
        %2260 = vmatprep.subr.mxu0 0.0
        %2261 = vmatpush2.msra.mxu0 0.0
        %2262 = vmatprep.subr.mxu0 0.0
        %2263 = vmatpush2.msra.mxu0 0.0
        %2264 = vmatprep.subr.mxu0 0.0
        %2265 = vmatpush2.msra.mxu0 0.0
        %2266 = vmatprep.subr.mxu0 0.0
        %2267 = vmatpush2.msra.mxu0 0.0
        %2268 = vmatprep.subr.mxu0 0.0
        %2269 = vmatpush2.msra.mxu0 0.0
        %2270 = vmatprep.subr.mxu0 0.0
        %2271 = vmatpush2.msra.mxu0 0.0
        %2272 = vmatprep.subr.mxu0 0.0
        %2273 = vmatpush2.msra.mxu0 0.0
        %2274 = vmatprep.subr.mxu0 0.0
        %2275 = vmatpush2.msra.mxu0 0.0
        %2276 = vmatprep.subr.mxu0 0.0
        %2277 = vmatpush2.msra.mxu0 0.0
        %2278 = vmatprep.subr.mxu0 0.0
        %2279 = vmatpush2.msra.mxu0 0.0
        %2280 = vmatprep.mubr.f32.mxu0 0.0
        %2281 = vmatmul.mubr.f32.gmra.mxu0 %v2208
        %v2282 = vpop.f32.mrf.mxu0
        %v2283 = vadd.f32 0.0, %v2282
        %v2284 = vpop.f32.mrf.mxu0
        %2285 = vmatprep.mubr.f32.mxu0 0.0
        %2286 = vmatmul.mubr.f32.gmra.mxu0 %v2211
        %v2287 = vpop.f32.mrf.mxu0
        %v2288 = vadd.f32 0.0, %v2287
        %v2289 = vpop.f32.mrf.mxu0
        %2290 = vmatprep.mubr.f32.mxu0 0.0
        %2291 = vmatmul.mubr.f32.gmra.mxu0 %v2214
        %v2292 = vpop.f32.mrf.mxu0
        %v2293 = vadd.f32 0.0, %v2292
        %v2294 = vpop.f32.mrf.mxu0
        %2295 = vdwg.mxu0
        %2296 = vrot.lane.b32.xlu0 %v2040, 112
        %v2297 = vpop.permute.xlu0 %2296
        %2298 = vrot.lane.b32.xlu0 %v2045, 112
        %v2299 = vpop.permute.xlu0 %2298
        %2300 = vrot.lane.b32.xlu0 %v2050, 112
        %v2301 = vpop.permute.xlu0 %2300
        %2302 = vrot.lane.b32.xlu0 %v2040, 80
        %v2303 = vpop.permute.xlu0 %2302
        %2304 = vrot.lane.b32.xlu0 %v2045, 80
        %v2305 = vpop.permute.xlu0 %2304
        %2306 = vrot.lane.b32.xlu0 %v2050, 80
        %v2307 = vpop.permute.xlu0 %2306
        %v2308 = vsel %vm879, %v2297, 0
        %v2310 = vsel %vm879, %v2299, 0
        %v2312 = vsel %vm879, %v2301, 0
        %v2314 = vsel %vm879, %v2303, 0
        %v2316 = vsel %vm879, %v2305, 0
        %v2318 = vsel %vm879, %v2307, 0
        %2320 = vmatprep.subr.mxu0 0.0
        %2321 = vmatpush1.xpose.msra.mxu0 0.0
        %2322 = vmatprep.subr.mxu0 0.0
        %2323 = vmatpush1.xpose.msra.mxu0 0.0
        %2324 = vmatprep.subr.mxu0 0.0
        %2325 = vmatpush1.xpose.msra.mxu0 0.0
        %2326 = vmatprep.subr.mxu0 0.0
        %2327 = vmatpush1.xpose.msra.mxu0 0.0
        %2328 = vmatprep.subr.mxu0 0.0
        %2329 = vmatpush1.xpose.msra.mxu0 0.0
        %2330 = vmatprep.subr.mxu0 0.0
        %2331 = vmatpush1.xpose.msra.mxu0 0.0
        %2332 = vmatprep.subr.mxu0 0.0
        %2333 = vmatpush1.xpose.msra.mxu0 0.0
        %2334 = vmatprep.subr.mxu0 0.0
        %2335 = vmatpush1.xpose.msra.mxu0 0.0
        %2336 = vmatprep.subr.mxu0 0.0
        %2337 = vmatpush1.xpose.msra.mxu0 0.0
        %2338 = vmatprep.subr.mxu0 0.0
        %2339 = vmatpush1.xpose.msra.mxu0 0.0
        %2340 = vmatprep.subr.mxu0 0.0
        %2341 = vmatpush1.xpose.msra.mxu0 0.0
        %2342 = vmatprep.subr.mxu0 0.0
        %2343 = vmatpush1.xpose.msra.mxu0 0.0
        %2344 = vmatprep.subr.mxu0 0.0
        %2345 = vmatpush1.xpose.msra.mxu0 0.0
        %2346 = vmatprep.subr.mxu0 0.0
        %2347 = vmatpush1.xpose.msra.mxu0 %v2318
        %2348 = vmatprep.subr.mxu0 0.0
        %2349 = vmatpush1.xpose.msra.mxu0 %v2316
        %2350 = vmatprep.subr.mxu0 0.0
        %2351 = vmatpush1.xpose.msra.mxu0 %v2314
        %2352 = vmatprep.subr.mxu0 0.0
        %2353 = vmatpush2.xpose.msra.mxu0 0.0
        %2354 = vmatprep.subr.mxu0 0.0
        %2355 = vmatpush2.xpose.msra.mxu0 0.0
        %2356 = vmatprep.subr.mxu0 0.0
        %2357 = vmatpush2.xpose.msra.mxu0 0.0
        %2358 = vmatprep.subr.mxu0 0.0
        %2359 = vmatpush2.xpose.msra.mxu0 0.0
        %2360 = vmatprep.subr.mxu0 0.0
        %2361 = vmatpush2.xpose.msra.mxu0 0.0
        %2362 = vmatprep.subr.mxu0 0.0
        %2363 = vmatpush2.xpose.msra.mxu0 0.0
        %2364 = vmatprep.subr.mxu0 0.0
        %2365 = vmatpush2.xpose.msra.mxu0 0.0
        %2366 = vmatprep.subr.mxu0 0.0
        %2367 = vmatpush2.xpose.msra.mxu0 0.0
        %2368 = vmatprep.subr.mxu0 0.0
        %2369 = vmatpush2.xpose.msra.mxu0 0.0
        %2370 = vmatprep.subr.mxu0 0.0
        %2371 = vmatpush2.xpose.msra.mxu0 0.0
        %2372 = vmatprep.subr.mxu0 0.0
        %2373 = vmatpush2.xpose.msra.mxu0 0.0
        %2374 = vmatprep.subr.mxu0 0.0
        %2375 = vmatpush2.xpose.msra.mxu0 0.0
        %2376 = vmatprep.subr.mxu0 0.0
        %2377 = vmatpush2.xpose.msra.mxu0 0.0
        %2378 = vmatprep.subr.mxu0 0.0
        %2379 = vmatpush2.xpose.msra.mxu0 0.0
        %2380 = vmatprep.subr.mxu0 0.0
        %2381 = vmatpush2.xpose.msra.mxu0 0.0
        %2382 = vmatprep.subr.mxu0 0.0
        %2383 = vmatpush2.xpose.msra.mxu0 0.0
        %2384 = vmatprep.mubr.f32.mxu0 0.0
        %2385 = vmatmul.mubr.f32.gmra.mxu0 %v2308
        %v2386 = vpop.f32.mrf.mxu0
        %v2387 = vadd.f32 0.0, %v2386
        %v2388 = vpop.f32.mrf.mxu0
        %2389 = vmatprep.mubr.f32.mxu0 0.0
        %2390 = vmatmul.mubr.f32.gmra.mxu0 %v2310
        %v2391 = vpop.f32.mrf.mxu0
        %v2392 = vadd.f32 0.0, %v2391
        %v2393 = vpop.f32.mrf.mxu0
        %2394 = vmatprep.mubr.f32.mxu0 0.0
        %2395 = vmatmul.mubr.f32.gmra.mxu0 %v2312
        %v2396 = vpop.f32.mrf.mxu0
        %v2397 = vadd.f32 0.0, %v2396
        %v2398 = vpop.f32.mrf.mxu0
        %2399 = vdwg.mxu0
        %v2400 = vmul.f32 %v2387, 0.25
        %v2401 = vmul.f32 %v2392, 0.25
        %v2402 = vmul.f32 %v2397, 0.25
        %v2403 = vsel %vm704, %v2400, -1e+30
        %v2404 = vsel %vm704, %v2401, -1e+30
        %v2405 = vsel %vm704, %v2402, -1e+30
        %v2406 = vsel %vm978, %v2403, -inf
        %2407 = vmax.xlane.f32.xlu0 %v2406
        %v2408 = vpop.xlane.xlu0 %2407
        %v2409 = vsel %vm978, %v2404, -inf
        %2410 = vmax.xlane.f32.xlu0 %v2409
        %v2411 = vpop.xlane.xlu0 %2410
        %v2412 = vsel %vm978, %v2405, -inf
        %2413 = vmax.xlane.f32.xlu0 %v2412
        %v2414 = vpop.xlane.xlu0 %2413
        %v2415 = vsub.f32 %v2403, %v2408
        %v2416 = vsub.f32 %v2404, %v2411
        %v2417 = vsub.f32 %v2405, %v2414
        %v2418 = vmul.f32 %v2415, 1.442695
        %v2419 = vpow.pop %v2418
        %v2420 = vmul.f32 %v2416, 1.442695
        %v2421 = vpow.pop %v2420
        %v2422 = vmul.f32 %v2417, 1.442695
        %v2423 = vpow.pop %v2422
        %v2424 = vsel %vm978, %v2419, 0.0
        %2425 = vadd.xlane.f32.xlu0 %v2424
        %v2426 = vpop.xlane.xlu0 %2425
        %v2427 = vsel %vm978, %v2421, 0.0
        %2428 = vadd.xlane.f32.xlu0 %v2427
        %v2429 = vpop.xlane.xlu0 %2428
        %v2430 = vsel %vm978, %v2423, 0.0
        %2431 = vadd.xlane.f32.xlu0 %v2430
        %v2432 = vpop.xlane.xlu0 %2431
        %v2433 = vrcp.pop %v2426
        %v2434 = vrcp.pop %v2429
        %v2435 = vrcp.pop %v2432
        %v2436 = vmul.f32 %v2419, %v2433
        %v2437 = vmul.f32 %v2421, %v2434
        %v2438 = vmul.f32 %v2423, %v2435
        %2439 = vrot.lane.b32.xlu0 %v2040, 48
        %v2440 = vpop.permute.xlu0 %2439
        %2441 = vrot.lane.b32.xlu0 %v2045, 48
        %v2442 = vpop.permute.xlu0 %2441
        %2443 = vrot.lane.b32.xlu0 %v2050, 48
        %v2444 = vpop.permute.xlu0 %2443
        %v2449 = vsel %vm978, %v2436, 0
        %v2452 = vsel %vm978, %v2437, 0
        %v2455 = vsel %vm978, %v2438, 0
        %2457 = vmatprep.subr.mxu0 0.0
        %2458 = vmatpush1.msra.mxu0 0.0
        %2459 = vmatprep.subr.mxu0 0.0
        %2460 = vmatpush1.msra.mxu0 0.0
        %2461 = vmatprep.subr.mxu0 0.0
        %2462 = vmatpush1.msra.mxu0 0.0
        %2463 = vmatprep.subr.mxu0 0.0
        %2464 = vmatpush1.msra.mxu0 0.0
        %2465 = vmatprep.subr.mxu0 0.0
        %2466 = vmatpush1.msra.mxu0 0.0
        %2467 = vmatprep.subr.mxu0 0.0
        %2468 = vmatpush1.msra.mxu0 0.0
        %2469 = vmatprep.subr.mxu0 0.0
        %2470 = vmatpush1.msra.mxu0 0.0
        %2471 = vmatprep.subr.mxu0 0.0
        %2472 = vmatpush1.msra.mxu0 0.0
        %2473 = vmatprep.subr.mxu0 0.0
        %2474 = vmatpush1.msra.mxu0 0.0
        %2475 = vmatprep.subr.mxu0 0.0
        %2476 = vmatpush1.msra.mxu0 0.0
        %2477 = vmatprep.subr.mxu0 0.0
        %2478 = vmatpush1.msra.mxu0 0.0
        %2479 = vmatprep.subr.mxu0 0.0
        %2480 = vmatpush1.msra.mxu0 0.0
        %2481 = vmatprep.subr.mxu0 0.0
        %2482 = vmatpush1.msra.mxu0 0.0
        %2483 = vmatprep.subr.mxu0 0.0
        %2484 = vmatpush1.msra.mxu0 %v2444
        %2485 = vmatprep.subr.mxu0 0.0
        %2486 = vmatpush1.msra.mxu0 %v2442
        %2487 = vmatprep.subr.mxu0 0.0
        %2488 = vmatpush1.msra.mxu0 %v2440
        %2489 = vmatprep.subr.mxu0 0.0
        %2490 = vmatpush2.msra.mxu0 0.0
        %2491 = vmatprep.subr.mxu0 0.0
        %2492 = vmatpush2.msra.mxu0 0.0
        %2493 = vmatprep.subr.mxu0 0.0
        %2494 = vmatpush2.msra.mxu0 0.0
        %2495 = vmatprep.subr.mxu0 0.0
        %2496 = vmatpush2.msra.mxu0 0.0
        %2497 = vmatprep.subr.mxu0 0.0
        %2498 = vmatpush2.msra.mxu0 0.0
        %2499 = vmatprep.subr.mxu0 0.0
        %2500 = vmatpush2.msra.mxu0 0.0
        %2501 = vmatprep.subr.mxu0 0.0
        %2502 = vmatpush2.msra.mxu0 0.0
        %2503 = vmatprep.subr.mxu0 0.0
        %2504 = vmatpush2.msra.mxu0 0.0
        %2505 = vmatprep.subr.mxu0 0.0
        %2506 = vmatpush2.msra.mxu0 0.0
        %2507 = vmatprep.subr.mxu0 0.0
        %2508 = vmatpush2.msra.mxu0 0.0
        %2509 = vmatprep.subr.mxu0 0.0
        %2510 = vmatpush2.msra.mxu0 0.0
        %2511 = vmatprep.subr.mxu0 0.0
        %2512 = vmatpush2.msra.mxu0 0.0
        %2513 = vmatprep.subr.mxu0 0.0
        %2514 = vmatpush2.msra.mxu0 0.0
        %2515 = vmatprep.subr.mxu0 0.0
        %2516 = vmatpush2.msra.mxu0 0.0
        %2517 = vmatprep.subr.mxu0 0.0
        %2518 = vmatpush2.msra.mxu0 0.0
        %2519 = vmatprep.subr.mxu0 0.0
        %2520 = vmatpush2.msra.mxu0 0.0
        %2521 = vmatprep.mubr.f32.mxu0 0.0
        %2522 = vmatmul.mubr.f32.gmra.mxu0 %v2449
        %v2523 = vpop.f32.mrf.mxu0
        %v2524 = vadd.f32 0.0, %v2523
        %v2525 = vpop.f32.mrf.mxu0
        %2526 = vmatprep.mubr.f32.mxu0 0.0
        %2527 = vmatmul.mubr.f32.gmra.mxu0 %v2452
        %v2528 = vpop.f32.mrf.mxu0
        %v2529 = vadd.f32 0.0, %v2528
        %v2530 = vpop.f32.mrf.mxu0
        %2531 = vmatprep.mubr.f32.mxu0 0.0
        %2532 = vmatmul.mubr.f32.gmra.mxu0 %v2455
        %v2533 = vpop.f32.mrf.mxu0
        %v2534 = vadd.f32 0.0, %v2533
        %v2535 = vpop.f32.mrf.mxu0
        %2536 = vdwg.mxu0
        %v2538 = vsel %vm879, %v2524, 0
        %v2541 = vsel %vm879, %v2529, 0
        %v2544 = vsel %vm879, %v2534, 0
        %2546 = vmatprep.subr.mxu0 0.0
        %2547 = vmatpush1.msra.mxu0 0.0
        %2548 = vmatprep.subr.mxu0 0.0
        %2549 = vmatpush1.msra.mxu0 0.0
        %2550 = vmatprep.subr.mxu0 0.0
        %2551 = vmatpush1.msra.mxu0 0.0
        %2552 = vmatprep.subr.mxu0 0.0
        %2553 = vmatpush1.msra.mxu0 0.0
        %2554 = vmatprep.subr.mxu0 0.0
        %2555 = vmatpush1.msra.mxu0 0.0
        %2556 = vmatprep.subr.mxu0 0.0
        %2557 = vmatpush1.msra.mxu0 0.0
        %2558 = vmatprep.subr.mxu0 0.0
        %2559 = vmatpush1.msra.mxu0 0.0
        %2560 = vmatprep.subr.mxu0 0.0
        %2561 = vmatpush1.msra.mxu0 0.0
        %2562 = vmatprep.subr.mxu0 0.0
        %2563 = vmatpush1.msra.mxu0 0.0
        %2564 = vmatprep.subr.mxu0 0.0
        %2565 = vmatpush1.msra.mxu0 0.0
        %2566 = vmatprep.subr.mxu0 0.0
        %2567 = vmatpush1.msra.mxu0 0.0
        %2568 = vmatprep.subr.mxu0 0.0
        %2569 = vmatpush1.msra.mxu0 0.0
        %2570 = vmatprep.subr.mxu0 0.0
        %2571 = vmatpush1.msra.mxu0 0.0
        %2572 = vmatprep.subr.mxu0 0.0
        %2573 = vmatpush1.msra.mxu0 0.0
        %2574 = vmatprep.subr.mxu0 0.0
        %2575 = vmatpush1.msra.mxu0 %v2057
        %2576 = vmatprep.subr.mxu0 0.0
        %2577 = vmatpush1.msra.mxu0 %v2056
        %2578 = vmatprep.subr.mxu0 0.0
        %2579 = vmatpush2.msra.mxu0 0.0
        %2580 = vmatprep.subr.mxu0 0.0
        %2581 = vmatpush2.msra.mxu0 0.0
        %2582 = vmatprep.subr.mxu0 0.0
        %2583 = vmatpush2.msra.mxu0 0.0
        %2584 = vmatprep.subr.mxu0 0.0
        %2585 = vmatpush2.msra.mxu0 0.0
        %2586 = vmatprep.subr.mxu0 0.0
        %2587 = vmatpush2.msra.mxu0 0.0
        %2588 = vmatprep.subr.mxu0 0.0
        %2589 = vmatpush2.msra.mxu0 0.0
        %2590 = vmatprep.subr.mxu0 0.0
        %2591 = vmatpush2.msra.mxu0 0.0
        %2592 = vmatprep.subr.mxu0 0.0
        %2593 = vmatpush2.msra.mxu0 0.0
        %2594 = vmatprep.subr.mxu0 0.0
        %2595 = vmatpush2.msra.mxu0 0.0
        %2596 = vmatprep.subr.mxu0 0.0
        %2597 = vmatpush2.msra.mxu0 0.0
        %2598 = vmatprep.subr.mxu0 0.0
        %2599 = vmatpush2.msra.mxu0 0.0
        %2600 = vmatprep.subr.mxu0 0.0
        %2601 = vmatpush2.msra.mxu0 0.0
        %2602 = vmatprep.subr.mxu0 0.0
        %2603 = vmatpush2.msra.mxu0 0.0
        %2604 = vmatprep.subr.mxu0 0.0
        %2605 = vmatpush2.msra.mxu0 0.0
        %2606 = vmatprep.subr.mxu0 0.0
        %2607 = vmatpush2.msra.mxu0 0.0
        %2608 = vmatprep.subr.mxu0 0.0
        %2609 = vmatpush2.msra.mxu0 0.0
        %2610 = vmatprep.mubr.f32.mxu0 0.0
        %2611 = vmatmul.mubr.f32.gmra.mxu0 %v2538
        %v2612 = vpop.f32.mrf.mxu0
        %v2613 = vadd.f32 0.0, %v2612
        %v2614 = vpop.f32.mrf.mxu0
        %2615 = vmatprep.mubr.f32.mxu0 0.0
        %2616 = vmatmul.mubr.f32.gmra.mxu0 %v2541
        %v2617 = vpop.f32.mrf.mxu0
        %v2618 = vadd.f32 0.0, %v2617
        %v2619 = vpop.f32.mrf.mxu0
        %2620 = vmatprep.mubr.f32.mxu0 0.0
        %2621 = vmatmul.mubr.f32.gmra.mxu0 %v2544
        %v2622 = vpop.f32.mrf.mxu0
        %v2623 = vadd.f32 0.0, %v2622
        %v2624 = vpop.f32.mrf.mxu0
        %2625 = vdwg.mxu0
        %v2627 = vsel %vm879, %v2283, 0
        %v2630 = vsel %vm879, %v2288, 0
        %v2633 = vsel %vm879, %v2293, 0
        %2635 = vmatprep.subr.mxu0 0.0
        %2636 = vmatpush1.msra.mxu0 0.0
        %2637 = vmatprep.subr.mxu0 0.0
        %2638 = vmatpush1.msra.mxu0 0.0
        %2639 = vmatprep.subr.mxu0 0.0
        %2640 = vmatpush1.msra.mxu0 0.0
        %2641 = vmatprep.subr.mxu0 0.0
        %2642 = vmatpush1.msra.mxu0 0.0
        %2643 = vmatprep.subr.mxu0 0.0
        %2644 = vmatpush1.msra.mxu0 0.0
        %2645 = vmatprep.subr.mxu0 0.0
        %2646 = vmatpush1.msra.mxu0 0.0
        %2647 = vmatprep.subr.mxu0 0.0
        %2648 = vmatpush1.msra.mxu0 0.0
        %2649 = vmatprep.subr.mxu0 0.0
        %2650 = vmatpush1.msra.mxu0 0.0
        %2651 = vmatprep.subr.mxu0 0.0
        %2652 = vmatpush1.msra.mxu0 0.0
        %2653 = vmatprep.subr.mxu0 0.0
        %2654 = vmatpush1.msra.mxu0 0.0
        %2655 = vmatprep.subr.mxu0 0.0
        %2656 = vmatpush1.msra.mxu0 0.0
        %2657 = vmatprep.subr.mxu0 0.0
        %2658 = vmatpush1.msra.mxu0 0.0
        %2659 = vmatprep.subr.mxu0 0.0
        %2660 = vmatpush1.msra.mxu0 0.0
        %2661 = vmatprep.subr.mxu0 0.0
        %2662 = vmatpush1.msra.mxu0 0.0
        %2663 = vmatprep.subr.mxu0 0.0
        %2664 = vmatpush1.msra.mxu0 %v2055
        %2665 = vmatprep.subr.mxu0 0.0
        %2666 = vmatpush1.msra.mxu0 %v2054
        %2667 = vmatprep.subr.mxu0 0.0
        %2668 = vmatpush2.msra.mxu0 0.0
        %2669 = vmatprep.subr.mxu0 0.0
        %2670 = vmatpush2.msra.mxu0 0.0
        %2671 = vmatprep.subr.mxu0 0.0
        %2672 = vmatpush2.msra.mxu0 0.0
        %2673 = vmatprep.subr.mxu0 0.0
        %2674 = vmatpush2.msra.mxu0 0.0
        %2675 = vmatprep.subr.mxu0 0.0
        %2676 = vmatpush2.msra.mxu0 0.0
        %2677 = vmatprep.subr.mxu0 0.0
        %2678 = vmatpush2.msra.mxu0 0.0
        %2679 = vmatprep.subr.mxu0 0.0
        %2680 = vmatpush2.msra.mxu0 0.0
        %2681 = vmatprep.subr.mxu0 0.0
        %2682 = vmatpush2.msra.mxu0 0.0
        %2683 = vmatprep.subr.mxu0 0.0
        %2684 = vmatpush2.msra.mxu0 0.0
        %2685 = vmatprep.subr.mxu0 0.0
        %2686 = vmatpush2.msra.mxu0 0.0
        %2687 = vmatprep.subr.mxu0 0.0
        %2688 = vmatpush2.msra.mxu0 0.0
        %2689 = vmatprep.subr.mxu0 0.0
        %2690 = vmatpush2.msra.mxu0 0.0
        %2691 = vmatprep.subr.mxu0 0.0
        %2692 = vmatpush2.msra.mxu0 0.0
        %2693 = vmatprep.subr.mxu0 0.0
        %2694 = vmatpush2.msra.mxu0 0.0
        %2695 = vmatprep.subr.mxu0 0.0
        %2696 = vmatpush2.msra.mxu0 0.0
        %2697 = vmatprep.subr.mxu0 0.0
        %2698 = vmatpush2.msra.mxu0 0.0
        %2699 = vmatprep.mubr.f32.mxu0 0.0
        %2700 = vmatmul.mubr.f32.gmra.mxu0 %v2627
        %v2701 = vpop.f32.mrf.mxu0
        %v2702 = vadd.f32 %v2613, %v2701
        %v2703 = vpop.f32.mrf.mxu0
        %2704 = vmatprep.mubr.f32.mxu0 0.0
        %2705 = vmatmul.mubr.f32.gmra.mxu0 %v2630
        %v2706 = vpop.f32.mrf.mxu0
        %v2707 = vadd.f32 %v2618, %v2706
        %v2708 = vpop.f32.mrf.mxu0
        %2709 = vmatprep.mubr.f32.mxu0 0.0
        %2710 = vmatmul.mubr.f32.gmra.mxu0 %v2633
        %v2711 = vpop.f32.mrf.mxu0
        %v2712 = vadd.f32 %v2623, %v2711
        %v2713 = vpop.f32.mrf.mxu0
        %2714 = vdwg.mxu0
        %v2715 = vadd.f32 %v1887, %v2702
        %v2716 = vadd.f32 %v1888, %v2707
        %v2717 = vadd.f32 %v1889, %v2712
        %s2718 = scalar_lea.vmem %s8, 1
        %v2719 = vld [vmem:[%s2718] sm:$0x1]
        %v2721 = vlaneseq
        %v2722 = vshrl.u32 %v2721, 7
        %v2723 = vsub.s32 0, %v2722
        %v2724 = vrot.slane %v2719, %v2723
        %v2726 = vadd.f32 %v2715, %v2724
        %v2727 = vadd.f32 %v2716, %v2724
        %v2728 = vadd.f32 %v2717, %v2724
        %s2729 = scalar_lea.vmem %s9, 1
        %v2730 = vld [vmem:[%s2729] sm:$0x1]
        %s2731 = scalar_lea.vmem %s10, 1
        %v2732 = vld [vmem:[%s2731] sm:$0x1]
        %v2733 = vsel %vm707, %v2726, 0.0
        %2734 = vadd.xlane.f32.xlu0 %v2733
        %v2735 = vpop.xlane.xlu0 %2734
        %v2736 = vsel %vm707, %v2727, 0.0
        %2737 = vadd.xlane.f32.xlu0 %v2736
        %v2738 = vpop.xlane.xlu0 %2737
        %v2739 = vsel %vm707, %v2728, 0.0
        %2740 = vadd.xlane.f32.xlu0 %v2739
        %v2741 = vpop.xlane.xlu0 %2740
        %v2742 = vmul.f32 %v2735, %v717
        %v2743 = vmul.f32 %v2738, %v717
        %v2744 = vmul.f32 %v2741, %v717
        %v2745 = vsub.f32 %v2726, %v2742
        %v2746 = vsub.f32 %v2727, %v2743
        %v2747 = vsub.f32 %v2728, %v2744
        %v2748 = vmul.f32 %v2745, %v2745
        %v2749 = vmul.f32 %v2746, %v2746
        %v2750 = vmul.f32 %v2747, %v2747
        %v2751 = vsel %vm707, %v2748, 0.0
        %2752 = vadd.xlane.f32.xlu0 %v2751
        %v2753 = vpop.xlane.xlu0 %2752
        %v2754 = vsel %vm707, %v2749, 0.0
        %2755 = vadd.xlane.f32.xlu0 %v2754
        %v2756 = vpop.xlane.xlu0 %2755
        %v2757 = vsel %vm707, %v2750, 0.0
        %2758 = vadd.xlane.f32.xlu0 %v2757
        %v2759 = vpop.xlane.xlu0 %2758
        %v2760 = vmul.f32 %v2753, %v717
        %v2761 = vmul.f32 %v2756, %v717
        %v2762 = vmul.f32 %v2759, %v717
        %v2763 = vadd.f32 %v2760, 1e-12
        %v2764 = vadd.f32 %v2761, 1e-12
        %v2765 = vadd.f32 %v2762, 1e-12
        %v2766 = vrsqrt.pop %v2763
        %v2767 = vrsqrt.pop %v2764
        %v2768 = vrsqrt.pop %v2765
        %v2769 = vmul.f32 %v2745, %v2766
        %v2770 = vmul.f32 %v2746, %v2767
        %v2771 = vmul.f32 %v2747, %v2768
        %v2773 = vlaneseq
        %v2774 = vshrl.u32 %v2773, 7
        %v2775 = vsub.s32 0, %v2774
        %v2776 = vrot.slane %v2730, %v2775
        %v2778 = vmul.f32 %v2769, %v2776
        %v2779 = vmul.f32 %v2770, %v2776
        %v2780 = vmul.f32 %v2771, %v2776
        %v2782 = vlaneseq
        %v2783 = vshrl.u32 %v2782, 7
        %v2784 = vsub.s32 0, %v2783
        %v2785 = vrot.slane %v2732, %v2784
        %v2787 = vadd.f32 %v2778, %v2785
        %v2788 = vadd.f32 %v2779, %v2785
        %v2789 = vadd.f32 %v2780, %v2785
        %s2790 = scalar_lea.vmem %s11, 32
        %v2791 = vld [vmem:[%s2790] sm:$0xff]
        %v2792 = vld [vmem:[%s2790 + $0x8] sm:$0xff]
        %v2793 = vld [vmem:[%s2790 + $0x10] sm:$0xff]
        %v2794 = vld [vmem:[%s2790 + $0x18] sm:$0xff]
        %s2795 = scalar_lea.vmem %s12, 1
        %v2796 = vld [vmem:[%s2795] sm:$0x1]
        %v2798 = vlaneseq
        %v2799 = vshrl.u32 %v2798, 7
        %v2800 = vsub.s32 0, %v2799
        %v2801 = vrot.slane %v2796, %v2800
        %v2804 = vsel %vm707, %v2787, 0
        %v2807 = vsel %vm707, %v2788, 0
        %v2810 = vsel %vm707, %v2789, 0
        %2812 = vmatprep.subr.mxu0 0.0
        %2813 = vmatpush1.msra.mxu0 0.0
        %2814 = vmatprep.subr.mxu0 0.0
        %2815 = vmatpush1.msra.mxu0 0.0
        %2816 = vmatprep.subr.mxu0 0.0
        %2817 = vmatpush1.msra.mxu0 0.0
        %2818 = vmatprep.subr.mxu0 0.0
        %2819 = vmatpush1.msra.mxu0 0.0
        %2820 = vmatprep.subr.mxu0 0.0
        %2821 = vmatpush1.msra.mxu0 0.0
        %2822 = vmatprep.subr.mxu0 0.0
        %2823 = vmatpush1.msra.mxu0 0.0
        %2824 = vmatprep.subr.mxu0 0.0
        %2825 = vmatpush1.msra.mxu0 0.0
        %2826 = vmatprep.subr.mxu0 0.0
        %2827 = vmatpush1.msra.mxu0 0.0
        %2828 = vmatprep.subr.mxu0 0.0
        %2829 = vmatpush1.msra.mxu0 0.0
        %2830 = vmatprep.subr.mxu0 0.0
        %2831 = vmatpush1.msra.mxu0 0.0
        %2832 = vmatprep.subr.mxu0 0.0
        %2833 = vmatpush1.msra.mxu0 0.0
        %2834 = vmatprep.subr.mxu0 0.0
        %2835 = vmatpush1.msra.mxu0 0.0
        %2836 = vmatprep.subr.mxu0 0.0
        %2837 = vmatpush1.msra.mxu0 %v2794
        %2838 = vmatprep.subr.mxu0 0.0
        %2839 = vmatpush1.msra.mxu0 %v2793
        %2840 = vmatprep.subr.mxu0 0.0
        %2841 = vmatpush1.msra.mxu0 %v2792
        %2842 = vmatprep.subr.mxu0 0.0
        %2843 = vmatpush1.msra.mxu0 %v2791
        %2844 = vmatprep.subr.mxu0 0.0
        %2845 = vmatpush2.msra.mxu0 0.0
        %2846 = vmatprep.subr.mxu0 0.0
        %2847 = vmatpush2.msra.mxu0 0.0
        %2848 = vmatprep.subr.mxu0 0.0
        %2849 = vmatpush2.msra.mxu0 0.0
        %2850 = vmatprep.subr.mxu0 0.0
        %2851 = vmatpush2.msra.mxu0 0.0
        %2852 = vmatprep.subr.mxu0 0.0
        %2853 = vmatpush2.msra.mxu0 0.0
        %2854 = vmatprep.subr.mxu0 0.0
        %2855 = vmatpush2.msra.mxu0 0.0
        %2856 = vmatprep.subr.mxu0 0.0
        %2857 = vmatpush2.msra.mxu0 0.0
        %2858 = vmatprep.subr.mxu0 0.0
        %2859 = vmatpush2.msra.mxu0 0.0
        %2860 = vmatprep.subr.mxu0 0.0
        %2861 = vmatpush2.msra.mxu0 0.0
        %2862 = vmatprep.subr.mxu0 0.0
        %2863 = vmatpush2.msra.mxu0 0.0
        %2864 = vmatprep.subr.mxu0 0.0
        %2865 = vmatpush2.msra.mxu0 0.0
        %2866 = vmatprep.subr.mxu0 0.0
        %2867 = vmatpush2.msra.mxu0 0.0
        %2868 = vmatprep.subr.mxu0 0.0
        %2869 = vmatpush2.msra.mxu0 0.0
        %2870 = vmatprep.subr.mxu0 0.0
        %2871 = vmatpush2.msra.mxu0 0.0
        %2872 = vmatprep.subr.mxu0 0.0
        %2873 = vmatpush2.msra.mxu0 0.0
        %2874 = vmatprep.subr.mxu0 0.0
        %2875 = vmatpush2.msra.mxu0 0.0
        %2876 = vmatprep.mubr.f32.mxu0 0.0
        %2877 = vmatmul.mubr.f32.gmra.mxu0 %v2804
        %v2878 = vpop.f32.mrf.mxu0
        %v2879 = vadd.f32 %v2801, %v2878
        %v2880 = vpop.f32.mrf.mxu0
        %2881 = vmatprep.mubr.f32.mxu0 0.0
        %2882 = vmatmul.mubr.f32.gmra.mxu0 %v2807
        %v2883 = vpop.f32.mrf.mxu0
        %v2884 = vadd.f32 %v2801, %v2883
        %v2885 = vpop.f32.mrf.mxu0
        %2886 = vmatprep.mubr.f32.mxu0 0.0
        %2887 = vmatmul.mubr.f32.gmra.mxu0 %v2810
        %v2888 = vpop.f32.mrf.mxu0
        %v2889 = vadd.f32 %v2801, %v2888
        %v2890 = vpop.f32.mrf.mxu0
        %2891 = vdwg.mxu0
        %v2892 = vmul.f32 %v2879, 0.5
        %v2893 = vmul.f32 %v2884, 0.5
        %v2894 = vmul.f32 %v2889, 0.5
        %v2895 = vmul.f32 %v2879, 0.70710677
        %v2896 = vmul.f32 %v2884, 0.70710677
        %v2897 = vmul.f32 %v2889, 0.70710677
        %vm2898 = vcmp.ge.f32.partialorder %v2895, 0.0
        %vm2899 = vcmp.ge.f32.partialorder %v2896, 0.0
        %vm2900 = vcmp.ge.f32.partialorder %v2897, 0.0
        %v2901 = vsel %vm2898, 1.0, -1.0
        %v2902 = vsel %vm2899, 1.0, -1.0
        %v2903 = vsel %vm2900, 1.0, -1.0
        %v2904 = vand.u32 2147483647, %v2895
        %v2905 = vand.u32 2147483647, %v2896
        %v2906 = vand.u32 2147483647, %v2897
        %v2907 = vmul.f32 %v2904, 0.3275911
        %v2908 = vmul.f32 %v2905, 0.3275911
        %v2909 = vmul.f32 %v2906, 0.3275911
        %v2910 = vadd.f32 %v2907, 1.0
        %v2911 = vadd.f32 %v2908, 1.0
        %v2912 = vadd.f32 %v2909, 1.0
        %v2913 = vrcp.pop %v2910
        %v2914 = vmul.f32 1.0, %v2913
        %v2915 = vrcp.pop %v2911
        %v2916 = vmul.f32 1.0, %v2915
        %v2917 = vrcp.pop %v2912
        %v2918 = vmul.f32 1.0, %v2917
        %v2919 = vmul.f32 %v2914, 1.0614054
        %v2920 = vmul.f32 %v2916, 1.0614054
        %v2921 = vmul.f32 %v2918, 1.0614054
        %v2922 = vadd.f32 %v2919, -1.4531521
        %v2923 = vadd.f32 %v2920, -1.4531521
        %v2924 = vadd.f32 %v2921, -1.4531521
        %v2925 = vmul.f32 %v2914, %v2922
        %v2926 = vmul.f32 %v2916, %v2923
        %v2927 = vmul.f32 %v2918, %v2924
        %v2928 = vadd.f32 %v2925, 1.4214138
        %v2929 = vadd.f32 %v2926, 1.4214138
        %v2930 = vadd.f32 %v2927, 1.4214138
        %v2931 = vmul.f32 %v2914, %v2928
        %v2932 = vmul.f32 %v2916, %v2929
        %v2933 = vmul.f32 %v2918, %v2930
        %v2934 = vadd.f32 %v2931, -0.28449672
        %v2935 = vadd.f32 %v2932, -0.28449672
        %v2936 = vadd.f32 %v2933, -0.28449672
        %v2937 = vmul.f32 %v2914, %v2934
        %v2938 = vmul.f32 %v2916, %v2935
        %v2939 = vmul.f32 %v2918, %v2936
        %v2940 = vadd.f32 %v2937, 0.2548296
        %v2941 = vadd.f32 %v2938, 0.2548296
        %v2942 = vadd.f32 %v2939, 0.2548296
        %v2943 = vmul.f32 %v2914, %v2940
        %v2944 = vmul.f32 %v2916, %v2941
        %v2945 = vmul.f32 %v2918, %v2942
        %v2946 = vsub.f32 0.0, %v2904
        %v2947 = vsub.f32 0.0, %v2905
        %v2948 = vsub.f32 0.0, %v2906
        %v2949 = vmul.f32 %v2946, %v2904
        %v2950 = vmul.f32 %v2947, %v2905
        %v2951 = vmul.f32 %v2948, %v2906
        %v2952 = vmul.f32 %v2949, 1.442695
        %v2953 = vpow.pop %v2952
        %v2954 = vmul.f32 %v2950, 1.442695
        %v2955 = vpow.pop %v2954
        %v2956 = vmul.f32 %v2951, 1.442695
        %v2957 = vpow.pop %v2956
        %v2958 = vmul.f32 %v2943, %v2953
        %v2959 = vmul.f32 %v2944, %v2955
        %v2960 = vmul.f32 %v2945, %v2957
        %v2961 = vsub.f32 1.0, %v2958
        %v2962 = vsub.f32 1.0, %v2959
        %v2963 = vsub.f32 1.0, %v2960
        %v2964 = vmul.f32 %v2901, %v2961
        %v2965 = vmul.f32 %v2902, %v2962
        %v2966 = vmul.f32 %v2903, %v2963
        %v2967 = vadd.f32 %v2964, 1.0
        %v2968 = vadd.f32 %v2965, 1.0
        %v2969 = vadd.f32 %v2966, 1.0
        %v2970 = vmul.f32 %v2892, %v2967
        %v2971 = vmul.f32 %v2893, %v2968
        %v2972 = vmul.f32 %v2894, %v2969
        %s2973 = scalar_lea.vmem %s13, 64
        %v2974 = vld [vmem:[%s2973] sm:$0xff]
        %v2975 = vld [vmem:[%s2973 + $0x8] sm:$0xff]
        %v2976 = vld [vmem:[%s2973 + $0x10] sm:$0xff]
        %v2977 = vld [vmem:[%s2973 + $0x18] sm:$0xff]
        %v2978 = vld [vmem:[%s2973 + $0x20] sm:$0xff]
        %v2979 = vld [vmem:[%s2973 + $0x28] sm:$0xff]
        %v2980 = vld [vmem:[%s2973 + $0x30] sm:$0xff]
        %v2981 = vld [vmem:[%s2973 + $0x38] sm:$0xff]
        %s2982 = scalar_lea.vmem %s14, 1
        %v2983 = vld [vmem:[%s2982] sm:$0x1]
        %v2985 = vlaneseq
        %v2986 = vshrl.u32 %v2985, 7
        %v2987 = vsub.s32 0, %v2986
        %v2988 = vrot.slane %v2983, %v2987
        %v2991 = vsel %vm1797, %v2970, 0
        %v2994 = vsel %vm1797, %v2971, 0
        %v2997 = vsel %vm1797, %v2972, 0
        %2999 = vmatprep.subr.mxu0 0.0
        %3000 = vmatpush1.msra.mxu0 0.0
        %3001 = vmatprep.subr.mxu0 0.0
        %3002 = vmatpush1.msra.mxu0 0.0
        %3003 = vmatprep.subr.mxu0 0.0
        %3004 = vmatpush1.msra.mxu0 0.0
        %3005 = vmatprep.subr.mxu0 0.0
        %3006 = vmatpush1.msra.mxu0 0.0
        %3007 = vmatprep.subr.mxu0 0.0
        %3008 = vmatpush1.msra.mxu0 0.0
        %3009 = vmatprep.subr.mxu0 0.0
        %3010 = vmatpush1.msra.mxu0 0.0
        %3011 = vmatprep.subr.mxu0 0.0
        %3012 = vmatpush1.msra.mxu0 0.0
        %3013 = vmatprep.subr.mxu0 0.0
        %3014 = vmatpush1.msra.mxu0 0.0
        %3015 = vmatprep.subr.mxu0 0.0
        %3016 = vmatpush1.msra.mxu0 %v2981
        %3017 = vmatprep.subr.mxu0 0.0
        %3018 = vmatpush1.msra.mxu0 %v2980
        %3019 = vmatprep.subr.mxu0 0.0
        %3020 = vmatpush1.msra.mxu0 %v2979
        %3021 = vmatprep.subr.mxu0 0.0
        %3022 = vmatpush1.msra.mxu0 %v2978
        %3023 = vmatprep.subr.mxu0 0.0
        %3024 = vmatpush1.msra.mxu0 %v2977
        %3025 = vmatprep.subr.mxu0 0.0
        %3026 = vmatpush1.msra.mxu0 %v2976
        %3027 = vmatprep.subr.mxu0 0.0
        %3028 = vmatpush1.msra.mxu0 %v2975
        %3029 = vmatprep.subr.mxu0 0.0
        %3030 = vmatpush1.msra.mxu0 %v2974
        %3031 = vmatprep.subr.mxu0 0.0
        %3032 = vmatpush2.msra.mxu0 0.0
        %3033 = vmatprep.subr.mxu0 0.0
        %3034 = vmatpush2.msra.mxu0 0.0
        %3035 = vmatprep.subr.mxu0 0.0
        %3036 = vmatpush2.msra.mxu0 0.0
        %3037 = vmatprep.subr.mxu0 0.0
        %3038 = vmatpush2.msra.mxu0 0.0
        %3039 = vmatprep.subr.mxu0 0.0
        %3040 = vmatpush2.msra.mxu0 0.0
        %3041 = vmatprep.subr.mxu0 0.0
        %3042 = vmatpush2.msra.mxu0 0.0
        %3043 = vmatprep.subr.mxu0 0.0
        %3044 = vmatpush2.msra.mxu0 0.0
        %3045 = vmatprep.subr.mxu0 0.0
        %3046 = vmatpush2.msra.mxu0 0.0
        %3047 = vmatprep.subr.mxu0 0.0
        %3048 = vmatpush2.msra.mxu0 0.0
        %3049 = vmatprep.subr.mxu0 0.0
        %3050 = vmatpush2.msra.mxu0 0.0
        %3051 = vmatprep.subr.mxu0 0.0
        %3052 = vmatpush2.msra.mxu0 0.0
        %3053 = vmatprep.subr.mxu0 0.0
        %3054 = vmatpush2.msra.mxu0 0.0
        %3055 = vmatprep.subr.mxu0 0.0
        %3056 = vmatpush2.msra.mxu0 0.0
        %3057 = vmatprep.subr.mxu0 0.0
        %3058 = vmatpush2.msra.mxu0 0.0
        %3059 = vmatprep.subr.mxu0 0.0
        %3060 = vmatpush2.msra.mxu0 0.0
        %3061 = vmatprep.subr.mxu0 0.0
        %3062 = vmatpush2.msra.mxu0 0.0
        %3063 = vmatprep.mubr.f32.mxu0 0.0
        %3064 = vmatmul.mubr.f32.gmra.mxu0 %v2991
        %v3065 = vpop.f32.mrf.mxu0
        %v3066 = vadd.f32 %v2988, %v3065
        %v3067 = vpop.f32.mrf.mxu0
        %3068 = vmatprep.mubr.f32.mxu0 0.0
        %3069 = vmatmul.mubr.f32.gmra.mxu0 %v2994
        %v3070 = vpop.f32.mrf.mxu0
        %v3071 = vpop.f32.mrf.mxu0
        %3072 = vmatprep.mubr.f32.mxu0 0.0
        %3073 = vmatmul.mubr.f32.gmra.mxu0 %v2997
        %v3074 = vpop.f32.mrf.mxu0
        %v3075 = vpop.f32.mrf.mxu0
        %3076 = vdwg.mxu0
        %v3077 = vadd.f32 %v2726, %v3066
        %v3078 = vld [vmem:[%s15] sm:$0x1]
        %v3079 = vld [vmem:[%s16] sm:$0x1]
        %v3080 = vsel %vm707, %v3077, 0.0
        %3081 = vadd.xlane.f32.xlu0 %v3080
        %v3082 = vpop.xlane.xlu0 %3081
        %v3083 = vmul.f32 %v3082, %v717
        %v3084 = vsub.f32 %v3077, %v3083
        %v3085 = vmul.f32 %v3084, %v3084
        %v3086 = vsel %vm707, %v3085, 0.0
        %3087 = vadd.xlane.f32.xlu0 %v3086
        %v3088 = vpop.xlane.xlu0 %3087
        %v3089 = vmul.f32 %v3088, %v717
        %v3090 = vadd.f32 %v3089, 1e-12
        %v3091 = vrsqrt.pop %v3090
        %v3092 = vmul.f32 %v3084, %v3091
        %v3094 = vlaneseq
        %v3095 = vshrl.u32 %v3094, 7
        %v3096 = vsub.s32 0, %v3095
        %v3097 = vrot.slane %v3078, %v3096
        %v3099 = vmul.f32 %v3092, %v3097
        %v3101 = vlaneseq
        %v3102 = vshrl.u32 %v3101, 7
        %v3103 = vsub.s32 0, %v3102
        %v3104 = vrot.slane %v3079, %v3103
        %v3106 = vadd.f32 %v3099, %v3104
        %v3107 = vld [vmem:[%s17] sm:$0xff]
        %v3108 = vld [vmem:[%s17 + $0x8] sm:$0xff]
        %v3109 = vld [vmem:[%s17 + $0x10] sm:$0xff]
        %v3110 = vld [vmem:[%s17 + $0x18] sm:$0xff]
        %v3111 = vld [vmem:[%s18] sm:$0x1]
        %v3113 = vsel %vm707, %v3106, 0
        %3115 = vmatprep.subr.mxu0 0.0
        %3116 = vmatpush1.msra.mxu0 0.0
        %3117 = vmatprep.subr.mxu0 0.0
        %3118 = vmatpush1.msra.mxu0 0.0
        %3119 = vmatprep.subr.mxu0 0.0
        %3120 = vmatpush1.msra.mxu0 0.0
        %3121 = vmatprep.subr.mxu0 0.0
        %3122 = vmatpush1.msra.mxu0 0.0
        %3123 = vmatprep.subr.mxu0 0.0
        %3124 = vmatpush1.msra.mxu0 0.0
        %3125 = vmatprep.subr.mxu0 0.0
        %3126 = vmatpush1.msra.mxu0 0.0
        %3127 = vmatprep.subr.mxu0 0.0
        %3128 = vmatpush1.msra.mxu0 0.0
        %3129 = vmatprep.subr.mxu0 0.0
        %3130 = vmatpush1.msra.mxu0 0.0
        %3131 = vmatprep.subr.mxu0 0.0
        %3132 = vmatpush1.msra.mxu0 0.0
        %3133 = vmatprep.subr.mxu0 0.0
        %3134 = vmatpush1.msra.mxu0 0.0
        %3135 = vmatprep.subr.mxu0 0.0
        %3136 = vmatpush1.msra.mxu0 0.0
        %3137 = vmatprep.subr.mxu0 0.0
        %3138 = vmatpush1.msra.mxu0 0.0
        %3139 = vmatprep.subr.mxu0 0.0
        %3140 = vmatpush1.msra.mxu0 %v3110
        %3141 = vmatprep.subr.mxu0 0.0
        %3142 = vmatpush1.msra.mxu0 %v3109
        %3143 = vmatprep.subr.mxu0 0.0
        %3144 = vmatpush1.msra.mxu0 %v3108
        %3145 = vmatprep.subr.mxu0 0.0
        %3146 = vmatpush1.msra.mxu0 %v3107
        %3147 = vmatprep.subr.mxu0 0.0
        %3148 = vmatpush2.msra.mxu0 0.0
        %3149 = vmatprep.subr.mxu0 0.0
        %3150 = vmatpush2.msra.mxu0 0.0
        %3151 = vmatprep.subr.mxu0 0.0
        %3152 = vmatpush2.msra.mxu0 0.0
        %3153 = vmatprep.subr.mxu0 0.0
        %3154 = vmatpush2.msra.mxu0 0.0
        %3155 = vmatprep.subr.mxu0 0.0
        %3156 = vmatpush2.msra.mxu0 0.0
        %3157 = vmatprep.subr.mxu0 0.0
        %3158 = vmatpush2.msra.mxu0 0.0
        %3159 = vmatprep.subr.mxu0 0.0
        %3160 = vmatpush2.msra.mxu0 0.0
        %3161 = vmatprep.subr.mxu0 0.0
        %3162 = vmatpush2.msra.mxu0 0.0
        %3163 = vmatprep.subr.mxu0 0.0
        %3164 = vmatpush2.msra.mxu0 0.0
        %3165 = vmatprep.subr.mxu0 0.0
        %3166 = vmatpush2.msra.mxu0 0.0
        %3167 = vmatprep.subr.mxu0 0.0
        %3168 = vmatpush2.msra.mxu0 0.0
        %3169 = vmatprep.subr.mxu0 0.0
        %3170 = vmatpush2.msra.mxu0 0.0
        %3171 = vmatprep.subr.mxu0 0.0
        %3172 = vmatpush2.msra.mxu0 0.0
        %3173 = vmatprep.subr.mxu0 0.0
        %3174 = vmatpush2.msra.mxu0 0.0
        %3175 = vmatprep.subr.mxu0 0.0
        %3176 = vmatpush2.msra.mxu0 0.0
        %3177 = vmatprep.subr.mxu0 0.0
        %3178 = vmatpush2.msra.mxu0 0.0
        %3179 = vmatprep.mubr.f32.mxu0 0.0
        %3180 = vmatmul.mubr.f32.gmra.mxu0 %v3113
        %v3181 = vpop.f32.mrf.mxu0
        %v3182 = vadd.f32 %v3111, %v3181
        %v3183 = vpop.f32.mrf.mxu0
        %3184 = vdwg.mxu0
        %vm3185 = vcmask 8192
        %v3186 = vsel %vm3185, %v3182, -inf
        %3187 = vmax.xlane.f32.xlu0 %v3186
        %v3188 = vpop.xlane.xlu0 %3187
        %v3189 = vsub.f32 %v3182, %v3188
        %v3190 = vmul.f32 %v3189, 1.442695
        %v3191 = vpow.pop %v3190
        %v3192 = vsel %vm3185, %v3191, 0.0
        %3193 = vadd.xlane.f32.xlu0 %v3192
        %v3194 = vpop.xlane.xlu0 %3193
        %v3195 = vrcp.pop %v3194
        %v3196 = vmul.f32 %v3191, %v3195
        %3197 = vst.msk [vmem:[%s594] sm:$0x1] %vm3185, %v3196
        %s3198 = sand.u32 %s445, 1
        %s3199 = scalar_lea.sflag [#allocation3], %s3198
        %s3200 = sand.u32 %s445, 1
        %s3201 = scalar_lea.vmem [#allocation2], %s3200
        // Predicated region
        $region97: #{model_forward.1} parent=95 // pred_check
          %p3202 = pneg %p455
        $region98: #{model_forward.1} parent=95 // pred_check_branch
          %3204 = sbr.rel (%p3202) target = $region100
        $region99: #{model_forward.1} parent=95 // pred_region
          %s3206 = ssub.s32 16, 16
          %3207 = vsyncadd %s3199, %s3206
          %s3208 = smul.addr %s33, 16
          %s3209 = scalar_lea.hbm %s19, %s3208
          %s3211 = sshll.u32 %s3201, 4
          %s3212 = int_to_ptr.vmem [resolvable:$true] %s3211
          %3214 = dma.vmem_to_hbm [thread:$0]  %s3212, 16, %s3209, %s3199
        $region100: #{model_forward.1} parent=95 // pred_fallthru
          _
      $region96: #{model_forward.1} parent=5 // pred_fallthru
        _
      %p3215 = scmp.le.s32.totalorder 2, %s28
      // Predicated region
      $region101: #{model_forward.1} parent=5 // pred_check
        %p3216 = pneg %p3215
      $region102: #{model_forward.1} parent=5 // pred_check_branch
        %3218 = sbr.rel (%p3216) target = $region104
      $region103: #{model_forward.1} parent=5 // pred_region
        %s3219 = ssub.s32 %s28, 2
        // Predicated region
        $region105: #{model_forward.1} parent=103 // pred_check
          %p3220 = pneg %p461
        $region106: #{model_forward.1} parent=103 // pred_check_branch
          %3222 = sbr.rel (%p3220) target = $region108
        $region107: #{model_forward.1} parent=103 // pred_region
          %s3223 = sand.u32 %s446, 1
          %s3224 = scalar_lea.sflag [#allocation3], %s3223
          %s3225 = sand.u32 %s446, 1
          %s3226 = scalar_lea.vmem [#allocation2], %s3225
          %3227 = dma.done %s3224, 16
        $region108: #{model_forward.1} parent=103 // pred_fallthru
          _
      $region104: #{model_forward.1} parent=5 // pred_fallthru
        _
    $region6: #{model_forward.1} parent=1 // loop_footer
      %s32 = sadd.s32 1, %s28
    $region7: #{model_forward.1} parent=1 // loop_footer_branch
      %27 = sbr.rel target = $region3
    $region8: #{model_forward.1} parent=1 // loop_exit
      _
    %3228 = vsyncpa [#allocation3], 1
    %s3229 = scalar_lea.sflag [#allocation3], 1
    %3230 = vsyncpa %s3229, 1

</llo_original>
